<compile_context>
chip_gen: v7x
topology: tpu7x:2x2x1
jax: 0.10.0
libtpu: 0.0.40
codegen_flags: <defaults>
</compile_context>

<pallas_src>
import functools
import math

import jax
import jax.numpy as jnp
from jax.experimental import pallas as pl
from jax.experimental.pallas import tpu as pltpu


# bf16 MXU feed (f32 accumulate) for the big GEMMs; use jnp.float32 for strict
# f32 parity with the PyTorch reference.
_MXU_DTYPE = jnp.bfloat16
_VMEM_LIMIT = 48 * 1024 * 1024  # fits v7x (64 MiB phys) and v5e/v6e (128 MiB)


def _pick_tile(dim, target):
    """Largest usable tile: `target` if it divides `dim`, else the full dim."""
    if dim <= target or dim % target != 0:
        return dim
    return target


# ------------------------------------------------------------------ tiled GEMM

def _matmul_bias_kernel(x_ref, w_ref, b_ref, o_ref, acc_ref, *, activation,
                        mxu_dtype):
    @pl.when(pl.program_id(2) == 0)
    def _():
        acc_ref[...] = jnp.zeros_like(acc_ref)

    acc_ref[...] += jnp.dot(
        x_ref[...].astype(mxu_dtype),
        w_ref[...].astype(mxu_dtype),
        preferred_element_type=jnp.float32,
    )

    @pl.when(pl.program_id(2) == pl.num_programs(2) - 1)
    def _():
        r = acc_ref[...] + b_ref[...]
        if activation == "relu":
            r = jnp.maximum(r, 0.0)
        o_ref[...] = r.astype(o_ref.dtype)


def matmul_bias(x, w, b, activation=None, *, tm=256, tn=256, tk=512):
    """x: (M, K), w: (K, N), b: (N,) -> activation(x @ w + b), tiled on M/N/K."""
    M, K = x.shape
    N = w.shape[1]
    tm = _pick_tile(M, tm)
    tn = _pick_tile(N, tn)
    tk = _pick_tile(K, tk)
    grid = (M // tm, N // tn, K // tk)
    kernel = functools.partial(
        _matmul_bias_kernel, activation=activation, mxu_dtype=_MXU_DTYPE)
    return pl.pallas_call(
        kernel,
        out_shape=jax.ShapeDtypeStruct((M, N), x.dtype),
        grid=grid,
        in_specs=[
            pl.BlockSpec((tm, tk), lambda i, j, k: (i, k)),
            pl.BlockSpec((tk, tn), lambda i, j, k: (k, j)),
            pl.BlockSpec((1, tn), lambda i, j, k: (0, j)),
        ],
        out_specs=pl.BlockSpec((tm, tn), lambda i, j, k: (i, j)),
        scratch_shapes=[pltpu.VMEM((tm, tn), jnp.float32)],
        compiler_params=pltpu.CompilerParams(
            dimension_semantics=("parallel", "parallel", "arbitrary"),
            vmem_limit_bytes=_VMEM_LIMIT,
        ),
    )(x, w, b.reshape(1, N))


# --------------------------------------------------------------- attention core

def _mha_kernel(q_ref, k_ref, v_ref, *rest, n_heads, scale, has_mask):
    if has_mask:
        mask_ref, o_ref = rest
    else:
        (o_ref,) = rest

    q = q_ref[0]          # (Lq, D)
    k = k_ref[0]          # (Lk, D)
    v = v_ref[0]          # (Lk, D)
    D = q.shape[-1]
    dh = D // n_heads

    outs = []
    for h in range(n_heads):            # static unroll; static lane slices
        sl = slice(h * dh, (h + 1) * dh)
        qh = q[:, sl]                    # (Lq, dh)
        kh = k[:, sl]                    # (Lk, dh)
        vh = v[:, sl]                    # (Lk, dh)
        # contract last dims directly (no k.T transpose)
        s = jax.lax.dot_general(
            qh, kh, (((1,), (1,)), ((), ())),
            preferred_element_type=jnp.float32) * scale
        if has_mask:
            s = s + mask_ref[...]
        s = s - jnp.max(s, axis=-1, keepdims=True)
        p = jnp.exp(s)
        inv_l = pl.reciprocal(jnp.sum(p, axis=-1, keepdims=True), approx=True)
        p = p * inv_l
        oh = jnp.dot(p.astype(vh.dtype), vh, preferred_element_type=jnp.float32)
        outs.append(oh)

    # single lane-dense (Lq, D) store, head-interleaved == concat-heads layout
    o_ref[0] = jnp.concatenate(outs, axis=-1).astype(o_ref.dtype)


def mha_core(q, k, v, n_heads, mask_add=None):
    """q: (B, Lq, D), k/v: (B, Lk, D); optional additive mask (Lq, Lk)."""
    B, Lq, D = q.shape
    Lk = k.shape[1]
    dh = D // n_heads
    has_mask = mask_add is not None
    kernel = functools.partial(
        _mha_kernel, n_heads=n_heads, scale=1.0 / math.sqrt(dh),
        has_mask=has_mask)

    in_specs = [
        pl.BlockSpec((1, Lq, D), lambda b: (b, 0, 0)),
        pl.BlockSpec((1, Lk, D), lambda b: (b, 0, 0)),
        pl.BlockSpec((1, Lk, D), lambda b: (b, 0, 0)),
    ]
    args = [q, k, v]
    if has_mask:
        in_specs.append(pl.BlockSpec((Lq, Lk), lambda b: (0, 0)))
        args.append(mask_add.astype(jnp.float32))

    return pl.pallas_call(
        kernel,
        out_shape=jax.ShapeDtypeStruct((B, Lq, D), q.dtype),
        grid=(B,),
        in_specs=in_specs,
        out_specs=pl.BlockSpec((1, Lq, D), lambda b: (b, 0, 0)),
        compiler_params=pltpu.CompilerParams(
            dimension_semantics=("parallel",),
            vmem_limit_bytes=_VMEM_LIMIT,
        ),
    )(*args)


# ----------------------------------------------------------- add + LayerNorm

def _add_layernorm_kernel(x_ref, y_ref, g_ref, b_ref, o_ref):
    z = x_ref[...] + y_ref[...]
    mu = jnp.mean(z, axis=-1, keepdims=True)
    var = jnp.mean(jnp.square(z - mu), axis=-1, keepdims=True)
    o_ref[...] = (
        (z - mu) * jax.lax.rsqrt(var + 1e-5) * g_ref[...] + b_ref[...]
    ).astype(o_ref.dtype)


def add_layernorm(x2d, y2d, gamma, beta, *, tm=1024):
    """LayerNorm(x2d + y2d) over the last dim, tiled over rows."""
    M, D = x2d.shape
    tm = _pick_tile(M, tm)
    return pl.pallas_call(
        _add_layernorm_kernel,
        out_shape=jax.ShapeDtypeStruct((M, D), x2d.dtype),
        grid=(M // tm,),
        in_specs=[
            pl.BlockSpec((tm, D), lambda i: (i, 0)),
            pl.BlockSpec((tm, D), lambda i: (i, 0)),
            pl.BlockSpec((1, D), lambda i: (0, 0)),
            pl.BlockSpec((1, D), lambda i: (0, 0)),
        ],
        out_specs=pl.BlockSpec((tm, D), lambda i: (i, 0)),
        compiler_params=pltpu.CompilerParams(
            dimension_semantics=("parallel",),
            vmem_limit_bytes=_VMEM_LIMIT,
        ),
    )(x2d, y2d, gamma.reshape(1, D), beta.reshape(1, D))


# ------------------------------------------------------------------ model glue

def self_attention(x, p, n_heads, mask_add):
    B, L, D = x.shape
    qkv = matmul_bias(x.reshape(B * L, D), p["w_qkv"], p["b_qkv"])  # (BL, 3D)
    q = qkv[:, :D].reshape(B, L, D)
    k = qkv[:, D:2 * D].reshape(B, L, D)
    v = qkv[:, 2 * D:].reshape(B, L, D)
    o = mha_core(q, k, v, n_heads, mask_add)
    out = matmul_bias(o.reshape(B * L, D), p["wo"], p["bo"])
    return out.reshape(B, L, D)


def cross_attention(x, enc, p, n_heads, mask_add):
    B, Lq, D = x.shape
    Lk = enc.shape[1]
    q = matmul_bias(x.reshape(B * Lq, D), p["wq"], p["bq"]).reshape(B, Lq, D)
    kv = matmul_bias(enc.reshape(B * Lk, D), p["w_kv"], p["b_kv"])  # (BLk, 2D)
    k = kv[:, :D].reshape(B, Lk, D)
    v = kv[:, D:].reshape(B, Lk, D)
    o = mha_core(q, k, v, n_heads, mask_add)
    out = matmul_bias(o.reshape(B * Lq, D), p["wo"], p["bo"])
    return out.reshape(B, Lq, D)


def decoder_layer(x, enc, p, n_heads, tgt_mask_add, src_mask_add):
    B, Lq, D = x.shape
    M = B * Lq
    # self-attention + residual + norm1   (dropout == identity at inference)
    sa = self_attention(x, p["self_attn"], n_heads, tgt_mask_add)
    x = add_layernorm(x.reshape(M, D), sa.reshape(M, D),
                      p["g1"], p["bn1"]).reshape(B, Lq, D)
    # cross-attention + residual + norm2
    ca = cross_attention(x, enc, p["cross_attn"], n_heads, src_mask_add)
    x = add_layernorm(x.reshape(M, D), ca.reshape(M, D),
                      p["g2"], p["bn2"]).reshape(B, Lq, D)
    # feed-forward (ReLU fused in first GEMM epilogue) + residual + norm3
    h = matmul_bias(x.reshape(M, D), p["w1"], p["b1"], activation="relu")
    ff = matmul_bias(h, p["w2"], p["b2"])
    x = add_layernorm(x.reshape(M, D), ff, p["g3"], p["bn3"]).reshape(B, Lq, D)
    return x


def decoder_forward(x, enc, layer_params, n_heads,
                    tgt_mask_add=None, src_mask_add=None):
    # Masks are optional additive float masks (Lq, Lq) / (Lq, Lk); when None
    # the mask add is skipped entirely (no zeros tensor, no extra DMA).
    for p in layer_params:
        x = decoder_layer(x, enc, p, n_heads, tgt_mask_add, src_mask_add)
    return x


# ------------------------------------------------------------------ params

def _linear_init(key, fan_in, fan_out):
    kw, kb = jax.random.split(key)
    lim = 1.0 / math.sqrt(fan_in)
    w = jax.random.uniform(kw, (fan_in, fan_out), jnp.float32, -lim, lim)
    b = jax.random.uniform(kb, (fan_out,), jnp.float32, -lim, lim)
    return w, b


def init_self_attention_params(key, d_model):
    ks = jax.random.split(key, 4)
    wq, bq = _linear_init(ks[0], d_model, d_model)
    wk, bk = _linear_init(ks[1], d_model, d_model)
    wv, bv = _linear_init(ks[2], d_model, d_model)
    wo, bo = _linear_init(ks[3], d_model, d_model)
    return dict(
        w_qkv=jnp.concatenate([wq, wk, wv], axis=1),   # fused QKV projection
        b_qkv=jnp.concatenate([bq, bk, bv]),
        wo=wo, bo=bo)


def init_cross_attention_params(key, d_model):
    ks = jax.random.split(key, 4)
    wq, bq = _linear_init(ks[0], d_model, d_model)
    wk, bk = _linear_init(ks[1], d_model, d_model)
    wv, bv = _linear_init(ks[2], d_model, d_model)
    wo, bo = _linear_init(ks[3], d_model, d_model)
    return dict(
        wq=wq, bq=bq,
        w_kv=jnp.concatenate([wk, wv], axis=1),        # fused KV projection
        b_kv=jnp.concatenate([bk, bv]),
        wo=wo, bo=bo)


def init_decoder_params(key, n_layers, d_model, d_ff):
    params = []
    for lk in jax.random.split(key, n_layers):
        ks = jax.random.split(lk, 4)
        sa = init_self_attention_params(ks[0], d_model)
        ca = init_cross_attention_params(ks[1], d_model)
        w1, b1 = _linear_init(ks[2], d_model, d_ff)
        w2, b2 = _linear_init(ks[3], d_ff, d_model)
        params.append(dict(
            self_attn=sa, cross_attn=ca,
            w1=w1, b1=b1, w2=w2, b2=b2,
            g1=jnp.ones((d_model,), jnp.float32),
            bn1=jnp.zeros((d_model,), jnp.float32),
            g2=jnp.ones((d_model,), jnp.float32),
            bn2=jnp.zeros((d_model,), jnp.float32),
            g3=jnp.ones((d_model,), jnp.float32),
            bn3=jnp.zeros((d_model,), jnp.float32),
        ))
    return params


# ------------------------------------------------------------------ main

if __name__ == "__main__":
    n_layers, d_model, n_heads, d_ff = 2, 32, 4, 64
    B, Lq, Lk = 2, 8, 12

    root = jax.random.PRNGKey(0)
    k_param, k_x, k_enc = jax.random.split(root, 3)

    layer_params = init_decoder_params(k_param, n_layers, d_model, d_ff)
    x = jax.random.normal(k_x, (B, Lq, d_model), jnp.float32)
    enc = jax.random.normal(k_enc, (B, Lk, d_model), jnp.float32)

    fwd = jax.jit(functools.partial(decoder_forward, n_heads=n_heads))
    out = fwd(x, enc, layer_params)
    out = jax.block_until_ready(out)

    assert out.shape == (B, Lq, d_model)
    assert bool(jnp.all(jnp.isfinite(out)))
    print("KERNEL_OK")
</pallas_src>

<mosaic_0001>
module attributes {stable_mosaic.version = 11 : i64} {
  func.func @_matmul_bias_kernel(%arg0: i32, %arg1: i32, %arg2: i32, %arg3: memref<16x32xf32, #tpu.memory_space<vmem>>, %arg4: memref<32x32xf32, #tpu.memory_space<vmem>>, %arg5: memref<1x32xf32, #tpu.memory_space<vmem>>, %arg6: memref<16x32xf32, #tpu.memory_space<vmem>>, %arg7: memref<16x32xf32, #tpu.memory_space<vmem>>) attributes {dimension_semantics = [#tpu.dimension_semantics<parallel>, #tpu.dimension_semantics<parallel>, #tpu.dimension_semantics<arbitrary>], iteration_bounds = array<i64: 1, 1, 1>, scalar_prefetch = 0 : i64, scratch_operands = 1 : i64, tpu.core_type = #tpu.core_type<tc>, window_params = [{transform_indices = @transform_0, window_bounds = array<i64: 16, 32>}, {transform_indices = @transform_1, window_bounds = array<i64: 32, 32>}, {transform_indices = @transform_2, window_bounds = array<i64: 1, 32>}, {transform_indices = @transform_3, window_bounds = array<i64: 16, 32>}]} {
    %c0_i32 = arith.constant 0 : i32
    %0 = arith.cmpi eq, %arg2, %c0_i32 : i32
    %1 = arith.extui %0 : i1 to i32
    %c0_i32_0 = arith.constant 0 : i32
    %2 = arith.cmpi ne, %1, %c0_i32_0 : i32
    scf.if %2 {
      %cst_10 = arith.constant 0.000000e+00 : f32
      %14 = vector.broadcast %cst_10 : f32 to vector<16x32xf32>
      %c0_11 = arith.constant 0 : index
      %c0_12 = arith.constant 0 : index
      %15 = vector.load %arg7[%c0_11, %c0_12] : memref<16x32xf32, #tpu.memory_space<vmem>>, vector<16x32xf32>
      tpu.vector_store %arg7[%c0_11, %c0_12], %14 {strides = array<i32>} : memref<16x32xf32, #tpu.memory_space<vmem>>, vector<16x32xf32>,
    } else {
    }
    %c0 = arith.constant 0 : index
    %c0_1 = arith.constant 0 : index
    %3 = vector.load %arg7[%c0, %c0_1] : memref<16x32xf32, #tpu.memory_space<vmem>>, vector<16x32xf32>
    %c0_2 = arith.constant 0 : index
    %c0_3 = arith.constant 0 : index
    %4 = vector.load %arg3[%c0_2, %c0_3] : memref<16x32xf32, #tpu.memory_space<vmem>>, vector<16x32xf32>
    %5 = arith.truncf %4 : vector<16x32xf32> to vector<16x32xbf16>
    %c0_4 = arith.constant 0 : index
    %c0_5 = arith.constant 0 : index
    %6 = vector.load %arg4[%c0_4, %c0_5] : memref<32x32xf32, #tpu.memory_space<vmem>>, vector<32x32xf32>
    %7 = arith.truncf %6 : vector<32x32xf32> to vector<32x32xbf16>
    %cst = arith.constant dense<0.000000e+00> : vector<16x32xf32>
    %8 = tpu.matmul %5, %7, %cst {dimension_numbers = #tpu.dot_dimension_numbers<[1], [0], [0], [1], [0, 0, 1, 1], [], []>} : vector<16x32xbf16>, vector<32x32xbf16>, vector<16x32xf32> -> vector<16x32xf32>
    %9 = arith.addf %3, %8 : vector<16x32xf32>
    %c0_6 = arith.constant 0 : index
    %c0_7 = arith.constant 0 : index
    %10 = vector.load %arg7[%c0_6, %c0_7] : memref<16x32xf32, #tpu.memory_space<vmem>>, vector<16x32xf32>
    tpu.vector_store %arg7[%c0_6, %c0_7], %9 {strides = array<i32>} : memref<16x32xf32, #tpu.memory_space<vmem>>, vector<16x32xf32>,
    %c0_i32_8 = arith.constant 0 : i32
    %11 = arith.cmpi eq, %arg2, %c0_i32_8 : i32
    %12 = arith.extui %11 : i1 to i32
    %c0_i32_9 = arith.constant 0 : i32
    %13 = arith.cmpi ne, %12, %c0_i32_9 : i32
    scf.if %13 {
      %c0_10 = arith.constant 0 : index
      %c0_11 = arith.constant 0 : index
      %14 = vector.load %arg7[%c0_10, %c0_11] : memref<16x32xf32, #tpu.memory_space<vmem>>, vector<16x32xf32>
      %c0_12 = arith.constant 0 : index
      %c0_13 = arith.constant 0 : index
      %15 = vector.load %arg5[%c0_12, %c0_13] : memref<1x32xf32, #tpu.memory_space<vmem>>, vector<1x32xf32>
      %16 = vector.broadcast %15 : vector<1x32xf32> to vector<16x32xf32>
      %17 = arith.addf %14, %16 : vector<16x32xf32>
      %c0_14 = arith.constant 0 : index
      %c0_15 = arith.constant 0 : index
      %18 = vector.load %arg6[%c0_14, %c0_15] : memref<16x32xf32, #tpu.memory_space<vmem>>, vector<16x32xf32>
      tpu.vector_store %arg6[%c0_14, %c0_15], %17 {strides = array<i32>} : memref<16x32xf32, #tpu.memory_space<vmem>>, vector<16x32xf32>,
    } else {
    }
    return
  }
  func.func @transform_0(%arg0: i32, %arg1: i32, %arg2: i32) -> (i32, i32) {
    %c0_i32 = arith.constant 0 : i32
    return %arg0, %arg2 : i32, i32
  }
  func.func @transform_1(%arg0: i32, %arg1: i32, %arg2: i32) -> (i32, i32) {
    %c0_i32 = arith.constant 0 : i32
    return %arg2, %arg1 : i32, i32
  }
  func.func @transform_2(%arg0: i32, %arg1: i32, %arg2: i32) -> (i32, i32) {
    %c0_i32 = arith.constant 0 : i32
    %c0_i32_0 = arith.constant 0 : i32
    return %c0_i32, %arg1 : i32, i32
  }
  func.func @transform_3(%arg0: i32, %arg1: i32, %arg2: i32) -> (i32, i32) {
    %c0_i32 = arith.constant 0 : i32
    return %arg0, %arg1 : i32, i32
  }
}

module attributes {stable_mosaic.version = 11 : i64} {
  func.func @_mha_kernel(%arg0: i32, %arg1: memref<1x8x32xf32, #tpu.memory_space<vmem>>, %arg2: memref<1x8x32xf32, #tpu.memory_space<vmem>>, %arg3: memref<1x8x32xf32, #tpu.memory_space<vmem>>, %arg4: memref<1x8x32xf32, #tpu.memory_space<vmem>>) attributes {dimension_semantics = [#tpu.dimension_semantics<parallel>], iteration_bounds = array<i64: 2>, scalar_prefetch = 0 : i64, scratch_operands = 0 : i64, tpu.core_type = #tpu.core_type<tc>, window_params = [{transform_indices = @transform_0, window_bounds = array<i64: 1, 8, 32>}, {transform_indices = @transform_1, window_bounds = array<i64: 1, 8, 32>}, {transform_indices = @transform_2, window_bounds = array<i64: 1, 8, 32>}, {transform_indices = @transform_3, window_bounds = array<i64: 1, 8, 32>}]} {
    %c0 = arith.constant 0 : index
    %c0_0 = arith.constant 0 : index
    %c0_1 = arith.constant 0 : index
    %0 = vector.load %arg1[%c0, %c0_0, %c0_1] : memref<1x8x32xf32, #tpu.memory_space<vmem>>, vector<1x8x32xf32>
    %1 = vector.shape_cast %0 : vector<1x8x32xf32> to vector<8x32xf32>
    %c0_2 = arith.constant 0 : index
    %c0_3 = arith.constant 0 : index
    %c0_4 = arith.constant 0 : index
    %2 = vector.load %arg2[%c0_2, %c0_3, %c0_4] : memref<1x8x32xf32, #tpu.memory_space<vmem>>, vector<1x8x32xf32>
    %3 = vector.shape_cast %2 : vector<1x8x32xf32> to vector<8x32xf32>
    %c0_5 = arith.constant 0 : index
    %c0_6 = arith.constant 0 : index
    %c0_7 = arith.constant 0 : index
    %4 = vector.load %arg3[%c0_5, %c0_6, %c0_7] : memref<1x8x32xf32, #tpu.memory_space<vmem>>, vector<1x8x32xf32>
    %5 = vector.shape_cast %4 : vector<1x8x32xf32> to vector<8x32xf32>
    %6 = vector.extract_strided_slice %1 {offsets = [0, 0], sizes = [8, 8], strides = [1, 1]} : vector<8x32xf32> to vector<8x8xf32>
    %7 = vector.extract_strided_slice %3 {offsets = [0, 0], sizes = [8, 8], strides = [1, 1]} : vector<8x32xf32> to vector<8x8xf32>
    %8 = vector.extract_strided_slice %5 {offsets = [0, 0], sizes = [8, 8], strides = [1, 1]} : vector<8x32xf32> to vector<8x8xf32>
    %cst = arith.constant dense<0.000000e+00> : vector<8x8xf32>
    %9 = tpu.matmul %6, %7, %cst {dimension_numbers = #tpu.dot_dimension_numbers<[1], [1], [0], [0], [0, 0, 1, 0], [], []>} : vector<8x8xf32>, vector<8x8xf32>, vector<8x8xf32> -> vector<8x8xf32>
    %cst_8 = arith.constant 0.353553385 : f32
    %10 = vector.broadcast %cst_8 : f32 to vector<8x8xf32>
    %11 = arith.mulf %9, %10 : vector<8x8xf32>
    %cst_9 = arith.constant dense<0xFF800000> : vector<8xf32>
    %12 = vector.multi_reduction <maximumf>, %11, %cst_9 [1] : vector<8x8xf32> to vector<8xf32>
    %13 = vector.shape_cast %12 : vector<8xf32> to vector<8x1xf32>
    %14 = vector.broadcast %13 : vector<8x1xf32> to vector<8x8xf32>
    %15 = arith.subf %11, %14 : vector<8x8xf32>
    %16 = math.exp %15 : vector<8x8xf32>
    %cst_10 = arith.constant dense<0.000000e+00> : vector<8xf32>
    %17 = vector.multi_reduction <add>, %16, %cst_10 [1] : vector<8x8xf32> to vector<8xf32>
    %18 = vector.shape_cast %17 : vector<8xf32> to vector<8x1xf32>
    %19 = tpu.reciprocal %18 {approx = true} : vector<8x1xf32> -> vector<8x1xf32>
    %20 = vector.broadcast %19 : vector<8x1xf32> to vector<8x8xf32>
    %21 = arith.mulf %16, %20 : vector<8x8xf32>
    %cst_11 = arith.constant dense<0.000000e+00> : vector<8x8xf32>
    %22 = tpu.matmul %21, %8, %cst_11 {dimension_numbers = #tpu.dot_dimension_numbers<[1], [0], [0], [1], [0, 0, 1, 1], [], []>} : vector<8x8xf32>, vector<8x8xf32>, vector<8x8xf32> -> vector<8x8xf32>
    %23 = vector.extract_strided_slice %1 {offsets = [0, 8], sizes = [8, 8], strides = [1, 1]} : vector<8x32xf32> to vector<8x8xf32>
    %24 = vector.extract_strided_slice %3 {offsets = [0, 8], sizes = [8, 8], strides = [1, 1]} : vector<8x32xf32> to vector<8x8xf32>
    %25 = vector.extract_strided_slice %5 {offsets = [0, 8], sizes = [8, 8], strides = [1, 1]} : vector<8x32xf32> to vector<8x8xf32>
    %cst_12 = arith.constant dense<0.000000e+00> : vector<8x8xf32>
    %26 = tpu.matmul %23, %24, %cst_12 {dimension_numbers = #tpu.dot_dimension_numbers<[1], [1], [0], [0], [0, 0, 1, 0], [], []>} : vector<8x8xf32>, vector<8x8xf32>, vector<8x8xf32> -> vector<8x8xf32>
    %cst_13 = arith.constant 0.353553385 : f32
    %27 = vector.broadcast %cst_13 : f32 to vector<8x8xf32>
    %28 = arith.mulf %26, %27 : vector<8x8xf32>
    %cst_14 = arith.constant dense<0xFF800000> : vector<8xf32>
    %29 = vector.multi_reduction <maximumf>, %28, %cst_14 [1] : vector<8x8xf32> to vector<8xf32>
    %30 = vector.shape_cast %29 : vector<8xf32> to vector<8x1xf32>
    %31 = vector.broadcast %30 : vector<8x1xf32> to vector<8x8xf32>
    %32 = arith.subf %28, %31 : vector<8x8xf32>
    %33 = math.exp %32 : vector<8x8xf32>
    %cst_15 = arith.constant dense<0.000000e+00> : vector<8xf32>
    %34 = vector.multi_reduction <add>, %33, %cst_15 [1] : vector<8x8xf32> to vector<8xf32>
    %35 = vector.shape_cast %34 : vector<8xf32> to vector<8x1xf32>
    %36 = tpu.reciprocal %35 {approx = true} : vector<8x1xf32> -> vector<8x1xf32>
    %37 = vector.broadcast %36 : vector<8x1xf32> to vector<8x8xf32>
    %38 = arith.mulf %33, %37 : vector<8x8xf32>
    %cst_16 = arith.constant dense<0.000000e+00> : vector<8x8xf32>
    %39 = tpu.matmul %38, %25, %cst_16 {dimension_numbers = #tpu.dot_dimension_numbers<[1], [0], [0], [1], [0, 0, 1, 1], [], []>} : vector<8x8xf32>, vector<8x8xf32>, vector<8x8xf32> -> vector<8x8xf32>
    %40 = vector.extract_strided_slice %1 {offsets = [0, 16], sizes = [8, 8], strides = [1, 1]} : vector<8x32xf32> to vector<8x8xf32>
    %41 = vector.extract_strided_slice %3 {offsets = [0, 16], sizes = [8, 8], strides = [1, 1]} : vector<8x32xf32> to vector<8x8xf32>
    %42 = vector.extract_strided_slice %5 {offsets = [0, 16], sizes = [8, 8], strides = [1, 1]} : vector<8x32xf32> to vector<8x8xf32>
    %cst_17 = arith.constant dense<0.000000e+00> : vector<8x8xf32>
    %43 = tpu.matmul %40, %41, %cst_17 {dimension_numbers = #tpu.dot_dimension_numbers<[1], [1], [0], [0], [0, 0, 1, 0], [], []>} : vector<8x8xf32>, vector<8x8xf32>, vector<8x8xf32> -> vector<8x8xf32>
    %cst_18 = arith.constant 0.353553385 : f32
    %44 = vector.broadcast %cst_18 : f32 to vector<8x8xf32>
    %45 = arith.mulf %43, %44 : vector<8x8xf32>
    %cst_19 = arith.constant dense<0xFF800000> : vector<8xf32>
    %46 = vector.multi_reduction <maximumf>, %45, %cst_19 [1] : vector<8x8xf32> to vector<8xf32>
    %47 = vector.shape_cast %46 : vector<8xf32> to vector<8x1xf32>
    %48 = vector.broadcast %47 : vector<8x1xf32> to vector<8x8xf32>
    %49 = arith.subf %45, %48 : vector<8x8xf32>
    %50 = math.exp %49 : vector<8x8xf32>
    %cst_20 = arith.constant dense<0.000000e+00> : vector<8xf32>
    %51 = vector.multi_reduction <add>, %50, %cst_20 [1] : vector<8x8xf32> to vector<8xf32>
    %52 = vector.shape_cast %51 : vector<8xf32> to vector<8x1xf32>
    %53 = tpu.reciprocal %52 {approx = true} : vector<8x1xf32> -> vector<8x1xf32>
    %54 = vector.broadcast %53 : vector<8x1xf32> to vector<8x8xf32>
    %55 = arith.mulf %50, %54 : vector<8x8xf32>
    %cst_21 = arith.constant dense<0.000000e+00> : vector<8x8xf32>
    %56 = tpu.matmul %55, %42, %cst_21 {dimension_numbers = #tpu.dot_dimension_numbers<[1], [0], [0], [1], [0, 0, 1, 1], [], []>} : vector<8x8xf32>, vector<8x8xf32>, vector<8x8xf32> -> vector<8x8xf32>
    %57 = vector.extract_strided_slice %1 {offsets = [0, 24], sizes = [8, 8], strides = [1, 1]} : vector<8x32xf32> to vector<8x8xf32>
    %58 = vector.extract_strided_slice %3 {offsets = [0, 24], sizes = [8, 8], strides = [1, 1]} : vector<8x32xf32> to vector<8x8xf32>
    %59 = vector.extract_strided_slice %5 {offsets = [0, 24], sizes = [8, 8], strides = [1, 1]} : vector<8x32xf32> to vector<8x8xf32>
    %cst_22 = arith.constant dense<0.000000e+00> : vector<8x8xf32>
    %60 = tpu.matmul %57, %58, %cst_22 {dimension_numbers = #tpu.dot_dimension_numbers<[1], [1], [0], [0], [0, 0, 1, 0], [], []>} : vector<8x8xf32>, vector<8x8xf32>, vector<8x8xf32> -> vector<8x8xf32>
    %cst_23 = arith.constant 0.353553385 : f32
    %61 = vector.broadcast %cst_23 : f32 to vector<8x8xf32>
    %62 = arith.mulf %60, %61 : vector<8x8xf32>
    %cst_24 = arith.constant dense<0xFF800000> : vector<8xf32>
    %63 = vector.multi_reduction <maximumf>, %62, %cst_24 [1] : vector<8x8xf32> to vector<8xf32>
    %64 = vector.shape_cast %63 : vector<8xf32> to vector<8x1xf32>
    %65 = vector.broadcast %64 : vector<8x1xf32> to vector<8x8xf32>
    %66 = arith.subf %62, %65 : vector<8x8xf32>
    %67 = math.exp %66 : vector<8x8xf32>
    %cst_25 = arith.constant dense<0.000000e+00> : vector<8xf32>
    %68 = vector.multi_reduction <add>, %67, %cst_25 [1] : vector<8x8xf32> to vector<8xf32>
    %69 = vector.shape_cast %68 : vector<8xf32> to vector<8x1xf32>
    %70 = tpu.reciprocal %69 {approx = true} : vector<8x1xf32> -> vector<8x1xf32>
    %71 = vector.broadcast %70 : vector<8x1xf32> to vector<8x8xf32>
    %72 = arith.mulf %67, %71 : vector<8x8xf32>
    %cst_26 = arith.constant dense<0.000000e+00> : vector<8x8xf32>
    %73 = tpu.matmul %72, %59, %cst_26 {dimension_numbers = #tpu.dot_dimension_numbers<[1], [0], [0], [1], [0, 0, 1, 1], [], []>} : vector<8x8xf32>, vector<8x8xf32>, vector<8x8xf32> -> vector<8x8xf32>
    %74 = tpu.concatenate %22, %39, %56, %73 in 1 : vector<8x8xf32>, vector<8x8xf32>, vector<8x8xf32>, vector<8x8xf32> -> vector<8x32xf32>
    %c0_27 = arith.constant 0 : index
    %c0_28 = arith.constant 0 : index
    %c0_29 = arith.constant 0 : index
    %75 = vector.load %arg4[%c0_27, %c0_28, %c0_29] : memref<1x8x32xf32, #tpu.memory_space<vmem>>, vector<1x8x32xf32>
    %76 = vector.shape_cast %75 : vector<1x8x32xf32> to vector<8x32xf32>
    %77 = vector.shape_cast %74 : vector<8x32xf32> to vector<1x8x32xf32>
    tpu.vector_store %arg4[%c0_27, %c0_28, %c0_29], %77 {strides = array<i32>} : memref<1x8x32xf32, #tpu.memory_space<vmem>>, vector<1x8x32xf32>,
    return
  }
  func.func @transform_0(%arg0: i32) -> (i32, i32, i32) {
    %c0_i32 = arith.constant 0 : i32
    %c0_i32_0 = arith.constant 0 : i32
    %c0_i32_1 = arith.constant 0 : i32
    return %arg0, %c0_i32, %c0_i32_0 : i32, i32, i32
  }
  func.func @transform_1(%arg0: i32) -> (i32, i32, i32) {
    %c0_i32 = arith.constant 0 : i32
    %c0_i32_0 = arith.constant 0 : i32
    %c0_i32_1 = arith.constant 0 : i32
    return %arg0, %c0_i32, %c0_i32_0 : i32, i32, i32
  }
  func.func @transform_2(%arg0: i32) -> (i32, i32, i32) {
    %c0_i32 = arith.constant 0 : i32
    %c0_i32_0 = arith.constant 0 : i32
    %c0_i32_1 = arith.constant 0 : i32
    return %arg0, %c0_i32, %c0_i32_0 : i32, i32, i32
  }
  func.func @transform_3(%arg0: i32) -> (i32, i32, i32) {
    %c0_i32 = arith.constant 0 : i32
    %c0_i32_0 = arith.constant 0 : i32
    %c0_i32_1 = arith.constant 0 : i32
    return %arg0, %c0_i32, %c0_i32_0 : i32, i32, i32
  }
}

module attributes {stable_mosaic.version = 11 : i64} {
  func.func @_matmul_bias_kernel(%arg0: i32, %arg1: i32, %arg2: i32, %arg3: memref<16x32xf32, #tpu.memory_space<vmem>>, %arg4: memref<32x96xf32, #tpu.memory_space<vmem>>, %arg5: memref<1x96xf32, #tpu.memory_space<vmem>>, %arg6: memref<16x96xf32, #tpu.memory_space<vmem>>, %arg7: memref<16x96xf32, #tpu.memory_space<vmem>>) attributes {dimension_semantics = [#tpu.dimension_semantics<parallel>, #tpu.dimension_semantics<parallel>, #tpu.dimension_semantics<arbitrary>], iteration_bounds = array<i64: 1, 1, 1>, scalar_prefetch = 0 : i64, scratch_operands = 1 : i64, tpu.core_type = #tpu.core_type<tc>, window_params = [{transform_indices = @transform_0, window_bounds = array<i64: 16, 32>}, {transform_indices = @transform_1, window_bounds = array<i64: 32, 96>}, {transform_indices = @transform_2, window_bounds = array<i64: 1, 96>}, {transform_indices = @transform_3, window_bounds = array<i64: 16, 96>}]} {
    %c0_i32 = arith.constant 0 : i32
    %0 = arith.cmpi eq, %arg2, %c0_i32 : i32
    %1 = arith.extui %0 : i1 to i32
    %c0_i32_0 = arith.constant 0 : i32
    %2 = arith.cmpi ne, %1, %c0_i32_0 : i32
    scf.if %2 {
      %cst_10 = arith.constant 0.000000e+00 : f32
      %14 = vector.broadcast %cst_10 : f32 to vector<16x96xf32>
      %c0_11 = arith.constant 0 : index
      %c0_12 = arith.constant 0 : index
      %15 = vector.load %arg7[%c0_11, %c0_12] : memref<16x96xf32, #tpu.memory_space<vmem>>, vector<16x96xf32>
      tpu.vector_store %arg7[%c0_11, %c0_12], %14 {strides = array<i32>} : memref<16x96xf32, #tpu.memory_space<vmem>>, vector<16x96xf32>,
    } else {
    }
    %c0 = arith.constant 0 : index
    %c0_1 = arith.constant 0 : index
    %3 = vector.load %arg7[%c0, %c0_1] : memref<16x96xf32, #tpu.memory_space<vmem>>, vector<16x96xf32>
    %c0_2 = arith.constant 0 : index
    %c0_3 = arith.constant 0 : index
    %4 = vector.load %arg3[%c0_2, %c0_3] : memref<16x32xf32, #tpu.memory_space<vmem>>, vector<16x32xf32>
    %5 = arith.truncf %4 : vector<16x32xf32> to vector<16x32xbf16>
    %c0_4 = arith.constant 0 : index
    %c0_5 = arith.constant 0 : index
    %6 = vector.load %arg4[%c0_4, %c0_5] : memref<32x96xf32, #tpu.memory_space<vmem>>, vector<32x96xf32>
    %7 = arith.truncf %6 : vector<32x96xf32> to vector<32x96xbf16>
    %cst = arith.constant dense<0.000000e+00> : vector<16x96xf32>
    %8 = tpu.matmul %5, %7, %cst {dimension_numbers = #tpu.dot_dimension_numbers<[1], [0], [0], [1], [0, 0, 1, 1], [], []>} : vector<16x32xbf16>, vector<32x96xbf16>, vector<16x96xf32> -> vector<16x96xf32>
    %9 = arith.addf %3, %8 : vector<16x96xf32>
    %c0_6 = arith.constant 0 : index
    %c0_7 = arith.constant 0 : index
    %10 = vector.load %arg7[%c0_6, %c0_7] : memref<16x96xf32, #tpu.memory_space<vmem>>, vector<16x96xf32>
    tpu.vector_store %arg7[%c0_6, %c0_7], %9 {strides = array<i32>} : memref<16x96xf32, #tpu.memory_space<vmem>>, vector<16x96xf32>,
    %c0_i32_8 = arith.constant 0 : i32
    %11 = arith.cmpi eq, %arg2, %c0_i32_8 : i32
    %12 = arith.extui %11 : i1 to i32
    %c0_i32_9 = arith.constant 0 : i32
    %13 = arith.cmpi ne, %12, %c0_i32_9 : i32
    scf.if %13 {
      %c0_10 = arith.constant 0 : index
      %c0_11 = arith.constant 0 : index
      %14 = vector.load %arg7[%c0_10, %c0_11] : memref<16x96xf32, #tpu.memory_space<vmem>>, vector<16x96xf32>
      %c0_12 = arith.constant 0 : index
      %c0_13 = arith.constant 0 : index
      %15 = vector.load %arg5[%c0_12, %c0_13] : memref<1x96xf32, #tpu.memory_space<vmem>>, vector<1x96xf32>
      %16 = vector.broadcast %15 : vector<1x96xf32> to vector<16x96xf32>
      %17 = arith.addf %14, %16 : vector<16x96xf32>
      %c0_14 = arith.constant 0 : index
      %c0_15 = arith.constant 0 : index
      %18 = vector.load %arg6[%c0_14, %c0_15] : memref<16x96xf32, #tpu.memory_space<vmem>>, vector<16x96xf32>
      tpu.vector_store %arg6[%c0_14, %c0_15], %17 {strides = array<i32>} : memref<16x96xf32, #tpu.memory_space<vmem>>, vector<16x96xf32>,
    } else {
    }
    return
  }
  func.func @transform_0(%arg0: i32, %arg1: i32, %arg2: i32) -> (i32, i32) {
    %c0_i32 = arith.constant 0 : i32
    return %arg0, %arg2 : i32, i32
  }
  func.func @transform_1(%arg0: i32, %arg1: i32, %arg2: i32) -> (i32, i32) {
    %c0_i32 = arith.constant 0 : i32
    return %arg2, %arg1 : i32, i32
  }
  func.func @transform_2(%arg0: i32, %arg1: i32, %arg2: i32) -> (i32, i32) {
    %c0_i32 = arith.constant 0 : i32
    %c0_i32_0 = arith.constant 0 : i32
    return %c0_i32, %arg1 : i32, i32
  }
  func.func @transform_3(%arg0: i32, %arg1: i32, %arg2: i32) -> (i32, i32) {
    %c0_i32 = arith.constant 0 : i32
    return %arg0, %arg1 : i32, i32
  }
}

module attributes {stable_mosaic.version = 11 : i64} {
  func.func @_add_layernorm_kernel(%arg0: i32, %arg1: memref<16x32xf32, #tpu.memory_space<vmem>>, %arg2: memref<16x32xf32, #tpu.memory_space<vmem>>, %arg3: memref<1x32xf32, #tpu.memory_space<vmem>>, %arg4: memref<1x32xf32, #tpu.memory_space<vmem>>, %arg5: memref<16x32xf32, #tpu.memory_space<vmem>>) attributes {dimension_semantics = [#tpu.dimension_semantics<parallel>], iteration_bounds = array<i64: 1>, scalar_prefetch = 0 : i64, scratch_operands = 0 : i64, tpu.core_type = #tpu.core_type<tc>, window_params = [{transform_indices = @transform_0, window_bounds = array<i64: 16, 32>}, {transform_indices = @transform_1, window_bounds = array<i64: 16, 32>}, {pipeline_mode = #tpu.pipeline_mode<synchronous>, transform_indices = @transform_2, window_bounds = array<i64: 1, 32>}, {pipeline_mode = #tpu.pipeline_mode<synchronous>, transform_indices = @transform_3, window_bounds = array<i64: 1, 32>}, {transform_indices = @transform_4, window_bounds = array<i64: 16, 32>}]} {
    %c0 = arith.constant 0 : index
    %c0_0 = arith.constant 0 : index
    %0 = vector.load %arg1[%c0, %c0_0] : memref<16x32xf32, #tpu.memory_space<vmem>>, vector<16x32xf32>
    %c0_1 = arith.constant 0 : index
    %c0_2 = arith.constant 0 : index
    %1 = vector.load %arg2[%c0_1, %c0_2] : memref<16x32xf32, #tpu.memory_space<vmem>>, vector<16x32xf32>
    %2 = arith.addf %0, %1 : vector<16x32xf32>
    %cst = arith.constant dense<0.000000e+00> : vector<16xf32>
    %3 = vector.multi_reduction <add>, %2, %cst [1] : vector<16x32xf32> to vector<16xf32>
    %4 = vector.shape_cast %3 : vector<16xf32> to vector<16x1xf32>
    %cst_3 = arith.constant 3.200000e+01 : f32
    %5 = vector.broadcast %cst_3 : f32 to vector<16x1xf32>
    %6 = arith.divf %4, %5 : vector<16x1xf32>
    %7 = vector.broadcast %6 : vector<16x1xf32> to vector<16x32xf32>
    %8 = arith.subf %2, %7 : vector<16x32xf32>
    %9 = arith.mulf %8, %8 : vector<16x32xf32>
    %cst_4 = arith.constant dense<0.000000e+00> : vector<16xf32>
    %10 = vector.multi_reduction <add>, %9, %cst_4 [1] : vector<16x32xf32> to vector<16xf32>
    %11 = vector.shape_cast %10 : vector<16xf32> to vector<16x1xf32>
    %cst_5 = arith.constant 3.200000e+01 : f32
    %12 = vector.broadcast %cst_5 : f32 to vector<16x1xf32>
    %13 = arith.divf %11, %12 : vector<16x1xf32>
    %14 = vector.broadcast %6 : vector<16x1xf32> to vector<16x32xf32>
    %15 = arith.subf %2, %14 : vector<16x32xf32>
    %cst_6 = arith.constant 9.99999974E-6 : f32
    %16 = vector.broadcast %cst_6 : f32 to vector<16x1xf32>
    %17 = arith.addf %13, %16 : vector<16x1xf32>
    %18 = math.rsqrt %17 : vector<16x1xf32>
    %19 = vector.broadcast %18 : vector<16x1xf32> to vector<16x32xf32>
    %20 = arith.mulf %15, %19 : vector<16x32xf32>
    %c0_7 = arith.constant 0 : index
    %c0_8 = arith.constant 0 : index
    %21 = vector.load %arg3[%c0_7, %c0_8] : memref<1x32xf32, #tpu.memory_space<vmem>>, vector<1x32xf32>
    %22 = vector.broadcast %21 : vector<1x32xf32> to vector<16x32xf32>
    %23 = arith.mulf %20, %22 : vector<16x32xf32>
    %c0_9 = arith.constant 0 : index
    %c0_10 = arith.constant 0 : index
    %24 = vector.load %arg4[%c0_9, %c0_10] : memref<1x32xf32, #tpu.memory_space<vmem>>, vector<1x32xf32>
    %25 = vector.broadcast %24 : vector<1x32xf32> to vector<16x32xf32>
    %26 = arith.addf %23, %25 : vector<16x32xf32>
    %c0_11 = arith.constant 0 : index
    %c0_12 = arith.constant 0 : index
    %27 = vector.load %arg5[%c0_11, %c0_12] : memref<16x32xf32, #tpu.memory_space<vmem>>, vector<16x32xf32>
    tpu.vector_store %arg5[%c0_11, %c0_12], %26 {strides = array<i32>} : memref<16x32xf32, #tpu.memory_space<vmem>>, vector<16x32xf32>,
    return
  }
  func.func @transform_0(%arg0: i32) -> (i32, i32) {
    %c0_i32 = arith.constant 0 : i32
    %c0_i32_0 = arith.constant 0 : i32
    return %arg0, %c0_i32 : i32, i32
  }
  func.func @transform_1(%arg0: i32) -> (i32, i32) {
    %c0_i32 = arith.constant 0 : i32
    %c0_i32_0 = arith.constant 0 : i32
    return %arg0, %c0_i32 : i32, i32
  }
  func.func @transform_2(%arg0: i32) -> (i32, i32) {
    %c0_i32 = arith.constant 0 : i32
    %c0_i32_0 = arith.constant 0 : i32
    %c0_i32_1 = arith.constant 0 : i32
    return %c0_i32, %c0_i32_0 : i32, i32
  }
  func.func @transform_3(%arg0: i32) -> (i32, i32) {
    %c0_i32 = arith.constant 0 : i32
    %c0_i32_0 = arith.constant 0 : i32
    %c0_i32_1 = arith.constant 0 : i32
    return %c0_i32, %c0_i32_0 : i32, i32
  }
  func.func @transform_4(%arg0: i32) -> (i32, i32) {
    %c0_i32 = arith.constant 0 : i32
    %c0_i32_0 = arith.constant 0 : i32
    return %arg0, %c0_i32 : i32, i32
  }
}

module attributes {stable_mosaic.version = 11 : i64} {
  func.func @_matmul_bias_kernel(%arg0: i32, %arg1: i32, %arg2: i32, %arg3: memref<24x32xf32, #tpu.memory_space<vmem>>, %arg4: memref<32x64xf32, #tpu.memory_space<vmem>>, %arg5: memref<1x64xf32, #tpu.memory_space<vmem>>, %arg6: memref<24x64xf32, #tpu.memory_space<vmem>>, %arg7: memref<24x64xf32, #tpu.memory_space<vmem>>) attributes {dimension_semantics = [#tpu.dimension_semantics<parallel>, #tpu.dimension_semantics<parallel>, #tpu.dimension_semantics<arbitrary>], iteration_bounds = array<i64: 1, 1, 1>, scalar_prefetch = 0 : i64, scratch_operands = 1 : i64, tpu.core_type = #tpu.core_type<tc>, window_params = [{transform_indices = @transform_0, window_bounds = array<i64: 24, 32>}, {transform_indices = @transform_1, window_bounds = array<i64: 32, 64>}, {transform_indices = @transform_2, window_bounds = array<i64: 1, 64>}, {transform_indices = @transform_3, window_bounds = array<i64: 24, 64>}]} {
    %c0_i32 = arith.constant 0 : i32
    %0 = arith.cmpi eq, %arg2, %c0_i32 : i32
    %1 = arith.extui %0 : i1 to i32
    %c0_i32_0 = arith.constant 0 : i32
    %2 = arith.cmpi ne, %1, %c0_i32_0 : i32
    scf.if %2 {
      %cst_10 = arith.constant 0.000000e+00 : f32
      %14 = vector.broadcast %cst_10 : f32 to vector<24x64xf32>
      %c0_11 = arith.constant 0 : index
      %c0_12 = arith.constant 0 : index
      %15 = vector.load %arg7[%c0_11, %c0_12] : memref<24x64xf32, #tpu.memory_space<vmem>>, vector<24x64xf32>
      tpu.vector_store %arg7[%c0_11, %c0_12], %14 {strides = array<i32>} : memref<24x64xf32, #tpu.memory_space<vmem>>, vector<24x64xf32>,
    } else {
    }
    %c0 = arith.constant 0 : index
    %c0_1 = arith.constant 0 : index
    %3 = vector.load %arg7[%c0, %c0_1] : memref<24x64xf32, #tpu.memory_space<vmem>>, vector<24x64xf32>
    %c0_2 = arith.constant 0 : index
    %c0_3 = arith.constant 0 : index
    %4 = vector.load %arg3[%c0_2, %c0_3] : memref<24x32xf32, #tpu.memory_space<vmem>>, vector<24x32xf32>
    %5 = arith.truncf %4 : vector<24x32xf32> to vector<24x32xbf16>
    %c0_4 = arith.constant 0 : index
    %c0_5 = arith.constant 0 : index
    %6 = vector.load %arg4[%c0_4, %c0_5] : memref<32x64xf32, #tpu.memory_space<vmem>>, vector<32x64xf32>
    %7 = arith.truncf %6 : vector<32x64xf32> to vector<32x64xbf16>
    %cst = arith.constant dense<0.000000e+00> : vector<24x64xf32>
    %8 = tpu.matmul %5, %7, %cst {dimension_numbers = #tpu.dot_dimension_numbers<[1], [0], [0], [1], [0, 0, 1, 1], [], []>} : vector<24x32xbf16>, vector<32x64xbf16>, vector<24x64xf32> -> vector<24x64xf32>
    %9 = arith.addf %3, %8 : vector<24x64xf32>
    %c0_6 = arith.constant 0 : index
    %c0_7 = arith.constant 0 : index
    %10 = vector.load %arg7[%c0_6, %c0_7] : memref<24x64xf32, #tpu.memory_space<vmem>>, vector<24x64xf32>
    tpu.vector_store %arg7[%c0_6, %c0_7], %9 {strides = array<i32>} : memref<24x64xf32, #tpu.memory_space<vmem>>, vector<24x64xf32>,
    %c0_i32_8 = arith.constant 0 : i32
    %11 = arith.cmpi eq, %arg2, %c0_i32_8 : i32
    %12 = arith.extui %11 : i1 to i32
    %c0_i32_9 = arith.constant 0 : i32
    %13 = arith.cmpi ne, %12, %c0_i32_9 : i32
    scf.if %13 {
      %c0_10 = arith.constant 0 : index
      %c0_11 = arith.constant 0 : index
      %14 = vector.load %arg7[%c0_10, %c0_11] : memref<24x64xf32, #tpu.memory_space<vmem>>, vector<24x64xf32>
      %c0_12 = arith.constant 0 : index
      %c0_13 = arith.constant 0 : index
      %15 = vector.load %arg5[%c0_12, %c0_13] : memref<1x64xf32, #tpu.memory_space<vmem>>, vector<1x64xf32>
      %16 = vector.broadcast %15 : vector<1x64xf32> to vector<24x64xf32>
      %17 = arith.addf %14, %16 : vector<24x64xf32>
      %c0_14 = arith.constant 0 : index
      %c0_15 = arith.constant 0 : index
      %18 = vector.load %arg6[%c0_14, %c0_15] : memref<24x64xf32, #tpu.memory_space<vmem>>, vector<24x64xf32>
      tpu.vector_store %arg6[%c0_14, %c0_15], %17 {strides = array<i32>} : memref<24x64xf32, #tpu.memory_space<vmem>>, vector<24x64xf32>,
    } else {
    }
    return
  }
  func.func @transform_0(%arg0: i32, %arg1: i32, %arg2: i32) -> (i32, i32) {
    %c0_i32 = arith.constant 0 : i32
    return %arg0, %arg2 : i32, i32
  }
  func.func @transform_1(%arg0: i32, %arg1: i32, %arg2: i32) -> (i32, i32) {
    %c0_i32 = arith.constant 0 : i32
    return %arg2, %arg1 : i32, i32
  }
  func.func @transform_2(%arg0: i32, %arg1: i32, %arg2: i32) -> (i32, i32) {
    %c0_i32 = arith.constant 0 : i32
    %c0_i32_0 = arith.constant 0 : i32
    return %c0_i32, %arg1 : i32, i32
  }
  func.func @transform_3(%arg0: i32, %arg1: i32, %arg2: i32) -> (i32, i32) {
    %c0_i32 = arith.constant 0 : i32
    return %arg0, %arg1 : i32, i32
  }
}

module attributes {stable_mosaic.version = 11 : i64} {
  func.func @_mha_kernel(%arg0: i32, %arg1: memref<1x8x32xf32, #tpu.memory_space<vmem>>, %arg2: memref<1x12x32xf32, #tpu.memory_space<vmem>>, %arg3: memref<1x12x32xf32, #tpu.memory_space<vmem>>, %arg4: memref<1x8x32xf32, #tpu.memory_space<vmem>>) attributes {dimension_semantics = [#tpu.dimension_semantics<parallel>], iteration_bounds = array<i64: 2>, scalar_prefetch = 0 : i64, scratch_operands = 0 : i64, tpu.core_type = #tpu.core_type<tc>, window_params = [{transform_indices = @transform_0, window_bounds = array<i64: 1, 8, 32>}, {transform_indices = @transform_1, window_bounds = array<i64: 1, 12, 32>}, {transform_indices = @transform_2, window_bounds = array<i64: 1, 12, 32>}, {transform_indices = @transform_3, window_bounds = array<i64: 1, 8, 32>}]} {
    %c0 = arith.constant 0 : index
    %c0_0 = arith.constant 0 : index
    %c0_1 = arith.constant 0 : index
    %0 = vector.load %arg1[%c0, %c0_0, %c0_1] : memref<1x8x32xf32, #tpu.memory_space<vmem>>, vector<1x8x32xf32>
    %1 = vector.shape_cast %0 : vector<1x8x32xf32> to vector<8x32xf32>
    %c0_2 = arith.constant 0 : index
    %c0_3 = arith.constant 0 : index
    %c0_4 = arith.constant 0 : index
    %2 = vector.load %arg2[%c0_2, %c0_3, %c0_4] : memref<1x12x32xf32, #tpu.memory_space<vmem>>, vector<1x12x32xf32>
    %3 = vector.shape_cast %2 : vector<1x12x32xf32> to vector<12x32xf32>
    %c0_5 = arith.constant 0 : index
    %c0_6 = arith.constant 0 : index
    %c0_7 = arith.constant 0 : index
    %4 = vector.load %arg3[%c0_5, %c0_6, %c0_7] : memref<1x12x32xf32, #tpu.memory_space<vmem>>, vector<1x12x32xf32>
    %5 = vector.shape_cast %4 : vector<1x12x32xf32> to vector<12x32xf32>
    %6 = vector.extract_strided_slice %1 {offsets = [0, 0], sizes = [8, 8], strides = [1, 1]} : vector<8x32xf32> to vector<8x8xf32>
    %7 = vector.extract_strided_slice %3 {offsets = [0, 0], sizes = [12, 8], strides = [1, 1]} : vector<12x32xf32> to vector<12x8xf32>
    %8 = vector.extract_strided_slice %5 {offsets = [0, 0], sizes = [12, 8], strides = [1, 1]} : vector<12x32xf32> to vector<12x8xf32>
    %cst = arith.constant dense<0.000000e+00> : vector<8x12xf32>
    %9 = tpu.matmul %6, %7, %cst {dimension_numbers = #tpu.dot_dimension_numbers<[1], [1], [0], [0], [0, 0, 1, 0], [], []>} : vector<8x8xf32>, vector<12x8xf32>, vector<8x12xf32> -> vector<8x12xf32>
    %cst_8 = arith.constant 0.353553385 : f32
    %10 = vector.broadcast %cst_8 : f32 to vector<8x12xf32>
    %11 = arith.mulf %9, %10 : vector<8x12xf32>
    %cst_9 = arith.constant dense<0xFF800000> : vector<8xf32>
    %12 = vector.multi_reduction <maximumf>, %11, %cst_9 [1] : vector<8x12xf32> to vector<8xf32>
    %13 = vector.shape_cast %12 : vector<8xf32> to vector<8x1xf32>
    %14 = vector.broadcast %13 : vector<8x1xf32> to vector<8x12xf32>
    %15 = arith.subf %11, %14 : vector<8x12xf32>
    %16 = math.exp %15 : vector<8x12xf32>
    %cst_10 = arith.constant dense<0.000000e+00> : vector<8xf32>
    %17 = vector.multi_reduction <add>, %16, %cst_10 [1] : vector<8x12xf32> to vector<8xf32>
    %18 = vector.shape_cast %17 : vector<8xf32> to vector<8x1xf32>
    %19 = tpu.reciprocal %18 {approx = true} : vector<8x1xf32> -> vector<8x1xf32>
    %20 = vector.broadcast %19 : vector<8x1xf32> to vector<8x12xf32>
    %21 = arith.mulf %16, %20 : vector<8x12xf32>
    %cst_11 = arith.constant dense<0.000000e+00> : vector<8x8xf32>
    %22 = tpu.matmul %21, %8, %cst_11 {dimension_numbers = #tpu.dot_dimension_numbers<[1], [0], [0], [1], [0, 0, 1, 1], [], []>} : vector<8x12xf32>, vector<12x8xf32>, vector<8x8xf32> -> vector<8x8xf32>
    %23 = vector.extract_strided_slice %1 {offsets = [0, 8], sizes = [8, 8], strides = [1, 1]} : vector<8x32xf32> to vector<8x8xf32>
    %24 = vector.extract_strided_slice %3 {offsets = [0, 8], sizes = [12, 8], strides = [1, 1]} : vector<12x32xf32> to vector<12x8xf32>
    %25 = vector.extract_strided_slice %5 {offsets = [0, 8], sizes = [12, 8], strides = [1, 1]} : vector<12x32xf32> to vector<12x8xf32>
    %cst_12 = arith.constant dense<0.000000e+00> : vector<8x12xf32>
    %26 = tpu.matmul %23, %24, %cst_12 {dimension_numbers = #tpu.dot_dimension_numbers<[1], [1], [0], [0], [0, 0, 1, 0], [], []>} : vector<8x8xf32>, vector<12x8xf32>, vector<8x12xf32> -> vector<8x12xf32>
    %cst_13 = arith.constant 0.353553385 : f32
    %27 = vector.broadcast %cst_13 : f32 to vector<8x12xf32>
    %28 = arith.mulf %26, %27 : vector<8x12xf32>
    %cst_14 = arith.constant dense<0xFF800000> : vector<8xf32>
    %29 = vector.multi_reduction <maximumf>, %28, %cst_14 [1] : vector<8x12xf32> to vector<8xf32>
    %30 = vector.shape_cast %29 : vector<8xf32> to vector<8x1xf32>
    %31 = vector.broadcast %30 : vector<8x1xf32> to vector<8x12xf32>
    %32 = arith.subf %28, %31 : vector<8x12xf32>
    %33 = math.exp %32 : vector<8x12xf32>
    %cst_15 = arith.constant dense<0.000000e+00> : vector<8xf32>
    %34 = vector.multi_reduction <add>, %33, %cst_15 [1] : vector<8x12xf32> to vector<8xf32>
    %35 = vector.shape_cast %34 : vector<8xf32> to vector<8x1xf32>
    %36 = tpu.reciprocal %35 {approx = true} : vector<8x1xf32> -> vector<8x1xf32>
    %37 = vector.broadcast %36 : vector<8x1xf32> to vector<8x12xf32>
    %38 = arith.mulf %33, %37 : vector<8x12xf32>
    %cst_16 = arith.constant dense<0.000000e+00> : vector<8x8xf32>
    %39 = tpu.matmul %38, %25, %cst_16 {dimension_numbers = #tpu.dot_dimension_numbers<[1], [0], [0], [1], [0, 0, 1, 1], [], []>} : vector<8x12xf32>, vector<12x8xf32>, vector<8x8xf32> -> vector<8x8xf32>
    %40 = vector.extract_strided_slice %1 {offsets = [0, 16], sizes = [8, 8], strides = [1, 1]} : vector<8x32xf32> to vector<8x8xf32>
    %41 = vector.extract_strided_slice %3 {offsets = [0, 16], sizes = [12, 8], strides = [1, 1]} : vector<12x32xf32> to vector<12x8xf32>
    %42 = vector.extract_strided_slice %5 {offsets = [0, 16], sizes = [12, 8], strides = [1, 1]} : vector<12x32xf32> to vector<12x8xf32>
    %cst_17 = arith.constant dense<0.000000e+00> : vector<8x12xf32>
    %43 = tpu.matmul %40, %41, %cst_17 {dimension_numbers = #tpu.dot_dimension_numbers<[1], [1], [0], [0], [0, 0, 1, 0], [], []>} : vector<8x8xf32>, vector<12x8xf32>, vector<8x12xf32> -> vector<8x12xf32>
    %cst_18 = arith.constant 0.353553385 : f32
    %44 = vector.broadcast %cst_18 : f32 to vector<8x12xf32>
    %45 = arith.mulf %43, %44 : vector<8x12xf32>
    %cst_19 = arith.constant dense<0xFF800000> : vector<8xf32>
    %46 = vector.multi_reduction <maximumf>, %45, %cst_19 [1] : vector<8x12xf32> to vector<8xf32>
    %47 = vector.shape_cast %46 : vector<8xf32> to vector<8x1xf32>
    %48 = vector.broadcast %47 : vector<8x1xf32> to vector<8x12xf32>
    %49 = arith.subf %45, %48 : vector<8x12xf32>
    %50 = math.exp %49 : vector<8x12xf32>
    %cst_20 = arith.constant dense<0.000000e+00> : vector<8xf32>
    %51 = vector.multi_reduction <add>, %50, %cst_20 [1] : vector<8x12xf32> to vector<8xf32>
    %52 = vector.shape_cast %51 : vector<8xf32> to vector<8x1xf32>
    %53 = tpu.reciprocal %52 {approx = true} : vector<8x1xf32> -> vector<8x1xf32>
    %54 = vector.broadcast %53 : vector<8x1xf32> to vector<8x12xf32>
    %55 = arith.mulf %50, %54 : vector<8x12xf32>
    %cst_21 = arith.constant dense<0.000000e+00> : vector<8x8xf32>
    %56 = tpu.matmul %55, %42, %cst_21 {dimension_numbers = #tpu.dot_dimension_numbers<[1], [0], [0], [1], [0, 0, 1, 1], [], []>} : vector<8x12xf32>, vector<12x8xf32>, vector<8x8xf32> -> vector<8x8xf32>
    %57 = vector.extract_strided_slice %1 {offsets = [0, 24], sizes = [8, 8], strides = [1, 1]} : vector<8x32xf32> to vector<8x8xf32>
    %58 = vector.extract_strided_slice %3 {offsets = [0, 24], sizes = [12, 8], strides = [1, 1]} : vector<12x32xf32> to vector<12x8xf32>
    %59 = vector.extract_strided_slice %5 {offsets = [0, 24], sizes = [12, 8], strides = [1, 1]} : vector<12x32xf32> to vector<12x8xf32>
    %cst_22 = arith.constant dense<0.000000e+00> : vector<8x12xf32>
    %60 = tpu.matmul %57, %58, %cst_22 {dimension_numbers = #tpu.dot_dimension_numbers<[1], [1], [0], [0], [0, 0, 1, 0], [], []>} : vector<8x8xf32>, vector<12x8xf32>, vector<8x12xf32> -> vector<8x12xf32>
    %cst_23 = arith.constant 0.353553385 : f32
    %61 = vector.broadcast %cst_23 : f32 to vector<8x12xf32>
    %62 = arith.mulf %60, %61 : vector<8x12xf32>
    %cst_24 = arith.constant dense<0xFF800000> : vector<8xf32>
    %63 = vector.multi_reduction <maximumf>, %62, %cst_24 [1] : vector<8x12xf32> to vector<8xf32>
    %64 = vector.shape_cast %63 : vector<8xf32> to vector<8x1xf32>
    %65 = vector.broadcast %64 : vector<8x1xf32> to vector<8x12xf32>
    %66 = arith.subf %62, %65 : vector<8x12xf32>
    %67 = math.exp %66 : vector<8x12xf32>
    %cst_25 = arith.constant dense<0.000000e+00> : vector<8xf32>
    %68 = vector.multi_reduction <add>, %67, %cst_25 [1] : vector<8x12xf32> to vector<8xf32>
    %69 = vector.shape_cast %68 : vector<8xf32> to vector<8x1xf32>
    %70 = tpu.reciprocal %69 {approx = true} : vector<8x1xf32> -> vector<8x1xf32>
    %71 = vector.broadcast %70 : vector<8x1xf32> to vector<8x12xf32>
    %72 = arith.mulf %67, %71 : vector<8x12xf32>
    %cst_26 = arith.constant dense<0.000000e+00> : vector<8x8xf32>
    %73 = tpu.matmul %72, %59, %cst_26 {dimension_numbers = #tpu.dot_dimension_numbers<[1], [0], [0], [1], [0, 0, 1, 1], [], []>} : vector<8x12xf32>, vector<12x8xf32>, vector<8x8xf32> -> vector<8x8xf32>
    %74 = tpu.concatenate %22, %39, %56, %73 in 1 : vector<8x8xf32>, vector<8x8xf32>, vector<8x8xf32>, vector<8x8xf32> -> vector<8x32xf32>
    %c0_27 = arith.constant 0 : index
    %c0_28 = arith.constant 0 : index
    %c0_29 = arith.constant 0 : index
    %75 = vector.load %arg4[%c0_27, %c0_28, %c0_29] : memref<1x8x32xf32, #tpu.memory_space<vmem>>, vector<1x8x32xf32>
    %76 = vector.shape_cast %75 : vector<1x8x32xf32> to vector<8x32xf32>
    %77 = vector.shape_cast %74 : vector<8x32xf32> to vector<1x8x32xf32>
    tpu.vector_store %arg4[%c0_27, %c0_28, %c0_29], %77 {strides = array<i32>} : memref<1x8x32xf32, #tpu.memory_space<vmem>>, vector<1x8x32xf32>,
    return
  }
  func.func @transform_0(%arg0: i32) -> (i32, i32, i32) {
    %c0_i32 = arith.constant 0 : i32
    %c0_i32_0 = arith.constant 0 : i32
    %c0_i32_1 = arith.constant 0 : i32
    return %arg0, %c0_i32, %c0_i32_0 : i32, i32, i32
  }
  func.func @transform_1(%arg0: i32) -> (i32, i32, i32) {
    %c0_i32 = arith.constant 0 : i32
    %c0_i32_0 = arith.constant 0 : i32
    %c0_i32_1 = arith.constant 0 : i32
    return %arg0, %c0_i32, %c0_i32_0 : i32, i32, i32
  }
  func.func @transform_2(%arg0: i32) -> (i32, i32, i32) {
    %c0_i32 = arith.constant 0 : i32
    %c0_i32_0 = arith.constant 0 : i32
    %c0_i32_1 = arith.constant 0 : i32
    return %arg0, %c0_i32, %c0_i32_0 : i32, i32, i32
  }
  func.func @transform_3(%arg0: i32) -> (i32, i32, i32) {
    %c0_i32 = arith.constant 0 : i32
    %c0_i32_0 = arith.constant 0 : i32
    %c0_i32_1 = arith.constant 0 : i32
    return %arg0, %c0_i32, %c0_i32_0 : i32, i32, i32
  }
}

module attributes {stable_mosaic.version = 11 : i64} {
  func.func @_matmul_bias_kernel(%arg0: i32, %arg1: i32, %arg2: i32, %arg3: memref<16x32xf32, #tpu.memory_space<vmem>>, %arg4: memref<32x64xf32, #tpu.memory_space<vmem>>, %arg5: memref<1x64xf32, #tpu.memory_space<vmem>>, %arg6: memref<16x64xf32, #tpu.memory_space<vmem>>, %arg7: memref<16x64xf32, #tpu.memory_space<vmem>>) attributes {dimension_semantics = [#tpu.dimension_semantics<parallel>, #tpu.dimension_semantics<parallel>, #tpu.dimension_semantics<arbitrary>], iteration_bounds = array<i64: 1, 1, 1>, scalar_prefetch = 0 : i64, scratch_operands = 1 : i64, tpu.core_type = #tpu.core_type<tc>, window_params = [{transform_indices = @transform_0, window_bounds = array<i64: 16, 32>}, {transform_indices = @transform_1, window_bounds = array<i64: 32, 64>}, {transform_indices = @transform_2, window_bounds = array<i64: 1, 64>}, {transform_indices = @transform_3, window_bounds = array<i64: 16, 64>}]} {
    %c0_i32 = arith.constant 0 : i32
    %0 = arith.cmpi eq, %arg2, %c0_i32 : i32
    %1 = arith.extui %0 : i1 to i32
    %c0_i32_0 = arith.constant 0 : i32
    %2 = arith.cmpi ne, %1, %c0_i32_0 : i32
    scf.if %2 {
      %cst_10 = arith.constant 0.000000e+00 : f32
      %14 = vector.broadcast %cst_10 : f32 to vector<16x64xf32>
      %c0_11 = arith.constant 0 : index
      %c0_12 = arith.constant 0 : index
      %15 = vector.load %arg7[%c0_11, %c0_12] : memref<16x64xf32, #tpu.memory_space<vmem>>, vector<16x64xf32>
      tpu.vector_store %arg7[%c0_11, %c0_12], %14 {strides = array<i32>} : memref<16x64xf32, #tpu.memory_space<vmem>>, vector<16x64xf32>,
    } else {
    }
    %c0 = arith.constant 0 : index
    %c0_1 = arith.constant 0 : index
    %3 = vector.load %arg7[%c0, %c0_1] : memref<16x64xf32, #tpu.memory_space<vmem>>, vector<16x64xf32>
    %c0_2 = arith.constant 0 : index
    %c0_3 = arith.constant 0 : index
    %4 = vector.load %arg3[%c0_2, %c0_3] : memref<16x32xf32, #tpu.memory_space<vmem>>, vector<16x32xf32>
    %5 = arith.truncf %4 : vector<16x32xf32> to vector<16x32xbf16>
    %c0_4 = arith.constant 0 : index
    %c0_5 = arith.constant 0 : index
    %6 = vector.load %arg4[%c0_4, %c0_5] : memref<32x64xf32, #tpu.memory_space<vmem>>, vector<32x64xf32>
    %7 = arith.truncf %6 : vector<32x64xf32> to vector<32x64xbf16>
    %cst = arith.constant dense<0.000000e+00> : vector<16x64xf32>
    %8 = tpu.matmul %5, %7, %cst {dimension_numbers = #tpu.dot_dimension_numbers<[1], [0], [0], [1], [0, 0, 1, 1], [], []>} : vector<16x32xbf16>, vector<32x64xbf16>, vector<16x64xf32> -> vector<16x64xf32>
    %9 = arith.addf %3, %8 : vector<16x64xf32>
    %c0_6 = arith.constant 0 : index
    %c0_7 = arith.constant 0 : index
    %10 = vector.load %arg7[%c0_6, %c0_7] : memref<16x64xf32, #tpu.memory_space<vmem>>, vector<16x64xf32>
    tpu.vector_store %arg7[%c0_6, %c0_7], %9 {strides = array<i32>} : memref<16x64xf32, #tpu.memory_space<vmem>>, vector<16x64xf32>,
    %c0_i32_8 = arith.constant 0 : i32
    %11 = arith.cmpi eq, %arg2, %c0_i32_8 : i32
    %12 = arith.extui %11 : i1 to i32
    %c0_i32_9 = arith.constant 0 : i32
    %13 = arith.cmpi ne, %12, %c0_i32_9 : i32
    scf.if %13 {
      %c0_10 = arith.constant 0 : index
      %c0_11 = arith.constant 0 : index
      %14 = vector.load %arg7[%c0_10, %c0_11] : memref<16x64xf32, #tpu.memory_space<vmem>>, vector<16x64xf32>
      %c0_12 = arith.constant 0 : index
      %c0_13 = arith.constant 0 : index
      %15 = vector.load %arg5[%c0_12, %c0_13] : memref<1x64xf32, #tpu.memory_space<vmem>>, vector<1x64xf32>
      %16 = vector.broadcast %15 : vector<1x64xf32> to vector<16x64xf32>
      %17 = arith.addf %14, %16 : vector<16x64xf32>
      %cst_14 = arith.constant 0.000000e+00 : f32
      %18 = vector.broadcast %cst_14 : f32 to vector<16x64xf32>
      %19 = arith.maximumf %17, %18 : vector<16x64xf32>
      %c0_15 = arith.constant 0 : index
      %c0_16 = arith.constant 0 : index
      %20 = vector.load %arg6[%c0_15, %c0_16] : memref<16x64xf32, #tpu.memory_space<vmem>>, vector<16x64xf32>
      tpu.vector_store %arg6[%c0_15, %c0_16], %19 {strides = array<i32>} : memref<16x64xf32, #tpu.memory_space<vmem>>, vector<16x64xf32>,
    } else {
    }
    return
  }
  func.func @transform_0(%arg0: i32, %arg1: i32, %arg2: i32) -> (i32, i32) {
    %c0_i32 = arith.constant 0 : i32
    return %arg0, %arg2 : i32, i32
  }
  func.func @transform_1(%arg0: i32, %arg1: i32, %arg2: i32) -> (i32, i32) {
    %c0_i32 = arith.constant 0 : i32
    return %arg2, %arg1 : i32, i32
  }
  func.func @transform_2(%arg0: i32, %arg1: i32, %arg2: i32) -> (i32, i32) {
    %c0_i32 = arith.constant 0 : i32
    %c0_i32_0 = arith.constant 0 : i32
    return %c0_i32, %arg1 : i32, i32
  }
  func.func @transform_3(%arg0: i32, %arg1: i32, %arg2: i32) -> (i32, i32) {
    %c0_i32 = arith.constant 0 : i32
    return %arg0, %arg1 : i32, i32
  }
}

module attributes {stable_mosaic.version = 11 : i64} {
  func.func @_matmul_bias_kernel(%arg0: i32, %arg1: i32, %arg2: i32, %arg3: memref<16x64xf32, #tpu.memory_space<vmem>>, %arg4: memref<64x32xf32, #tpu.memory_space<vmem>>, %arg5: memref<1x32xf32, #tpu.memory_space<vmem>>, %arg6: memref<16x32xf32, #tpu.memory_space<vmem>>, %arg7: memref<16x32xf32, #tpu.memory_space<vmem>>) attributes {dimension_semantics = [#tpu.dimension_semantics<parallel>, #tpu.dimension_semantics<parallel>, #tpu.dimension_semantics<arbitrary>], iteration_bounds = array<i64: 1, 1, 1>, scalar_prefetch = 0 : i64, scratch_operands = 1 : i64, tpu.core_type = #tpu.core_type<tc>, window_params = [{transform_indices = @transform_0, window_bounds = array<i64: 16, 64>}, {transform_indices = @transform_1, window_bounds = array<i64: 64, 32>}, {transform_indices = @transform_2, window_bounds = array<i64: 1, 32>}, {transform_indices = @transform_3, window_bounds = array<i64: 16, 32>}]} {
    %c0_i32 = arith.constant 0 : i32
    %0 = arith.cmpi eq, %arg2, %c0_i32 : i32
    %1 = arith.extui %0 : i1 to i32
    %c0_i32_0 = arith.constant 0 : i32
    %2 = arith.cmpi ne, %1, %c0_i32_0 : i32
    scf.if %2 {
      %cst_10 = arith.constant 0.000000e+00 : f32
      %14 = vector.broadcast %cst_10 : f32 to vector<16x32xf32>
      %c0_11 = arith.constant 0 : index
      %c0_12 = arith.constant 0 : index
      %15 = vector.load %arg7[%c0_11, %c0_12] : memref<16x32xf32, #tpu.memory_space<vmem>>, vector<16x32xf32>
      tpu.vector_store %arg7[%c0_11, %c0_12], %14 {strides = array<i32>} : memref<16x32xf32, #tpu.memory_space<vmem>>, vector<16x32xf32>,
    } else {
    }
    %c0 = arith.constant 0 : index
    %c0_1 = arith.constant 0 : index
    %3 = vector.load %arg7[%c0, %c0_1] : memref<16x32xf32, #tpu.memory_space<vmem>>, vector<16x32xf32>
    %c0_2 = arith.constant 0 : index
    %c0_3 = arith.constant 0 : index
    %4 = vector.load %arg3[%c0_2, %c0_3] : memref<16x64xf32, #tpu.memory_space<vmem>>, vector<16x64xf32>
    %5 = arith.truncf %4 : vector<16x64xf32> to vector<16x64xbf16>
    %c0_4 = arith.constant 0 : index
    %c0_5 = arith.constant 0 : index
    %6 = vector.load %arg4[%c0_4, %c0_5] : memref<64x32xf32, #tpu.memory_space<vmem>>, vector<64x32xf32>
    %7 = arith.truncf %6 : vector<64x32xf32> to vector<64x32xbf16>
    %cst = arith.constant dense<0.000000e+00> : vector<16x32xf32>
    %8 = tpu.matmul %5, %7, %cst {dimension_numbers = #tpu.dot_dimension_numbers<[1], [0], [0], [1], [0, 0, 1, 1], [], []>} : vector<16x64xbf16>, vector<64x32xbf16>, vector<16x32xf32> -> vector<16x32xf32>
    %9 = arith.addf %3, %8 : vector<16x32xf32>
    %c0_6 = arith.constant 0 : index
    %c0_7 = arith.constant 0 : index
    %10 = vector.load %arg7[%c0_6, %c0_7] : memref<16x32xf32, #tpu.memory_space<vmem>>, vector<16x32xf32>
    tpu.vector_store %arg7[%c0_6, %c0_7], %9 {strides = array<i32>} : memref<16x32xf32, #tpu.memory_space<vmem>>, vector<16x32xf32>,
    %c0_i32_8 = arith.constant 0 : i32
    %11 = arith.cmpi eq, %arg2, %c0_i32_8 : i32
    %12 = arith.extui %11 : i1 to i32
    %c0_i32_9 = arith.constant 0 : i32
    %13 = arith.cmpi ne, %12, %c0_i32_9 : i32
    scf.if %13 {
      %c0_10 = arith.constant 0 : index
      %c0_11 = arith.constant 0 : index
      %14 = vector.load %arg7[%c0_10, %c0_11] : memref<16x32xf32, #tpu.memory_space<vmem>>, vector<16x32xf32>
      %c0_12 = arith.constant 0 : index
      %c0_13 = arith.constant 0 : index
      %15 = vector.load %arg5[%c0_12, %c0_13] : memref<1x32xf32, #tpu.memory_space<vmem>>, vector<1x32xf32>
      %16 = vector.broadcast %15 : vector<1x32xf32> to vector<16x32xf32>
      %17 = arith.addf %14, %16 : vector<16x32xf32>
      %c0_14 = arith.constant 0 : index
      %c0_15 = arith.constant 0 : index
      %18 = vector.load %arg6[%c0_14, %c0_15] : memref<16x32xf32, #tpu.memory_space<vmem>>, vector<16x32xf32>
      tpu.vector_store %arg6[%c0_14, %c0_15], %17 {strides = array<i32>} : memref<16x32xf32, #tpu.memory_space<vmem>>, vector<16x32xf32>,
    } else {
    }
    return
  }
  func.func @transform_0(%arg0: i32, %arg1: i32, %arg2: i32) -> (i32, i32) {
    %c0_i32 = arith.constant 0 : i32
    return %arg0, %arg2 : i32, i32
  }
  func.func @transform_1(%arg0: i32, %arg1: i32, %arg2: i32) -> (i32, i32) {
    %c0_i32 = arith.constant 0 : i32
    return %arg2, %arg1 : i32, i32
  }
  func.func @transform_2(%arg0: i32, %arg1: i32, %arg2: i32) -> (i32, i32) {
    %c0_i32 = arith.constant 0 : i32
    %c0_i32_0 = arith.constant 0 : i32
    return %c0_i32, %arg1 : i32, i32
  }
  func.func @transform_3(%arg0: i32, %arg1: i32, %arg2: i32) -> (i32, i32) {
    %c0_i32 = arith.constant 0 : i32
    return %arg0, %arg1 : i32, i32
  }
}

module attributes {stable_mosaic.version = 11 : i64} {
  func.func @_add_layernorm_kernel(%arg0: i32, %arg1: memref<16x32xf32, #tpu.memory_space<vmem>>, %arg2: memref<16x32xf32, #tpu.memory_space<vmem>>, %arg3: memref<1x32xf32, #tpu.memory_space<vmem>>, %arg4: memref<1x32xf32, #tpu.memory_space<vmem>>, %arg5: memref<16x32xf32, #tpu.memory_space<vmem>>) attributes {dimension_semantics = [#tpu.dimension_semantics<parallel>], iteration_bounds = array<i64: 1>, scalar_prefetch = 0 : i64, scratch_operands = 0 : i64, tpu.core_type = #tpu.core_type<tc>, window_params = [{transform_indices = @transform_0, window_bounds = array<i64: 16, 32>}, {transform_indices = @transform_1, window_bounds = array<i64: 16, 32>}, {pipeline_mode = #tpu.pipeline_mode<synchronous>, transform_indices = @transform_2, window_bounds = array<i64: 1, 32>}, {pipeline_mode = #tpu.pipeline_mode<synchronous>, transform_indices = @transform_3, window_bounds = array<i64: 1, 32>}, {transform_indices = @transform_4, window_bounds = array<i64: 16, 32>}]} {
    %c0 = arith.constant 0 : index
    %c0_0 = arith.constant 0 : index
    %0 = vector.load %arg1[%c0, %c0_0] : memref<16x32xf32, #tpu.memory_space<vmem>>, vector<16x32xf32>
    %c0_1 = arith.constant 0 : index
    %c0_2 = arith.constant 0 : index
    %1 = vector.load %arg2[%c0_1, %c0_2] : memref<16x32xf32, #tpu.memory_space<vmem>>, vector<16x32xf32>
    %2 = arith.addf %0, %1 : vector<16x32xf32>
    %cst = arith.constant dense<0.000000e+00> : vector<16xf32>
    %3 = vector.multi_reduction <add>, %2, %cst [1] : vector<16x32xf32> to vector<16xf32>
    %4 = vector.shape_cast %3 : vector<16xf32> to vector<16x1xf32>
    %cst_3 = arith.constant 3.200000e+01 : f32
    %5 = vector.broadcast %cst_3 : f32 to vector<16x1xf32>
    %6 = arith.divf %4, %5 : vector<16x1xf32>
    %7 = vector.broadcast %6 : vector<16x1xf32> to vector<16x32xf32>
    %8 = arith.subf %2, %7 : vector<16x32xf32>
    %9 = arith.mulf %8, %8 : vector<16x32xf32>
    %cst_4 = arith.constant dense<0.000000e+00> : vector<16xf32>
    %10 = vector.multi_reduction <add>, %9, %cst_4 [1] : vector<16x32xf32> to vector<16xf32>
    %11 = vector.shape_cast %10 : vector<16xf32> to vector<16x1xf32>
    %cst_5 = arith.constant 3.200000e+01 : f32
    %12 = vector.broadcast %cst_5 : f32 to vector<16x1xf32>
    %13 = arith.divf %11, %12 : vector<16x1xf32>
    %14 = vector.broadcast %6 : vector<16x1xf32> to vector<16x32xf32>
    %15 = arith.subf %2, %14 : vector<16x32xf32>
    %cst_6 = arith.constant 9.99999974E-6 : f32
    %16 = vector.broadcast %cst_6 : f32 to vector<16x1xf32>
    %17 = arith.addf %13, %16 : vector<16x1xf32>
    %18 = math.rsqrt %17 : vector<16x1xf32>
    %19 = vector.broadcast %18 : vector<16x1xf32> to vector<16x32xf32>
    %20 = arith.mulf %15, %19 : vector<16x32xf32>
    %c0_7 = arith.constant 0 : index
    %c0_8 = arith.constant 0 : index
    %21 = vector.load %arg3[%c0_7, %c0_8] : memref<1x32xf32, #tpu.memory_space<vmem>>, vector<1x32xf32>
    %22 = vector.broadcast %21 : vector<1x32xf32> to vector<16x32xf32>
    %23 = arith.mulf %20, %22 : vector<16x32xf32>
    %c0_9 = arith.constant 0 : index
    %c0_10 = arith.constant 0 : index
    %24 = vector.load %arg4[%c0_9, %c0_10] : memref<1x32xf32, #tpu.memory_space<vmem>>, vector<1x32xf32>
    %25 = vector.broadcast %24 : vector<1x32xf32> to vector<16x32xf32>
    %26 = arith.addf %23, %25 : vector<16x32xf32>
    %c0_11 = arith.constant 0 : index
    %c0_12 = arith.constant 0 : index
    %27 = vector.load %arg5[%c0_11, %c0_12] : memref<16x32xf32, #tpu.memory_space<vmem>>, vector<16x32xf32>
    tpu.vector_store %arg5[%c0_11, %c0_12], %26 {strides = array<i32>} : memref<16x32xf32, #tpu.memory_space<vmem>>, vector<16x32xf32>,
    return
  }
  func.func @transform_0(%arg0: i32) -> (i32, i32) {
    %c0_i32 = arith.constant 0 : i32
    %c0_i32_0 = arith.constant 0 : i32
    return %arg0, %c0_i32 : i32, i32
  }
  func.func @transform_1(%arg0: i32) -> (i32, i32) {
    %c0_i32 = arith.constant 0 : i32
    %c0_i32_0 = arith.constant 0 : i32
    return %arg0, %c0_i32 : i32, i32
  }
  func.func @transform_2(%arg0: i32) -> (i32, i32) {
    %c0_i32 = arith.constant 0 : i32
    %c0_i32_0 = arith.constant 0 : i32
    %c0_i32_1 = arith.constant 0 : i32
    return %c0_i32, %c0_i32_0 : i32, i32
  }
  func.func @transform_3(%arg0: i32) -> (i32, i32) {
    %c0_i32 = arith.constant 0 : i32
    %c0_i32_0 = arith.constant 0 : i32
    %c0_i32_1 = arith.constant 0 : i32
    return %c0_i32, %c0_i32_0 : i32, i32
  }
  func.func @transform_4(%arg0: i32) -> (i32, i32) {
    %c0_i32 = arith.constant 0 : i32
    %c0_i32_0 = arith.constant 0 : i32
    return %arg0, %c0_i32 : i32, i32
  }
}

</mosaic_0001>

<llo_original>
// kernel: decoder_forward.24
$region0: #{decoder_forward.24}
  #allocation0 [shape = 'u32[]', space=smem, size = 0x4, offset = 0x4, fixed_abs, tag = 'smem constant byte address 0x4 - core index']
  #allocation1 [shape = 'u32[144,128]{1,0:T(1,128)}', space=vmem, size = 0x12000, scoped, tag = 'internal scratch']
  #allocation2 [shape = 'f32[16,96]{1,0:T(8,128)}', space=vmem, size = 0x2000, scoped, tag = 'scratch operand']
  %s0 = inlined_call_operand.vmem [shape: f32[16,32], index: 0, kind: input, shape index: {}]
  %s1 = inlined_call_operand.vmem [shape: f32[32,96], index: 1, kind: input, shape index: {}]
  %s2 = inlined_call_operand.vmem [shape: f32[1,96], index: 2, kind: input, shape index: {}]
  %s3 = inlined_call_operand.vmem [shape: f32[16,96], index: 3, kind: output, shape index: {}]
  %s4 = sld [smem:[#allocation0]]
  $region30: #{decoder_forward.24} parent=0
    _
  %s6 = ssub.s32 1, %s4
  %s7 = scalar_select 0, %s6, %s4
  // Predicated region
  $region2: #{decoder_forward.24} parent=0 // pred_check
    _
  $region3: #{decoder_forward.24} parent=0 // pred_check_branch
    %9 = sbr.rel (0) target = $region5
  $region4: #{decoder_forward.24} parent=0 // pred_region
    _
  $region5: #{decoder_forward.24} parent=0 // pred_fallthru
    _
  // Predicated region
  $region6: #{decoder_forward.24} parent=0 // pred_check
    _
  $region7: #{decoder_forward.24} parent=0 // pred_check_branch
    %11 = sbr.rel (0) target = $region9
  $region8: #{decoder_forward.24} parent=0 // pred_region
    _
  $region9: #{decoder_forward.24} parent=0 // pred_fallthru
    _
  // Predicated region
  $region10: #{decoder_forward.24} parent=0 // pred_check
    _
  $region11: #{decoder_forward.24} parent=0 // pred_check_branch
    %13 = sbr.rel (0) target = $region13
  $region12: #{decoder_forward.24} parent=0 // pred_region
    _
  $region13: #{decoder_forward.24} parent=0 // pred_fallthru
    _
  %p15 = scmp.eq.s32.totalorder 0, 0
  // Predicated region
  $region14: #{decoder_forward.24} parent=0 // pred_check
    %p16 = pneg %p15
  $region15: #{decoder_forward.24} parent=0 // pred_check_branch
    %18 = sbr.rel (%p16) target = $region17
  $region16: #{decoder_forward.24} parent=0 // pred_region
    %vm19 = vcmask 785408
    %20 = vst.msk [vmem:[#allocation2] sm:$0xff] %vm19, 0.0
    %21 = vst.msk [vmem:[#allocation2 + $0x8] sm:$0xff] %vm19, 0.0
  $region17: #{decoder_forward.24} parent=0 // pred_fallthru
    _
  %v22 = vld [vmem:[#allocation2] sm:$0xff]
  %v23 = vld [vmem:[#allocation2 + $0x8] sm:$0xff]
  %v24 = vld [vmem:[%s0] sm:$0xff]
  %v25 = vld [vmem:[%s0 + $0x8] sm:$0xff]
  %v26 = vpack.c.bf16 %v25, %v24
  %v27 = vld [vmem:[%s1] sm:$0xff]
  %v28 = vld [vmem:[%s1 + $0x8] sm:$0xff]
  %v29 = vld [vmem:[%s1 + $0x10] sm:$0xff]
  %v30 = vld [vmem:[%s1 + $0x18] sm:$0xff]
  %v31 = vpack.c.bf16 %v28, %v27
  %v32 = vpack.c.bf16 %v30, %v29
  %vm33 = vcmask 261120
  %v35 = vsel %vm33, %v26, 0
  %37 = vmatprep.subr.bf16.mxu0 0
  %38 = vmatpush1.bf16.msra.mxu0 %v31
  %39 = vmatprep.subr.bf16.mxu0 0
  %40 = vmatpush1.bf16.msra.mxu0 %v32
  %41 = vmatprep.subr.bf16.mxu0 0
  %42 = vmatpush1.bf16.msra.mxu0 0
  %43 = vmatprep.subr.bf16.mxu0 0
  %44 = vmatpush1.bf16.msra.mxu0 0
  %45 = vmatprep.subr.bf16.mxu0 0
  %46 = vmatpush1.bf16.msra.mxu0 0
  %47 = vmatprep.subr.bf16.mxu0 0
  %48 = vmatpush1.bf16.msra.mxu0 0
  %49 = vmatprep.subr.bf16.mxu0 0
  %50 = vmatpush1.bf16.msra.mxu0 0
  %51 = vmatprep.subr.bf16.mxu0 0
  %52 = vmatpush1.bf16.msra.mxu0 0
  %53 = vmatprep.subr.bf16.mxu0 0
  %54 = vmatpush1.bf16.msra.mxu0 0
  %55 = vmatprep.subr.bf16.mxu0 0
  %56 = vmatpush1.bf16.msra.mxu0 0
  %57 = vmatprep.subr.bf16.mxu0 0
  %58 = vmatpush1.bf16.msra.mxu0 0
  %59 = vmatprep.subr.bf16.mxu0 0
  %60 = vmatpush1.bf16.msra.mxu0 0
  %61 = vmatprep.subr.bf16.mxu0 0
  %62 = vmatpush1.bf16.msra.mxu0 0
  %63 = vmatprep.subr.bf16.mxu0 0
  %64 = vmatpush1.bf16.msra.mxu0 0
  %65 = vmatprep.subr.bf16.mxu0 0
  %66 = vmatpush1.bf16.msra.mxu0 0
  %67 = vmatprep.subr.bf16.mxu0 0
  %68 = vmatpush1.bf16.msra.mxu0 0
  %69 = vmatprep.mubr.bf16.mxu0 0
  %70 = vmatmul.mubr.bf16.gmra.mrb[0].mxu0 %v35
  %v71 = vpop.f32.mrb[0].mxu0
  %v72 = vadd.f32 0.0, %v71
  %v73 = vpop.f32.mrb[0].mxu0
  %v74 = vpop.f32.mrb[0].mxu0
  %v75 = vadd.f32 0.0, %v74
  %v76 = vpop.f32.mrb[0].mxu0
  %77 = vdwg.mxu0
  %v78 = vadd.f32 %v22, %v72
  %v79 = vadd.f32 %v23, %v75
  %vm80 = vcmask 785408
  %81 = vst.msk [vmem:[#allocation2] sm:$0xff] %vm80, %v78
  %82 = vst.msk [vmem:[#allocation2 + $0x8] sm:$0xff] %vm80, %v79
  // Predicated region
  $region18: #{decoder_forward.24} parent=0 // pred_check
    %p83 = pneg %p15
  $region19: #{decoder_forward.24} parent=0 // pred_check_branch
    %85 = sbr.rel (%p83) target = $region21
  $region20: #{decoder_forward.24} parent=0 // pred_region
    %v86 = vld [vmem:[#allocation2] sm:$0xff]
    %v87 = vld [vmem:[#allocation2 + $0x8] sm:$0xff]
    %v88 = vld [vmem:[%s2] sm:$0x1]
    %v90 = vlaneseq
    %v91 = vshrl.u32 %v90, 7
    %v92 = vsub.s32 0, %v91
    %v93 = vrot.slane %v88, %v92
    %v95 = vadd.f32 %v86, %v93
    %v96 = vadd.f32 %v87, %v93
    %97 = vst.msk [vmem:[%s3] sm:$0xff] %vm80, %v95
    %98 = vst.msk [vmem:[%s3 + $0x8] sm:$0xff] %vm80, %v96
  $region21: #{decoder_forward.24} parent=0 // pred_fallthru
    _
  // Predicated region
  $region22: #{decoder_forward.24} parent=0 // pred_check
    _
  $region23: #{decoder_forward.24} parent=0 // pred_check_branch
    %100 = sbr.rel (0) target = $region25
  $region24: #{decoder_forward.24} parent=0 // pred_region
    _
  $region25: #{decoder_forward.24} parent=0 // pred_fallthru
    _
  // Predicated region
  $region26: #{decoder_forward.24} parent=0 // pred_check
    _
  $region27: #{decoder_forward.24} parent=0 // pred_check_branch
    %102 = sbr.rel (0) target = $region29
  $region28: #{decoder_forward.24} parent=0 // pred_region
    _
  $region29: #{decoder_forward.24} parent=0 // pred_fallthru
    _

// kernel: decoder_forward.26
$region0: #{decoder_forward.26}
  #allocation0 [shape = 'u32[]', space=smem, size = 0x4, offset = 0x4, fixed_abs, tag = 'smem constant byte address 0x4 - core index']
  #allocation1 [shape = 'u32[144,128]{1,0:T(1,128)}', space=vmem, size = 0x12000, scoped, tag = 'internal scratch']
  #allocation2 [shape = 'f32[16,32]{1,0:T(8,128)}', space=vmem, size = 0x2000, scoped, tag = 'scratch operand']
  %s0 = inlined_call_operand.vmem [shape: f32[16,32], index: 0, kind: input, shape index: {}]
  %s1 = inlined_call_operand.vmem [shape: f32[32,32], index: 1, kind: input, shape index: {}]
  %s2 = inlined_call_operand.vmem [shape: f32[1,32], index: 2, kind: input, shape index: {}]
  %s3 = inlined_call_operand.vmem [shape: f32[16,32], index: 3, kind: output, shape index: {}]
  %s4 = sld [smem:[#allocation0]]
  $region30: #{decoder_forward.26} parent=0
    _
  %s6 = ssub.s32 1, %s4
  %s7 = scalar_select 0, %s6, %s4
  // Predicated region
  $region2: #{decoder_forward.26} parent=0 // pred_check
    _
  $region3: #{decoder_forward.26} parent=0 // pred_check_branch
    %9 = sbr.rel (0) target = $region5
  $region4: #{decoder_forward.26} parent=0 // pred_region
    _
  $region5: #{decoder_forward.26} parent=0 // pred_fallthru
    _
  // Predicated region
  $region6: #{decoder_forward.26} parent=0 // pred_check
    _
  $region7: #{decoder_forward.26} parent=0 // pred_check_branch
    %11 = sbr.rel (0) target = $region9
  $region8: #{decoder_forward.26} parent=0 // pred_region
    _
  $region9: #{decoder_forward.26} parent=0 // pred_fallthru
    _
  // Predicated region
  $region10: #{decoder_forward.26} parent=0 // pred_check
    _
  $region11: #{decoder_forward.26} parent=0 // pred_check_branch
    %13 = sbr.rel (0) target = $region13
  $region12: #{decoder_forward.26} parent=0 // pred_region
    _
  $region13: #{decoder_forward.26} parent=0 // pred_fallthru
    _
  %p15 = scmp.eq.s32.totalorder 0, 0
  // Predicated region
  $region14: #{decoder_forward.26} parent=0 // pred_check
    %p16 = pneg %p15
  $region15: #{decoder_forward.26} parent=0 // pred_check_branch
    %18 = sbr.rel (%p16) target = $region17
  $region16: #{decoder_forward.26} parent=0 // pred_region
    %vm19 = vcmask 261120
    %20 = vst.msk [vmem:[#allocation2] sm:$0xff] %vm19, 0.0
    %21 = vst.msk [vmem:[#allocation2 + $0x8] sm:$0xff] %vm19, 0.0
  $region17: #{decoder_forward.26} parent=0 // pred_fallthru
    _
  %v22 = vld [vmem:[#allocation2] sm:$0xff]
  %v23 = vld [vmem:[#allocation2 + $0x8] sm:$0xff]
  %v24 = vld [vmem:[%s0] sm:$0xff]
  %v25 = vld [vmem:[%s0 + $0x8] sm:$0xff]
  %v26 = vpack.c.bf16 %v25, %v24
  %v27 = vld [vmem:[%s1] sm:$0xff]
  %v28 = vld [vmem:[%s1 + $0x8] sm:$0xff]
  %v29 = vld [vmem:[%s1 + $0x10] sm:$0xff]
  %v30 = vld [vmem:[%s1 + $0x18] sm:$0xff]
  %v31 = vpack.c.bf16 %v28, %v27
  %v32 = vpack.c.bf16 %v30, %v29
  %vm33 = vcmask 261120
  %v35 = vsel %vm33, %v26, 0
  %37 = vmatprep.subr.bf16.mxu0 0
  %38 = vmatpush1.bf16.msra.mxu0 %v31
  %39 = vmatprep.subr.bf16.mxu0 0
  %40 = vmatpush1.bf16.msra.mxu0 %v32
  %41 = vmatprep.subr.bf16.mxu0 0
  %42 = vmatpush1.bf16.msra.mxu0 0
  %43 = vmatprep.subr.bf16.mxu0 0
  %44 = vmatpush1.bf16.msra.mxu0 0
  %45 = vmatprep.subr.bf16.mxu0 0
  %46 = vmatpush1.bf16.msra.mxu0 0
  %47 = vmatprep.subr.bf16.mxu0 0
  %48 = vmatpush1.bf16.msra.mxu0 0
  %49 = vmatprep.subr.bf16.mxu0 0
  %50 = vmatpush1.bf16.msra.mxu0 0
  %51 = vmatprep.subr.bf16.mxu0 0
  %52 = vmatpush1.bf16.msra.mxu0 0
  %53 = vmatprep.subr.bf16.mxu0 0
  %54 = vmatpush1.bf16.msra.mxu0 0
  %55 = vmatprep.subr.bf16.mxu0 0
  %56 = vmatpush1.bf16.msra.mxu0 0
  %57 = vmatprep.subr.bf16.mxu0 0
  %58 = vmatpush1.bf16.msra.mxu0 0
  %59 = vmatprep.subr.bf16.mxu0 0
  %60 = vmatpush1.bf16.msra.mxu0 0
  %61 = vmatprep.subr.bf16.mxu0 0
  %62 = vmatpush1.bf16.msra.mxu0 0
  %63 = vmatprep.subr.bf16.mxu0 0
  %64 = vmatpush1.bf16.msra.mxu0 0
  %65 = vmatprep.subr.bf16.mxu0 0
  %66 = vmatpush1.bf16.msra.mxu0 0
  %67 = vmatprep.subr.bf16.mxu0 0
  %68 = vmatpush1.bf16.msra.mxu0 0
  %69 = vmatprep.mubr.bf16.mxu0 0
  %70 = vmatmul.mubr.bf16.gmra.mrb[0].mxu0 %v35
  %v71 = vpop.f32.mrb[0].mxu0
  %v72 = vadd.f32 0.0, %v71
  %v73 = vpop.f32.mrb[0].mxu0
  %v74 = vpop.f32.mrb[0].mxu0
  %v75 = vadd.f32 0.0, %v74
  %v76 = vpop.f32.mrb[0].mxu0
  %77 = vdwg.mxu0
  %v78 = vadd.f32 %v22, %v72
  %v79 = vadd.f32 %v23, %v75
  %80 = vst.msk [vmem:[#allocation2] sm:$0xff] %vm33, %v78
  %81 = vst.msk [vmem:[#allocation2 + $0x8] sm:$0xff] %vm33, %v79
  // Predicated region
  $region18: #{decoder_forward.26} parent=0 // pred_check
    %p82 = pneg %p15
  $region19: #{decoder_forward.26} parent=0 // pred_check_branch
    %84 = sbr.rel (%p82) target = $region21
  $region20: #{decoder_forward.26} parent=0 // pred_region
    %v85 = vld [vmem:[#allocation2] sm:$0xff]
    %v86 = vld [vmem:[#allocation2 + $0x8] sm:$0xff]
    %v87 = vld [vmem:[%s2] sm:$0x1]
    %v89 = vlaneseq
    %v90 = vshrl.u32 %v89, 7
    %v91 = vsub.s32 0, %v90
    %v92 = vrot.slane %v87, %v91
    %v94 = vadd.f32 %v85, %v92
    %v95 = vadd.f32 %v86, %v92
    %96 = vst.msk [vmem:[%s3] sm:$0xff] %vm33, %v94
    %97 = vst.msk [vmem:[%s3 + $0x8] sm:$0xff] %vm33, %v95
  $region21: #{decoder_forward.26} parent=0 // pred_fallthru
    _
  // Predicated region
  $region22: #{decoder_forward.26} parent=0 // pred_check
    _
  $region23: #{decoder_forward.26} parent=0 // pred_check_branch
    %99 = sbr.rel (0) target = $region25
  $region24: #{decoder_forward.26} parent=0 // pred_region
    _
  $region25: #{decoder_forward.26} parent=0 // pred_fallthru
    _
  // Predicated region
  $region26: #{decoder_forward.26} parent=0 // pred_check
    _
  $region27: #{decoder_forward.26} parent=0 // pred_check_branch
    %101 = sbr.rel (0) target = $region29
  $region28: #{decoder_forward.26} parent=0 // pred_region
    _
  $region29: #{decoder_forward.26} parent=0 // pred_fallthru
    _

// kernel: decoder_forward.25
$region0: #{decoder_forward.25}
  #allocation0 [shape = 'u32[]', space=smem, size = 0x4, offset = 0x4, fixed_abs, tag = 'smem constant byte address 0x4 - core index']
  #allocation1 [shape = 'u32[144,128]{1,0:T(1,128)}', space=vmem, size = 0x12000, scoped, tag = 'internal scratch']
  %s0 = inlined_call_operand.vmem [shape: f32[2,8,32], index: 0, kind: input, shape index: {}]
  %s1 = inlined_call_operand.vmem [shape: f32[2,8,32], index: 1, kind: input, shape index: {}]
  %s2 = inlined_call_operand.vmem [shape: f32[2,8,32], index: 2, kind: input, shape index: {}]
  %s3 = inlined_call_operand.vmem [shape: f32[2,8,32], index: 3, kind: output, shape index: {}]
  %s4 = sld [smem:[#allocation0]]
  $region45: #{decoder_forward.25} parent=0
    _
  %s6 = ssub.s32 1, %s4
  %s7 = scalar_select 0, %s6, %s4
  loop: start=0, step=1, limit=4
  $region2: #{decoder_forward.25} parent=0 // loop_pre_header
    _
  $region3: #{decoder_forward.25} parent=0 // loop_header
    %s9 = sphi 0, %s13
    %p10 = scmp.ge.s32.totalorder %s9, 4
    %s19 = sphi 0, %s21
    %s22 = sphi 0, %s19
    %s23 = sphi 0, %s22
    %s39 = sphi 0, %s23
    %s45 = sphi 0, %s47
    %s48 = sphi 0, %s45
    %s49 = sphi 0, %s48
    %s65 = sphi 0, %s49
    %s71 = sphi 0, %s73
    %s74 = sphi 0, %s71
    %s75 = sphi 0, %s74
    %s91 = sphi 0, %s75
    %s97 = sphi 0, %s99
    %s100 = sphi 0, %s97
    %s101 = sphi 0, %s100
    %s117 = sphi 0, %s101
  $region4: #{decoder_forward.25} parent=0 // loop_header_branch
    %12 = sbr.rel (%p10) target = $region8
  $region5: #{decoder_forward.25} parent=0 // loop_body
    %s14 = ssub.s32 %s9, 1
    %s15 = ssub.s32 %s9, 2
    %s16 = sadd.s32 %s9, 1
    %s17 = ssub.s32 %s9, %s16
    %p18 = scmp.eq.s32.totalorder %s17, 0
    %s20 = sadd.s32 %s19, 1
    %s21 = scalar_select %p18, %s19, %s20
    %p24 = pneg %p18
    %p25 = scmp.eq.s32.totalorder %s9, 1
    %p26 = por %p24, %p25
    %p27 = scmp.ne.s32.totalorder %s19, %s22
    %p28 = scmp.eq.s32.totalorder %s9, 0
    %p29 = por %p27, %p28
    %p30 = scmp.ne.s32.totalorder %s19, %s22
    %p31 = scmp.eq.s32.totalorder %s14, 1
    %p32 = por %p30, %p31
    %p33 = scmp.ne.s32.totalorder %s22, %s23
    %p34 = scmp.eq.s32.totalorder %s14, 0
    %p35 = por %p33, %p34
    %p36 = scmp.ne.s32.totalorder %s22, %s23
    %p37 = scmp.eq.s32.totalorder %s15, 1
    %p38 = por %p36, %p37
    %p40 = scmp.ne.s32.totalorder %s23, %s39
    %p41 = scmp.eq.s32.totalorder %s15, 0
    %p42 = por %p40, %p41
    %s43 = ssub.s32 %s9, %s16
    %p44 = scmp.eq.s32.totalorder %s43, 0
    %s46 = sadd.s32 %s45, 1
    %s47 = scalar_select %p44, %s45, %s46
    %p50 = pneg %p44
    %p51 = scmp.eq.s32.totalorder %s9, 1
    %p52 = por %p50, %p51
    %p53 = scmp.ne.s32.totalorder %s45, %s48
    %p54 = scmp.eq.s32.totalorder %s9, 0
    %p55 = por %p53, %p54
    %p56 = scmp.ne.s32.totalorder %s45, %s48
    %p57 = scmp.eq.s32.totalorder %s14, 1
    %p58 = por %p56, %p57
    %p59 = scmp.ne.s32.totalorder %s48, %s49
    %p60 = scmp.eq.s32.totalorder %s14, 0
    %p61 = por %p59, %p60
    %p62 = scmp.ne.s32.totalorder %s48, %s49
    %p63 = scmp.eq.s32.totalorder %s15, 1
    %p64 = por %p62, %p63
    %p66 = scmp.ne.s32.totalorder %s49, %s65
    %p67 = scmp.eq.s32.totalorder %s15, 0
    %p68 = por %p66, %p67
    %s69 = ssub.s32 %s9, %s16
    %p70 = scmp.eq.s32.totalorder %s69, 0
    %s72 = sadd.s32 %s71, 1
    %s73 = scalar_select %p70, %s71, %s72
    %p76 = pneg %p70
    %p77 = scmp.eq.s32.totalorder %s9, 1
    %p78 = por %p76, %p77
    %p79 = scmp.ne.s32.totalorder %s71, %s74
    %p80 = scmp.eq.s32.totalorder %s9, 0
    %p81 = por %p79, %p80
    %p82 = scmp.ne.s32.totalorder %s71, %s74
    %p83 = scmp.eq.s32.totalorder %s14, 1
    %p84 = por %p82, %p83
    %p85 = scmp.ne.s32.totalorder %s74, %s75
    %p86 = scmp.eq.s32.totalorder %s14, 0
    %p87 = por %p85, %p86
    %p88 = scmp.ne.s32.totalorder %s74, %s75
    %p89 = scmp.eq.s32.totalorder %s15, 1
    %p90 = por %p88, %p89
    %p92 = scmp.ne.s32.totalorder %s75, %s91
    %p93 = scmp.eq.s32.totalorder %s15, 0
    %p94 = por %p92, %p93
    %s95 = ssub.s32 %s9, %s16
    %p96 = scmp.eq.s32.totalorder %s95, 0
    %s98 = sadd.s32 %s97, 1
    %s99 = scalar_select %p96, %s97, %s98
    %p102 = pneg %p96
    %p103 = scmp.eq.s32.totalorder %s9, 1
    %p104 = por %p102, %p103
    %p105 = scmp.ne.s32.totalorder %s97, %s100
    %p106 = scmp.eq.s32.totalorder %s9, 0
    %p107 = por %p105, %p106
    %p108 = scmp.ne.s32.totalorder %s97, %s100
    %p109 = scmp.eq.s32.totalorder %s14, 1
    %p110 = por %p108, %p109
    %p111 = scmp.ne.s32.totalorder %s100, %s101
    %p112 = scmp.eq.s32.totalorder %s14, 0
    %p113 = por %p111, %p112
    %p114 = scmp.ne.s32.totalorder %s100, %s101
    %p115 = scmp.eq.s32.totalorder %s15, 1
    %p116 = por %p114, %p115
    %p118 = scmp.ne.s32.totalorder %s101, %s117
    %p119 = scmp.eq.s32.totalorder %s15, 0
    %p120 = por %p118, %p119
    %p121 = scmp.le.s32.totalorder 1, %s9
    %p122 = scmp.lt.s32.totalorder %s9, 3
    %p123 = pnand %p121, %p122
    %p124 = pneg %p123
    // Predicated region
    $region9: #{decoder_forward.25} parent=5 // pred_check
      _
    $region10: #{decoder_forward.25} parent=5 // pred_check_branch
      %126 = sbr.rel (%p123) target = $region12
    $region11: #{decoder_forward.25} parent=5 // pred_region
      %s127 = ssub.s32 %s9, 1
    $region12: #{decoder_forward.25} parent=5 // pred_fallthru
      _
    %p128 = scmp.lt.s32.totalorder %s9, 2
    // Predicated region
    $region13: #{decoder_forward.25} parent=5 // pred_check
      %p129 = pneg %p128
    $region14: #{decoder_forward.25} parent=5 // pred_check_branch
      %131 = sbr.rel (%p129) target = $region16
    $region15: #{decoder_forward.25} parent=5 // pred_region
      // Predicated region
      $region17: #{decoder_forward.25} parent=15 // pred_check
        %p132 = pneg %p29
      $region18: #{decoder_forward.25} parent=15 // pred_check_branch
        %134 = sbr.rel (%p132) target = $region20
      $region19: #{decoder_forward.25} parent=15 // pred_region
        %p135 = scmp.lt.s32.totalorder %s9, 1
        %s136 = scalar_select %p135, %s9, 1
        %s137 = smul.addr %s136, 8
        %s138 = scalar_lea.vmem %s0, %s137
      $region20: #{decoder_forward.25} parent=15 // pred_fallthru
        _
      // Predicated region
      $region21: #{decoder_forward.25} parent=15 // pred_check
        %p139 = pneg %p55
      $region22: #{decoder_forward.25} parent=15 // pred_check_branch
        %141 = sbr.rel (%p139) target = $region24
      $region23: #{decoder_forward.25} parent=15 // pred_region
        %p142 = scmp.lt.s32.totalorder %s9, 1
        %s143 = scalar_select %p142, %s9, 1
        %s144 = smul.addr %s143, 8
        %s145 = scalar_lea.vmem %s1, %s144
      $region24: #{decoder_forward.25} parent=15 // pred_fallthru
        _
      // Predicated region
      $region25: #{decoder_forward.25} parent=15 // pred_check
        %p146 = pneg %p81
      $region26: #{decoder_forward.25} parent=15 // pred_check_branch
        %148 = sbr.rel (%p146) target = $region28
      $region27: #{decoder_forward.25} parent=15 // pred_region
        %p149 = scmp.lt.s32.totalorder %s9, 1
        %s150 = scalar_select %p149, %s9, 1
        %s151 = smul.addr %s150, 8
        %s152 = scalar_lea.vmem %s2, %s151
      $region28: #{decoder_forward.25} parent=15 // pred_fallthru
        _
    $region16: #{decoder_forward.25} parent=5 // pred_fallthru
      _
    %p153 = scmp.le.s32.totalorder 1, %s9
    %p154 = scmp.lt.s32.totalorder %s9, 3
    %p155 = pnand %p153, %p154
    %p156 = pneg %p155
    // Predicated region
    $region29: #{decoder_forward.25} parent=5 // pred_check
      _
    $region30: #{decoder_forward.25} parent=5 // pred_check_branch
      %158 = sbr.rel (%p155) target = $region32
    $region31: #{decoder_forward.25} parent=5 // pred_region
      %s159 = ssub.s32 %s9, 1
      %p160 = scmp.lt.s32.totalorder %s14, 1
      %s161 = scalar_select %p160, %s14, 1
      %s162 = smul.addr %s161, 8
      %s163 = scalar_lea.vmem %s0, %s162
      %p164 = pneg %p35
      %p165 = pneg %p32
      %p166 = scmp.lt.s32.totalorder %s14, 1
      %s167 = scalar_select %p166, %s14, 1
      %s168 = smul.addr %s167, 8
      %s169 = scalar_lea.vmem %s1, %s168
      %p170 = pneg %p61
      %p171 = pneg %p58
      %p172 = scmp.lt.s32.totalorder %s14, 1
      %s173 = scalar_select %p172, %s14, 1
      %s174 = smul.addr %s173, 8
      %s175 = scalar_lea.vmem %s2, %s174
      %p176 = pneg %p87
      %p177 = pneg %p84
      %p178 = pneg %p113
      %p179 = pneg %p110
      %p180 = scmp.lt.s32.totalorder %s14, 1
      %s181 = scalar_select %p180, %s14, 1
      %s182 = smul.addr %s181, 8
      %s183 = scalar_lea.vmem %s3, %s182
      %p184 = scmp.lt.s32.totalorder %s14, 1
      %s185 = scalar_select %p184, %s14, 1
      %s186 = smul.addr %s185, 8
      %s187 = scalar_lea.vmem %s0, %s186
      %p188 = scmp.lt.s32.totalorder %s14, 1
      %s189 = scalar_select %p188, %s14, 1
      %s190 = smul.addr %s189, 8
      %s191 = scalar_lea.vmem %s1, %s190
      %p192 = scmp.lt.s32.totalorder %s14, 1
      %s193 = scalar_select %p192, %s14, 1
      %s194 = smul.addr %s193, 8
      %s195 = scalar_lea.vmem %s2, %s194
      %p196 = scmp.lt.s32.totalorder %s14, 1
      %s197 = scalar_select %p196, %s14, 1
      %s198 = smul.addr %s197, 8
      %s199 = scalar_lea.vmem %s3, %s198
      %v200 = vld [vmem:[%s187] sm:$0xff]
      %v201 = vld [vmem:[%s191] sm:$0xff]
      %v202 = vld [vmem:[%s195] sm:$0xff]
      %vm203 = vcmask 64512
      %v205 = vsel %vm203, %v200, 0
      %v208 = vsel %vm203, %v201, 0
      %210 = vmatprep.subr.mxu0 0.0
      %211 = vmatpush1.xpose.msra.mxu0 %v208
      %212 = vmatprep.subr.mxu0 0.0
      %213 = vmatpush1.xpose.msra.mxu0 0.0
      %214 = vmatprep.subr.mxu0 0.0
      %215 = vmatpush1.xpose.msra.mxu0 0.0
      %216 = vmatprep.subr.mxu0 0.0
      %217 = vmatpush1.xpose.msra.mxu0 0.0
      %218 = vmatprep.subr.mxu0 0.0
      %219 = vmatpush1.xpose.msra.mxu0 0.0
      %220 = vmatprep.subr.mxu0 0.0
      %221 = vmatpush1.xpose.msra.mxu0 0.0
      %222 = vmatprep.subr.mxu0 0.0
      %223 = vmatpush1.xpose.msra.mxu0 0.0
      %224 = vmatprep.subr.mxu0 0.0
      %225 = vmatpush1.xpose.msra.mxu0 0.0
      %226 = vmatprep.subr.mxu0 0.0
      %227 = vmatpush1.xpose.msra.mxu0 0.0
      %228 = vmatprep.subr.mxu0 0.0
      %229 = vmatpush1.xpose.msra.mxu0 0.0
      %230 = vmatprep.subr.mxu0 0.0
      %231 = vmatpush1.xpose.msra.mxu0 0.0
      %232 = vmatprep.subr.mxu0 0.0
      %233 = vmatpush1.xpose.msra.mxu0 0.0
      %234 = vmatprep.subr.mxu0 0.0
      %235 = vmatpush1.xpose.msra.mxu0 0.0
      %236 = vmatprep.subr.mxu0 0.0
      %237 = vmatpush1.xpose.msra.mxu0 0.0
      %238 = vmatprep.subr.mxu0 0.0
      %239 = vmatpush1.xpose.msra.mxu0 0.0
      %240 = vmatprep.subr.mxu0 0.0
      %241 = vmatpush1.xpose.msra.mxu0 0.0
      %242 = vmatprep.subr.mxu0 0.0
      %243 = vmatpush1.xpose.msra.mxu0 0.0
      %244 = vmatprep.subr.mxu0 0.0
      %245 = vmatpush1.xpose.msra.mxu0 0.0
      %246 = vmatprep.subr.mxu0 0.0
      %247 = vmatpush1.xpose.msra.mxu0 0.0
      %248 = vmatprep.subr.mxu0 0.0
      %249 = vmatpush1.xpose.msra.mxu0 0.0
      %250 = vmatprep.subr.mxu0 0.0
      %251 = vmatpush1.xpose.msra.mxu0 0.0
      %252 = vmatprep.subr.mxu0 0.0
      %253 = vmatpush1.xpose.msra.mxu0 0.0
      %254 = vmatprep.subr.mxu0 0.0
      %255 = vmatpush1.xpose.msra.mxu0 0.0
      %256 = vmatprep.subr.mxu0 0.0
      %257 = vmatpush1.xpose.msra.mxu0 0.0
      %258 = vmatprep.subr.mxu0 0.0
      %259 = vmatpush1.xpose.msra.mxu0 0.0
      %260 = vmatprep.subr.mxu0 0.0
      %261 = vmatpush1.xpose.msra.mxu0 0.0
      %262 = vmatprep.subr.mxu0 0.0
      %263 = vmatpush1.xpose.msra.mxu0 0.0
      %264 = vmatprep.subr.mxu0 0.0
      %265 = vmatpush1.xpose.msra.mxu0 0.0
      %266 = vmatprep.subr.mxu0 0.0
      %267 = vmatpush1.xpose.msra.mxu0 0.0
      %268 = vmatprep.subr.mxu0 0.0
      %269 = vmatpush1.xpose.msra.mxu0 0.0
      %270 = vmatprep.subr.mxu0 0.0
      %271 = vmatpush1.xpose.msra.mxu0 0.0
      %272 = vmatprep.subr.mxu0 0.0
      %273 = vmatpush1.xpose.msra.mxu0 0.0
      %274 = vmatprep.mubr.f32.mxu0 0.0
      %275 = vmatmul.mubr.f32.gmra.mrb[0].mxu0 %v205
      %v276 = vpop.f32.mrb[0].mxu0
      %v277 = vadd.f32 0.0, %v276
      %v278 = vpop.f32.mrb[0].mxu0
      %279 = vdwg.mxu0
      %v280 = vmul.f32 %v277, 0.35355338
      %v281 = vsel %vm203, %v280, -inf
      %282 = vmax.xlane.f32.xlu0 %v281
      %v283 = vpop.xlane.xlu0 %282
      %v284 = vsub.f32 %v280, %v283
      %v285 = vmul.f32 %v284, 1.442695
      %v286 = vpow.pop %v285
      %v287 = vsel %vm203, %v286, 0.0
      %288 = vadd.xlane.f32.xlu0 %v287
      %v289 = vpop.xlane.xlu0 %288
      %v290 = vrcp.pop %v289
      %v291 = vmul.f32 %v286, %v290
      %v293 = vsel %vm203, %v291, 0
      %295 = vmatprep.subr.mxu0 0.0
      %296 = vmatpush1.msra.mxu0 %v202
      %297 = vmatprep.subr.mxu0 0.0
      %298 = vmatpush1.msra.mxu0 0.0
      %299 = vmatprep.subr.mxu0 0.0
      %300 = vmatpush1.msra.mxu0 0.0
      %301 = vmatprep.subr.mxu0 0.0
      %302 = vmatpush1.msra.mxu0 0.0
      %303 = vmatprep.subr.mxu0 0.0
      %304 = vmatpush1.msra.mxu0 0.0
      %305 = vmatprep.subr.mxu0 0.0
      %306 = vmatpush1.msra.mxu0 0.0
      %307 = vmatprep.subr.mxu0 0.0
      %308 = vmatpush1.msra.mxu0 0.0
      %309 = vmatprep.subr.mxu0 0.0
      %310 = vmatpush1.msra.mxu0 0.0
      %311 = vmatprep.subr.mxu0 0.0
      %312 = vmatpush1.msra.mxu0 0.0
      %313 = vmatprep.subr.mxu0 0.0
      %314 = vmatpush1.msra.mxu0 0.0
      %315 = vmatprep.subr.mxu0 0.0
      %316 = vmatpush1.msra.mxu0 0.0
      %317 = vmatprep.subr.mxu0 0.0
      %318 = vmatpush1.msra.mxu0 0.0
      %319 = vmatprep.subr.mxu0 0.0
      %320 = vmatpush1.msra.mxu0 0.0
      %321 = vmatprep.subr.mxu0 0.0
      %322 = vmatpush1.msra.mxu0 0.0
      %323 = vmatprep.subr.mxu0 0.0
      %324 = vmatpush1.msra.mxu0 0.0
      %325 = vmatprep.subr.mxu0 0.0
      %326 = vmatpush1.msra.mxu0 0.0
      %327 = vmatprep.subr.mxu0 0.0
      %328 = vmatpush1.msra.mxu0 0.0
      %329 = vmatprep.subr.mxu0 0.0
      %330 = vmatpush1.msra.mxu0 0.0
      %331 = vmatprep.subr.mxu0 0.0
      %332 = vmatpush1.msra.mxu0 0.0
      %333 = vmatprep.subr.mxu0 0.0
      %334 = vmatpush1.msra.mxu0 0.0
      %335 = vmatprep.subr.mxu0 0.0
      %336 = vmatpush1.msra.mxu0 0.0
      %337 = vmatprep.subr.mxu0 0.0
      %338 = vmatpush1.msra.mxu0 0.0
      %339 = vmatprep.subr.mxu0 0.0
      %340 = vmatpush1.msra.mxu0 0.0
      %341 = vmatprep.subr.mxu0 0.0
      %342 = vmatpush1.msra.mxu0 0.0
      %343 = vmatprep.subr.mxu0 0.0
      %344 = vmatpush1.msra.mxu0 0.0
      %345 = vmatprep.subr.mxu0 0.0
      %346 = vmatpush1.msra.mxu0 0.0
      %347 = vmatprep.subr.mxu0 0.0
      %348 = vmatpush1.msra.mxu0 0.0
      %349 = vmatprep.subr.mxu0 0.0
      %350 = vmatpush1.msra.mxu0 0.0
      %351 = vmatprep.subr.mxu0 0.0
      %352 = vmatpush1.msra.mxu0 0.0
      %353 = vmatprep.subr.mxu0 0.0
      %354 = vmatpush1.msra.mxu0 0.0
      %355 = vmatprep.subr.mxu0 0.0
      %356 = vmatpush1.msra.mxu0 0.0
      %357 = vmatprep.subr.mxu0 0.0
      %358 = vmatpush1.msra.mxu0 0.0
      %359 = vmatprep.mubr.f32.mxu0 0.0
      %360 = vmatmul.mubr.f32.gmra.mrb[0].mxu0 %v293
      %v361 = vpop.f32.mrb[0].mxu0
      %v362 = vadd.f32 0.0, %v361
      %v363 = vpop.f32.mrb[0].mxu0
      %364 = vdwg.mxu0
      %365 = vrot.lane.b32.xlu0 %v200, 120
      %v366 = vpop.permute.xlu0 %365
      %367 = vrot.lane.b32.xlu0 %v201, 120
      %v368 = vpop.permute.xlu0 %367
      %v369 = vsel %vm203, %v366, 0
      %v371 = vsel %vm203, %v368, 0
      %373 = vmatprep.subr.mxu0 0.0
      %374 = vmatpush1.xpose.msra.mxu0 %v371
      %375 = vmatprep.subr.mxu0 0.0
      %376 = vmatpush1.xpose.msra.mxu0 0.0
      %377 = vmatprep.subr.mxu0 0.0
      %378 = vmatpush1.xpose.msra.mxu0 0.0
      %379 = vmatprep.subr.mxu0 0.0
      %380 = vmatpush1.xpose.msra.mxu0 0.0
      %381 = vmatprep.subr.mxu0 0.0
      %382 = vmatpush1.xpose.msra.mxu0 0.0
      %383 = vmatprep.subr.mxu0 0.0
      %384 = vmatpush1.xpose.msra.mxu0 0.0
      %385 = vmatprep.subr.mxu0 0.0
      %386 = vmatpush1.xpose.msra.mxu0 0.0
      %387 = vmatprep.subr.mxu0 0.0
      %388 = vmatpush1.xpose.msra.mxu0 0.0
      %389 = vmatprep.subr.mxu0 0.0
      %390 = vmatpush1.xpose.msra.mxu0 0.0
      %391 = vmatprep.subr.mxu0 0.0
      %392 = vmatpush1.xpose.msra.mxu0 0.0
      %393 = vmatprep.subr.mxu0 0.0
      %394 = vmatpush1.xpose.msra.mxu0 0.0
      %395 = vmatprep.subr.mxu0 0.0
      %396 = vmatpush1.xpose.msra.mxu0 0.0
      %397 = vmatprep.subr.mxu0 0.0
      %398 = vmatpush1.xpose.msra.mxu0 0.0
      %399 = vmatprep.subr.mxu0 0.0
      %400 = vmatpush1.xpose.msra.mxu0 0.0
      %401 = vmatprep.subr.mxu0 0.0
      %402 = vmatpush1.xpose.msra.mxu0 0.0
      %403 = vmatprep.subr.mxu0 0.0
      %404 = vmatpush1.xpose.msra.mxu0 0.0
      %405 = vmatprep.subr.mxu0 0.0
      %406 = vmatpush1.xpose.msra.mxu0 0.0
      %407 = vmatprep.subr.mxu0 0.0
      %408 = vmatpush1.xpose.msra.mxu0 0.0
      %409 = vmatprep.subr.mxu0 0.0
      %410 = vmatpush1.xpose.msra.mxu0 0.0
      %411 = vmatprep.subr.mxu0 0.0
      %412 = vmatpush1.xpose.msra.mxu0 0.0
      %413 = vmatprep.subr.mxu0 0.0
      %414 = vmatpush1.xpose.msra.mxu0 0.0
      %415 = vmatprep.subr.mxu0 0.0
      %416 = vmatpush1.xpose.msra.mxu0 0.0
      %417 = vmatprep.subr.mxu0 0.0
      %418 = vmatpush1.xpose.msra.mxu0 0.0
      %419 = vmatprep.subr.mxu0 0.0
      %420 = vmatpush1.xpose.msra.mxu0 0.0
      %421 = vmatprep.subr.mxu0 0.0
      %422 = vmatpush1.xpose.msra.mxu0 0.0
      %423 = vmatprep.subr.mxu0 0.0
      %424 = vmatpush1.xpose.msra.mxu0 0.0
      %425 = vmatprep.subr.mxu0 0.0
      %426 = vmatpush1.xpose.msra.mxu0 0.0
      %427 = vmatprep.subr.mxu0 0.0
      %428 = vmatpush1.xpose.msra.mxu0 0.0
      %429 = vmatprep.subr.mxu0 0.0
      %430 = vmatpush1.xpose.msra.mxu0 0.0
      %431 = vmatprep.subr.mxu0 0.0
      %432 = vmatpush1.xpose.msra.mxu0 0.0
      %433 = vmatprep.subr.mxu0 0.0
      %434 = vmatpush1.xpose.msra.mxu0 0.0
      %435 = vmatprep.subr.mxu0 0.0
      %436 = vmatpush1.xpose.msra.mxu0 0.0
      %437 = vmatprep.mubr.f32.mxu0 0.0
      %438 = vmatmul.mubr.f32.gmra.mrb[0].mxu0 %v369
      %v439 = vpop.f32.mrb[0].mxu0
      %v440 = vadd.f32 0.0, %v439
      %v441 = vpop.f32.mrb[0].mxu0
      %442 = vdwg.mxu0
      %v443 = vmul.f32 %v440, 0.35355338
      %v444 = vsel %vm203, %v443, -inf
      %445 = vmax.xlane.f32.xlu0 %v444
      %v446 = vpop.xlane.xlu0 %445
      %v447 = vsub.f32 %v443, %v446
      %v448 = vmul.f32 %v447, 1.442695
      %v449 = vpow.pop %v448
      %v450 = vsel %vm203, %v449, 0.0
      %451 = vadd.xlane.f32.xlu0 %v450
      %v452 = vpop.xlane.xlu0 %451
      %v453 = vrcp.pop %v452
      %v454 = vmul.f32 %v449, %v453
      %456 = vrot.lane.b32.xlu0 %v202, 120
      %v457 = vpop.permute.xlu0 %456
      %v460 = vsel %vm203, %v454, 0
      %462 = vmatprep.subr.mxu0 0.0
      %463 = vmatpush1.msra.mxu0 %v457
      %464 = vmatprep.subr.mxu0 0.0
      %465 = vmatpush1.msra.mxu0 0.0
      %466 = vmatprep.subr.mxu0 0.0
      %467 = vmatpush1.msra.mxu0 0.0
      %468 = vmatprep.subr.mxu0 0.0
      %469 = vmatpush1.msra.mxu0 0.0
      %470 = vmatprep.subr.mxu0 0.0
      %471 = vmatpush1.msra.mxu0 0.0
      %472 = vmatprep.subr.mxu0 0.0
      %473 = vmatpush1.msra.mxu0 0.0
      %474 = vmatprep.subr.mxu0 0.0
      %475 = vmatpush1.msra.mxu0 0.0
      %476 = vmatprep.subr.mxu0 0.0
      %477 = vmatpush1.msra.mxu0 0.0
      %478 = vmatprep.subr.mxu0 0.0
      %479 = vmatpush1.msra.mxu0 0.0
      %480 = vmatprep.subr.mxu0 0.0
      %481 = vmatpush1.msra.mxu0 0.0
      %482 = vmatprep.subr.mxu0 0.0
      %483 = vmatpush1.msra.mxu0 0.0
      %484 = vmatprep.subr.mxu0 0.0
      %485 = vmatpush1.msra.mxu0 0.0
      %486 = vmatprep.subr.mxu0 0.0
      %487 = vmatpush1.msra.mxu0 0.0
      %488 = vmatprep.subr.mxu0 0.0
      %489 = vmatpush1.msra.mxu0 0.0
      %490 = vmatprep.subr.mxu0 0.0
      %491 = vmatpush1.msra.mxu0 0.0
      %492 = vmatprep.subr.mxu0 0.0
      %493 = vmatpush1.msra.mxu0 0.0
      %494 = vmatprep.subr.mxu0 0.0
      %495 = vmatpush1.msra.mxu0 0.0
      %496 = vmatprep.subr.mxu0 0.0
      %497 = vmatpush1.msra.mxu0 0.0
      %498 = vmatprep.subr.mxu0 0.0
      %499 = vmatpush1.msra.mxu0 0.0
      %500 = vmatprep.subr.mxu0 0.0
      %501 = vmatpush1.msra.mxu0 0.0
      %502 = vmatprep.subr.mxu0 0.0
      %503 = vmatpush1.msra.mxu0 0.0
      %504 = vmatprep.subr.mxu0 0.0
      %505 = vmatpush1.msra.mxu0 0.0
      %506 = vmatprep.subr.mxu0 0.0
      %507 = vmatpush1.msra.mxu0 0.0
      %508 = vmatprep.subr.mxu0 0.0
      %509 = vmatpush1.msra.mxu0 0.0
      %510 = vmatprep.subr.mxu0 0.0
      %511 = vmatpush1.msra.mxu0 0.0
      %512 = vmatprep.subr.mxu0 0.0
      %513 = vmatpush1.msra.mxu0 0.0
      %514 = vmatprep.subr.mxu0 0.0
      %515 = vmatpush1.msra.mxu0 0.0
      %516 = vmatprep.subr.mxu0 0.0
      %517 = vmatpush1.msra.mxu0 0.0
      %518 = vmatprep.subr.mxu0 0.0
      %519 = vmatpush1.msra.mxu0 0.0
      %520 = vmatprep.subr.mxu0 0.0
      %521 = vmatpush1.msra.mxu0 0.0
      %522 = vmatprep.subr.mxu0 0.0
      %523 = vmatpush1.msra.mxu0 0.0
      %524 = vmatprep.subr.mxu0 0.0
      %525 = vmatpush1.msra.mxu0 0.0
      %526 = vmatprep.mubr.f32.mxu0 0.0
      %527 = vmatmul.mubr.f32.gmra.mrb[0].mxu0 %v460
      %v528 = vpop.f32.mrb[0].mxu0
      %v529 = vadd.f32 0.0, %v528
      %v530 = vpop.f32.mrb[0].mxu0
      %531 = vdwg.mxu0
      %532 = vrot.lane.b32.xlu0 %v200, 112
      %v533 = vpop.permute.xlu0 %532
      %534 = vrot.lane.b32.xlu0 %v201, 112
      %v535 = vpop.permute.xlu0 %534
      %v536 = vsel %vm203, %v533, 0
      %v538 = vsel %vm203, %v535, 0
      %540 = vmatprep.subr.mxu0 0.0
      %541 = vmatpush1.xpose.msra.mxu0 %v538
      %542 = vmatprep.subr.mxu0 0.0
      %543 = vmatpush1.xpose.msra.mxu0 0.0
      %544 = vmatprep.subr.mxu0 0.0
      %545 = vmatpush1.xpose.msra.mxu0 0.0
      %546 = vmatprep.subr.mxu0 0.0
      %547 = vmatpush1.xpose.msra.mxu0 0.0
      %548 = vmatprep.subr.mxu0 0.0
      %549 = vmatpush1.xpose.msra.mxu0 0.0
      %550 = vmatprep.subr.mxu0 0.0
      %551 = vmatpush1.xpose.msra.mxu0 0.0
      %552 = vmatprep.subr.mxu0 0.0
      %553 = vmatpush1.xpose.msra.mxu0 0.0
      %554 = vmatprep.subr.mxu0 0.0
      %555 = vmatpush1.xpose.msra.mxu0 0.0
      %556 = vmatprep.subr.mxu0 0.0
      %557 = vmatpush1.xpose.msra.mxu0 0.0
      %558 = vmatprep.subr.mxu0 0.0
      %559 = vmatpush1.xpose.msra.mxu0 0.0
      %560 = vmatprep.subr.mxu0 0.0
      %561 = vmatpush1.xpose.msra.mxu0 0.0
      %562 = vmatprep.subr.mxu0 0.0
      %563 = vmatpush1.xpose.msra.mxu0 0.0
      %564 = vmatprep.subr.mxu0 0.0
      %565 = vmatpush1.xpose.msra.mxu0 0.0
      %566 = vmatprep.subr.mxu0 0.0
      %567 = vmatpush1.xpose.msra.mxu0 0.0
      %568 = vmatprep.subr.mxu0 0.0
      %569 = vmatpush1.xpose.msra.mxu0 0.0
      %570 = vmatprep.subr.mxu0 0.0
      %571 = vmatpush1.xpose.msra.mxu0 0.0
      %572 = vmatprep.subr.mxu0 0.0
      %573 = vmatpush1.xpose.msra.mxu0 0.0
      %574 = vmatprep.subr.mxu0 0.0
      %575 = vmatpush1.xpose.msra.mxu0 0.0
      %576 = vmatprep.subr.mxu0 0.0
      %577 = vmatpush1.xpose.msra.mxu0 0.0
      %578 = vmatprep.subr.mxu0 0.0
      %579 = vmatpush1.xpose.msra.mxu0 0.0
      %580 = vmatprep.subr.mxu0 0.0
      %581 = vmatpush1.xpose.msra.mxu0 0.0
      %582 = vmatprep.subr.mxu0 0.0
      %583 = vmatpush1.xpose.msra.mxu0 0.0
      %584 = vmatprep.subr.mxu0 0.0
      %585 = vmatpush1.xpose.msra.mxu0 0.0
      %586 = vmatprep.subr.mxu0 0.0
      %587 = vmatpush1.xpose.msra.mxu0 0.0
      %588 = vmatprep.subr.mxu0 0.0
      %589 = vmatpush1.xpose.msra.mxu0 0.0
      %590 = vmatprep.subr.mxu0 0.0
      %591 = vmatpush1.xpose.msra.mxu0 0.0
      %592 = vmatprep.subr.mxu0 0.0
      %593 = vmatpush1.xpose.msra.mxu0 0.0
      %594 = vmatprep.subr.mxu0 0.0
      %595 = vmatpush1.xpose.msra.mxu0 0.0
      %596 = vmatprep.subr.mxu0 0.0
      %597 = vmatpush1.xpose.msra.mxu0 0.0
      %598 = vmatprep.subr.mxu0 0.0
      %599 = vmatpush1.xpose.msra.mxu0 0.0
      %600 = vmatprep.subr.mxu0 0.0
      %601 = vmatpush1.xpose.msra.mxu0 0.0
      %602 = vmatprep.subr.mxu0 0.0
      %603 = vmatpush1.xpose.msra.mxu0 0.0
      %604 = vmatprep.mubr.f32.mxu0 0.0
      %605 = vmatmul.mubr.f32.gmra.mrb[0].mxu0 %v536
      %v606 = vpop.f32.mrb[0].mxu0
      %v607 = vadd.f32 0.0, %v606
      %v608 = vpop.f32.mrb[0].mxu0
      %609 = vdwg.mxu0
      %v610 = vmul.f32 %v607, 0.35355338
      %v611 = vsel %vm203, %v610, -inf
      %612 = vmax.xlane.f32.xlu0 %v611
      %v613 = vpop.xlane.xlu0 %612
      %v614 = vsub.f32 %v610, %v613
      %v615 = vmul.f32 %v614, 1.442695
      %v616 = vpow.pop %v615
      %v617 = vsel %vm203, %v616, 0.0
      %618 = vadd.xlane.f32.xlu0 %v617
      %v619 = vpop.xlane.xlu0 %618
      %v620 = vrcp.pop %v619
      %v621 = vmul.f32 %v616, %v620
      %622 = vrot.lane.b32.xlu0 %v202, 112
      %v623 = vpop.permute.xlu0 %622
      %v626 = vsel %vm203, %v621, 0
      %628 = vmatprep.subr.mxu0 0.0
      %629 = vmatpush1.msra.mxu0 %v623
      %630 = vmatprep.subr.mxu0 0.0
      %631 = vmatpush1.msra.mxu0 0.0
      %632 = vmatprep.subr.mxu0 0.0
      %633 = vmatpush1.msra.mxu0 0.0
      %634 = vmatprep.subr.mxu0 0.0
      %635 = vmatpush1.msra.mxu0 0.0
      %636 = vmatprep.subr.mxu0 0.0
      %637 = vmatpush1.msra.mxu0 0.0
      %638 = vmatprep.subr.mxu0 0.0
      %639 = vmatpush1.msra.mxu0 0.0
      %640 = vmatprep.subr.mxu0 0.0
      %641 = vmatpush1.msra.mxu0 0.0
      %642 = vmatprep.subr.mxu0 0.0
      %643 = vmatpush1.msra.mxu0 0.0
      %644 = vmatprep.subr.mxu0 0.0
      %645 = vmatpush1.msra.mxu0 0.0
      %646 = vmatprep.subr.mxu0 0.0
      %647 = vmatpush1.msra.mxu0 0.0
      %648 = vmatprep.subr.mxu0 0.0
      %649 = vmatpush1.msra.mxu0 0.0
      %650 = vmatprep.subr.mxu0 0.0
      %651 = vmatpush1.msra.mxu0 0.0
      %652 = vmatprep.subr.mxu0 0.0
      %653 = vmatpush1.msra.mxu0 0.0
      %654 = vmatprep.subr.mxu0 0.0
      %655 = vmatpush1.msra.mxu0 0.0
      %656 = vmatprep.subr.mxu0 0.0
      %657 = vmatpush1.msra.mxu0 0.0
      %658 = vmatprep.subr.mxu0 0.0
      %659 = vmatpush1.msra.mxu0 0.0
      %660 = vmatprep.subr.mxu0 0.0
      %661 = vmatpush1.msra.mxu0 0.0
      %662 = vmatprep.subr.mxu0 0.0
      %663 = vmatpush1.msra.mxu0 0.0
      %664 = vmatprep.subr.mxu0 0.0
      %665 = vmatpush1.msra.mxu0 0.0
      %666 = vmatprep.subr.mxu0 0.0
      %667 = vmatpush1.msra.mxu0 0.0
      %668 = vmatprep.subr.mxu0 0.0
      %669 = vmatpush1.msra.mxu0 0.0
      %670 = vmatprep.subr.mxu0 0.0
      %671 = vmatpush1.msra.mxu0 0.0
      %672 = vmatprep.subr.mxu0 0.0
      %673 = vmatpush1.msra.mxu0 0.0
      %674 = vmatprep.subr.mxu0 0.0
      %675 = vmatpush1.msra.mxu0 0.0
      %676 = vmatprep.subr.mxu0 0.0
      %677 = vmatpush1.msra.mxu0 0.0
      %678 = vmatprep.subr.mxu0 0.0
      %679 = vmatpush1.msra.mxu0 0.0
      %680 = vmatprep.subr.mxu0 0.0
      %681 = vmatpush1.msra.mxu0 0.0
      %682 = vmatprep.subr.mxu0 0.0
      %683 = vmatpush1.msra.mxu0 0.0
      %684 = vmatprep.subr.mxu0 0.0
      %685 = vmatpush1.msra.mxu0 0.0
      %686 = vmatprep.subr.mxu0 0.0
      %687 = vmatpush1.msra.mxu0 0.0
      %688 = vmatprep.subr.mxu0 0.0
      %689 = vmatpush1.msra.mxu0 0.0
      %690 = vmatprep.subr.mxu0 0.0
      %691 = vmatpush1.msra.mxu0 0.0
      %692 = vmatprep.mubr.f32.mxu0 0.0
      %693 = vmatmul.mubr.f32.gmra.mrb[0].mxu0 %v626
      %v694 = vpop.f32.mrb[0].mxu0
      %v695 = vadd.f32 0.0, %v694
      %v696 = vpop.f32.mrb[0].mxu0
      %697 = vdwg.mxu0
      %698 = vrot.lane.b32.xlu0 %v200, 104
      %v699 = vpop.permute.xlu0 %698
      %700 = vrot.lane.b32.xlu0 %v201, 104
      %v701 = vpop.permute.xlu0 %700
      %v702 = vsel %vm203, %v699, 0
      %v704 = vsel %vm203, %v701, 0
      %706 = vmatprep.subr.mxu0 0.0
      %707 = vmatpush1.xpose.msra.mxu0 %v704
      %708 = vmatprep.subr.mxu0 0.0
      %709 = vmatpush1.xpose.msra.mxu0 0.0
      %710 = vmatprep.subr.mxu0 0.0
      %711 = vmatpush1.xpose.msra.mxu0 0.0
      %712 = vmatprep.subr.mxu0 0.0
      %713 = vmatpush1.xpose.msra.mxu0 0.0
      %714 = vmatprep.subr.mxu0 0.0
      %715 = vmatpush1.xpose.msra.mxu0 0.0
      %716 = vmatprep.subr.mxu0 0.0
      %717 = vmatpush1.xpose.msra.mxu0 0.0
      %718 = vmatprep.subr.mxu0 0.0
      %719 = vmatpush1.xpose.msra.mxu0 0.0
      %720 = vmatprep.subr.mxu0 0.0
      %721 = vmatpush1.xpose.msra.mxu0 0.0
      %722 = vmatprep.subr.mxu0 0.0
      %723 = vmatpush1.xpose.msra.mxu0 0.0
      %724 = vmatprep.subr.mxu0 0.0
      %725 = vmatpush1.xpose.msra.mxu0 0.0
      %726 = vmatprep.subr.mxu0 0.0
      %727 = vmatpush1.xpose.msra.mxu0 0.0
      %728 = vmatprep.subr.mxu0 0.0
      %729 = vmatpush1.xpose.msra.mxu0 0.0
      %730 = vmatprep.subr.mxu0 0.0
      %731 = vmatpush1.xpose.msra.mxu0 0.0
      %732 = vmatprep.subr.mxu0 0.0
      %733 = vmatpush1.xpose.msra.mxu0 0.0
      %734 = vmatprep.subr.mxu0 0.0
      %735 = vmatpush1.xpose.msra.mxu0 0.0
      %736 = vmatprep.subr.mxu0 0.0
      %737 = vmatpush1.xpose.msra.mxu0 0.0
      %738 = vmatprep.subr.mxu0 0.0
      %739 = vmatpush1.xpose.msra.mxu0 0.0
      %740 = vmatprep.subr.mxu0 0.0
      %741 = vmatpush1.xpose.msra.mxu0 0.0
      %742 = vmatprep.subr.mxu0 0.0
      %743 = vmatpush1.xpose.msra.mxu0 0.0
      %744 = vmatprep.subr.mxu0 0.0
      %745 = vmatpush1.xpose.msra.mxu0 0.0
      %746 = vmatprep.subr.mxu0 0.0
      %747 = vmatpush1.xpose.msra.mxu0 0.0
      %748 = vmatprep.subr.mxu0 0.0
      %749 = vmatpush1.xpose.msra.mxu0 0.0
      %750 = vmatprep.subr.mxu0 0.0
      %751 = vmatpush1.xpose.msra.mxu0 0.0
      %752 = vmatprep.subr.mxu0 0.0
      %753 = vmatpush1.xpose.msra.mxu0 0.0
      %754 = vmatprep.subr.mxu0 0.0
      %755 = vmatpush1.xpose.msra.mxu0 0.0
      %756 = vmatprep.subr.mxu0 0.0
      %757 = vmatpush1.xpose.msra.mxu0 0.0
      %758 = vmatprep.subr.mxu0 0.0
      %759 = vmatpush1.xpose.msra.mxu0 0.0
      %760 = vmatprep.subr.mxu0 0.0
      %761 = vmatpush1.xpose.msra.mxu0 0.0
      %762 = vmatprep.subr.mxu0 0.0
      %763 = vmatpush1.xpose.msra.mxu0 0.0
      %764 = vmatprep.subr.mxu0 0.0
      %765 = vmatpush1.xpose.msra.mxu0 0.0
      %766 = vmatprep.subr.mxu0 0.0
      %767 = vmatpush1.xpose.msra.mxu0 0.0
      %768 = vmatprep.subr.mxu0 0.0
      %769 = vmatpush1.xpose.msra.mxu0 0.0
      %770 = vmatprep.mubr.f32.mxu0 0.0
      %771 = vmatmul.mubr.f32.gmra.mrb[0].mxu0 %v702
      %v772 = vpop.f32.mrb[0].mxu0
      %v773 = vadd.f32 0.0, %v772
      %v774 = vpop.f32.mrb[0].mxu0
      %775 = vdwg.mxu0
      %v776 = vmul.f32 %v773, 0.35355338
      %v777 = vsel %vm203, %v776, -inf
      %778 = vmax.xlane.f32.xlu0 %v777
      %v779 = vpop.xlane.xlu0 %778
      %v780 = vsub.f32 %v776, %v779
      %v781 = vmul.f32 %v780, 1.442695
      %v782 = vpow.pop %v781
      %v783 = vsel %vm203, %v782, 0.0
      %784 = vadd.xlane.f32.xlu0 %v783
      %v785 = vpop.xlane.xlu0 %784
      %v786 = vrcp.pop %v785
      %v787 = vmul.f32 %v782, %v786
      %788 = vrot.lane.b32.xlu0 %v202, 104
      %v789 = vpop.permute.xlu0 %788
      %v792 = vsel %vm203, %v787, 0
      %794 = vmatprep.subr.mxu0 0.0
      %795 = vmatpush1.msra.mxu0 %v789
      %796 = vmatprep.subr.mxu0 0.0
      %797 = vmatpush1.msra.mxu0 0.0
      %798 = vmatprep.subr.mxu0 0.0
      %799 = vmatpush1.msra.mxu0 0.0
      %800 = vmatprep.subr.mxu0 0.0
      %801 = vmatpush1.msra.mxu0 0.0
      %802 = vmatprep.subr.mxu0 0.0
      %803 = vmatpush1.msra.mxu0 0.0
      %804 = vmatprep.subr.mxu0 0.0
      %805 = vmatpush1.msra.mxu0 0.0
      %806 = vmatprep.subr.mxu0 0.0
      %807 = vmatpush1.msra.mxu0 0.0
      %808 = vmatprep.subr.mxu0 0.0
      %809 = vmatpush1.msra.mxu0 0.0
      %810 = vmatprep.subr.mxu0 0.0
      %811 = vmatpush1.msra.mxu0 0.0
      %812 = vmatprep.subr.mxu0 0.0
      %813 = vmatpush1.msra.mxu0 0.0
      %814 = vmatprep.subr.mxu0 0.0
      %815 = vmatpush1.msra.mxu0 0.0
      %816 = vmatprep.subr.mxu0 0.0
      %817 = vmatpush1.msra.mxu0 0.0
      %818 = vmatprep.subr.mxu0 0.0
      %819 = vmatpush1.msra.mxu0 0.0
      %820 = vmatprep.subr.mxu0 0.0
      %821 = vmatpush1.msra.mxu0 0.0
      %822 = vmatprep.subr.mxu0 0.0
      %823 = vmatpush1.msra.mxu0 0.0
      %824 = vmatprep.subr.mxu0 0.0
      %825 = vmatpush1.msra.mxu0 0.0
      %826 = vmatprep.subr.mxu0 0.0
      %827 = vmatpush1.msra.mxu0 0.0
      %828 = vmatprep.subr.mxu0 0.0
      %829 = vmatpush1.msra.mxu0 0.0
      %830 = vmatprep.subr.mxu0 0.0
      %831 = vmatpush1.msra.mxu0 0.0
      %832 = vmatprep.subr.mxu0 0.0
      %833 = vmatpush1.msra.mxu0 0.0
      %834 = vmatprep.subr.mxu0 0.0
      %835 = vmatpush1.msra.mxu0 0.0
      %836 = vmatprep.subr.mxu0 0.0
      %837 = vmatpush1.msra.mxu0 0.0
      %838 = vmatprep.subr.mxu0 0.0
      %839 = vmatpush1.msra.mxu0 0.0
      %840 = vmatprep.subr.mxu0 0.0
      %841 = vmatpush1.msra.mxu0 0.0
      %842 = vmatprep.subr.mxu0 0.0
      %843 = vmatpush1.msra.mxu0 0.0
      %844 = vmatprep.subr.mxu0 0.0
      %845 = vmatpush1.msra.mxu0 0.0
      %846 = vmatprep.subr.mxu0 0.0
      %847 = vmatpush1.msra.mxu0 0.0
      %848 = vmatprep.subr.mxu0 0.0
      %849 = vmatpush1.msra.mxu0 0.0
      %850 = vmatprep.subr.mxu0 0.0
      %851 = vmatpush1.msra.mxu0 0.0
      %852 = vmatprep.subr.mxu0 0.0
      %853 = vmatpush1.msra.mxu0 0.0
      %854 = vmatprep.subr.mxu0 0.0
      %855 = vmatpush1.msra.mxu0 0.0
      %856 = vmatprep.subr.mxu0 0.0
      %857 = vmatpush1.msra.mxu0 0.0
      %858 = vmatprep.mubr.f32.mxu0 0.0
      %859 = vmatmul.mubr.f32.gmra.mrb[0].mxu0 %v792
      %v860 = vpop.f32.mrb[0].mxu0
      %v861 = vadd.f32 0.0, %v860
      %v862 = vpop.f32.mrb[0].mxu0
      %863 = vdwg.mxu0
      %865 = vrot.lane.b32.xlu0 %v529, 8
      %v866 = vpop.permute.xlu0 %865
      %869 = vrot.lane.b32.xlu0 %v695, 16
      %v870 = vpop.permute.xlu0 %869
      %873 = vrot.lane.b32.xlu0 %v861, 24
      %v874 = vpop.permute.xlu0 %873
      %v876 = vsel %vm203, %v362, %v866
      %vm877 = vcmask 130048
      %v878 = vsel %vm877, %v876, %v870
      %vm879 = vcmask 195584
      %v880 = vsel %vm879, %v878, %v874
      %vm881 = vcmask 261120
      %882 = vst.msk [vmem:[%s199] sm:$0xff] %vm881, %v880
      %p883 = scmp.lt.s32.totalorder %s14, 1
      %s884 = scalar_select %p883, %s14, 1
      %s885 = smul.addr %s884, 8
      %s886 = scalar_lea.vmem %s3, %s885
      // Predicated region
      $region33: #{decoder_forward.25} parent=31 // pred_check
        %p887 = pneg %p110
      $region34: #{decoder_forward.25} parent=31 // pred_check_branch
        %889 = sbr.rel (%p887) target = $region36
      $region35: #{decoder_forward.25} parent=31 // pred_region
        _
      $region36: #{decoder_forward.25} parent=31 // pred_fallthru
        _
    $region32: #{decoder_forward.25} parent=5 // pred_fallthru
      _
    %p890 = scmp.le.s32.totalorder 2, %s9
    // Predicated region
    $region37: #{decoder_forward.25} parent=5 // pred_check
      %p891 = pneg %p890
    $region38: #{decoder_forward.25} parent=5 // pred_check_branch
      %893 = sbr.rel (%p891) target = $region40
    $region39: #{decoder_forward.25} parent=5 // pred_region
      %s894 = ssub.s32 %s9, 2
      // Predicated region
      $region41: #{decoder_forward.25} parent=39 // pred_check
        %p895 = pneg %p116
      $region42: #{decoder_forward.25} parent=39 // pred_check_branch
        %897 = sbr.rel (%p895) target = $region44
      $region43: #{decoder_forward.25} parent=39 // pred_region
        %p898 = scmp.lt.s32.totalorder %s15, 1
        %s899 = scalar_select %p898, %s15, 1
        %s900 = smul.addr %s899, 8
        %s901 = scalar_lea.vmem %s3, %s900
      $region44: #{decoder_forward.25} parent=39 // pred_fallthru
        _
    $region40: #{decoder_forward.25} parent=5 // pred_fallthru
      _
  $region6: #{decoder_forward.25} parent=0 // loop_footer
    %s13 = sadd.s32 1, %s9
  $region7: #{decoder_forward.25} parent=0 // loop_footer_branch
    %8 = sbr.rel target = $region3
  $region8: #{decoder_forward.25} parent=0 // loop_exit
    _

// kernel: decoder_forward.27
$region0: #{decoder_forward.27}
  #allocation0 [shape = 'u32[]', space=smem, size = 0x4, offset = 0x4, fixed_abs, tag = 'smem constant byte address 0x4 - core index']
  #allocation1 [shape = 'u32[144,128]{1,0:T(1,128)}', space=vmem, size = 0x12000, scoped, tag = 'internal scratch']
  %s0 = inlined_call_operand.vmem [shape: f32[16,32], index: 0, kind: input, shape index: {}]
  %s1 = inlined_call_operand.vmem [shape: f32[16,32], index: 1, kind: input, shape index: {}]
  %s2 = inlined_call_operand.vmem [shape: f32[1,32], index: 2, kind: input, shape index: {}]
  %s3 = inlined_call_operand.vmem [shape: f32[1,32], index: 3, kind: input, shape index: {}]
  %s4 = inlined_call_operand.vmem [shape: f32[16,32], index: 4, kind: output, shape index: {}]
  %s5 = sld [smem:[#allocation0]]
  $region26: #{decoder_forward.27} parent=0
    _
  %s7 = ssub.s32 1, %s5
  %s8 = scalar_select 0, %s7, %s5
  // Predicated region
  $region2: #{decoder_forward.27} parent=0 // pred_check
    _
  $region3: #{decoder_forward.27} parent=0 // pred_check_branch
    %10 = sbr.rel (0) target = $region5
  $region4: #{decoder_forward.27} parent=0 // pred_region
    _
  $region5: #{decoder_forward.27} parent=0 // pred_fallthru
    _
  // Predicated region
  $region6: #{decoder_forward.27} parent=0 // pred_check
    _
  $region7: #{decoder_forward.27} parent=0 // pred_check_branch
    %12 = sbr.rel (0) target = $region9
  $region8: #{decoder_forward.27} parent=0 // pred_region
    _
  $region9: #{decoder_forward.27} parent=0 // pred_fallthru
    _
  // Predicated region
  $region10: #{decoder_forward.27} parent=0 // pred_check
    _
  $region11: #{decoder_forward.27} parent=0 // pred_check_branch
    %14 = sbr.rel (0) target = $region13
  $region12: #{decoder_forward.27} parent=0 // pred_region
    _
  $region13: #{decoder_forward.27} parent=0 // pred_fallthru
    _
  // Predicated region
  $region14: #{decoder_forward.27} parent=0 // pred_check
    _
  $region15: #{decoder_forward.27} parent=0 // pred_check_branch
    %16 = sbr.rel (0) target = $region17
  $region16: #{decoder_forward.27} parent=0 // pred_region
    _
  $region17: #{decoder_forward.27} parent=0 // pred_fallthru
    _
  %v17 = vld [vmem:[%s0] sm:$0xff]
  %v18 = vld [vmem:[%s0 + $0x8] sm:$0xff]
  %v19 = vld [vmem:[%s1] sm:$0xff]
  %v20 = vld [vmem:[%s1 + $0x8] sm:$0xff]
  %v21 = vadd.f32 %v17, %v19
  %v22 = vadd.f32 %v18, %v20
  %vm23 = vcmask 261120
  %v24 = vsel %vm23, %v21, 0.0
  %25 = vadd.xlane.f32.xlu0 %v24
  %v26 = vpop.xlane.xlu0 %25
  %v27 = vsel %vm23, %v22, 0.0
  %28 = vadd.xlane.f32.xlu0 %v27
  %v29 = vpop.xlane.xlu0 %28
  %v30 = vrcp.pop 32.0
  %v31 = vmul.f32 %v26, %v30
  %v32 = vmul.f32 %v29, %v30
  %v33 = vsub.f32 %v21, %v31
  %v34 = vsub.f32 %v22, %v32
  %v35 = vmul.f32 %v33, %v33
  %v36 = vmul.f32 %v34, %v34
  %v37 = vsel %vm23, %v35, 0.0
  %38 = vadd.xlane.f32.xlu0 %v37
  %v39 = vpop.xlane.xlu0 %38
  %v40 = vsel %vm23, %v36, 0.0
  %41 = vadd.xlane.f32.xlu0 %v40
  %v42 = vpop.xlane.xlu0 %41
  %v43 = vmul.f32 %v39, %v30
  %v44 = vmul.f32 %v42, %v30
  %v45 = vadd.f32 %v43, 1e-05
  %v46 = vadd.f32 %v44, 1e-05
  %v47 = vrsqrt.pop %v45
  %v48 = vrsqrt.pop %v46
  %v49 = vmul.f32 %v33, %v47
  %v50 = vmul.f32 %v34, %v48
  %v51 = vld [vmem:[%s2] sm:$0x1]
  %v53 = vlaneseq
  %v54 = vshrl.u32 %v53, 7
  %v55 = vsub.s32 0, %v54
  %v56 = vrot.slane %v51, %v55
  %v58 = vmul.f32 %v49, %v56
  %v59 = vmul.f32 %v50, %v56
  %v60 = vld [vmem:[%s3] sm:$0x1]
  %v62 = vlaneseq
  %v63 = vshrl.u32 %v62, 7
  %v64 = vsub.s32 0, %v63
  %v65 = vrot.slane %v60, %v64
  %v67 = vadd.f32 %v58, %v65
  %v68 = vadd.f32 %v59, %v65
  %69 = vst.msk [vmem:[%s4] sm:$0xff] %vm23, %v67
  %70 = vst.msk [vmem:[%s4 + $0x8] sm:$0xff] %vm23, %v68
  // Predicated region
  $region18: #{decoder_forward.27} parent=0 // pred_check
    _
  $region19: #{decoder_forward.27} parent=0 // pred_check_branch
    %72 = sbr.rel (0) target = $region21
  $region20: #{decoder_forward.27} parent=0 // pred_region
    _
  $region21: #{decoder_forward.27} parent=0 // pred_fallthru
    _
  // Predicated region
  $region22: #{decoder_forward.27} parent=0 // pred_check
    _
  $region23: #{decoder_forward.27} parent=0 // pred_check_branch
    %74 = sbr.rel (0) target = $region25
  $region24: #{decoder_forward.27} parent=0 // pred_region
    _
  $region25: #{decoder_forward.27} parent=0 // pred_fallthru
    _

// kernel: decoder_forward.29
$region0: #{decoder_forward.29}
  #allocation0 [shape = 'u32[]', space=smem, size = 0x4, offset = 0x4, fixed_abs, tag = 'smem constant byte address 0x4 - core index']
  #allocation1 [shape = 'u32[144,128]{1,0:T(1,128)}', space=vmem, size = 0x12000, scoped, tag = 'internal scratch']
  #allocation2 [shape = 'f32[24,64]{1,0:T(8,128)}', space=vmem, size = 0x3000, scoped, tag = 'scratch operand']
  %s0 = inlined_call_operand.vmem [shape: f32[24,32], index: 0, kind: input, shape index: {}]
  %s1 = inlined_call_operand.vmem [shape: f32[32,64], index: 1, kind: input, shape index: {}]
  %s2 = inlined_call_operand.vmem [shape: f32[1,64], index: 2, kind: input, shape index: {}]
  %s3 = inlined_call_operand.vmem [shape: f32[24,64], index: 3, kind: output, shape index: {}]
  %s4 = sld [smem:[#allocation0]]
  $region30: #{decoder_forward.29} parent=0
    _
  %s6 = ssub.s32 1, %s4
  %s7 = scalar_select 0, %s6, %s4
  // Predicated region
  $region2: #{decoder_forward.29} parent=0 // pred_check
    _
  $region3: #{decoder_forward.29} parent=0 // pred_check_branch
    %9 = sbr.rel (0) target = $region5
  $region4: #{decoder_forward.29} parent=0 // pred_region
    _
  $region5: #{decoder_forward.29} parent=0 // pred_fallthru
    _
  // Predicated region
  $region6: #{decoder_forward.29} parent=0 // pred_check
    _
  $region7: #{decoder_forward.29} parent=0 // pred_check_branch
    %11 = sbr.rel (0) target = $region9
  $region8: #{decoder_forward.29} parent=0 // pred_region
    _
  $region9: #{decoder_forward.29} parent=0 // pred_fallthru
    _
  // Predicated region
  $region10: #{decoder_forward.29} parent=0 // pred_check
    _
  $region11: #{decoder_forward.29} parent=0 // pred_check_branch
    %13 = sbr.rel (0) target = $region13
  $region12: #{decoder_forward.29} parent=0 // pred_region
    _
  $region13: #{decoder_forward.29} parent=0 // pred_fallthru
    _
  %p15 = scmp.eq.s32.totalorder 0, 0
  // Predicated region
  $region14: #{decoder_forward.29} parent=0 // pred_check
    %p16 = pneg %p15
  $region15: #{decoder_forward.29} parent=0 // pred_check_branch
    %18 = sbr.rel (%p16) target = $region17
  $region16: #{decoder_forward.29} parent=0 // pred_region
    %vm19 = vcmask 523264
    %20 = vst.msk [vmem:[#allocation2] sm:$0xff] %vm19, 0.0
    %21 = vst.msk [vmem:[#allocation2 + $0x8] sm:$0xff] %vm19, 0.0
    %22 = vst.msk [vmem:[#allocation2 + $0x10] sm:$0xff] %vm19, 0.0
  $region17: #{decoder_forward.29} parent=0 // pred_fallthru
    _
  %v23 = vld [vmem:[#allocation2] sm:$0xff]
  %v24 = vld [vmem:[#allocation2 + $0x8] sm:$0xff]
  %v25 = vld [vmem:[#allocation2 + $0x10] sm:$0xff]
  %v26 = vld [vmem:[%s0] sm:$0xff]
  %v27 = vld [vmem:[%s0 + $0x8] sm:$0xff]
  %v28 = vld [vmem:[%s0 + $0x10] sm:$0xff]
  %v29 = vpack.c.bf16 %v27, %v26
  %v30 = vpack.c.bf16 %v28, %v28
  %v31 = vld [vmem:[%s1] sm:$0xff]
  %v32 = vld [vmem:[%s1 + $0x8] sm:$0xff]
  %v33 = vld [vmem:[%s1 + $0x10] sm:$0xff]
  %v34 = vld [vmem:[%s1 + $0x18] sm:$0xff]
  %v35 = vpack.c.bf16 %v32, %v31
  %v36 = vpack.c.bf16 %v34, %v33
  %vm37 = vcmask 261120
  %v39 = vsel %vm37, %v29, 0
  %v42 = vsel %vm37, %v30, 0
  %44 = vmatprep.subr.bf16.mxu0 0
  %45 = vmatpush1.bf16.msra.mxu0 %v35
  %46 = vmatprep.subr.bf16.mxu0 0
  %47 = vmatpush1.bf16.msra.mxu0 %v36
  %48 = vmatprep.subr.bf16.mxu0 0
  %49 = vmatpush1.bf16.msra.mxu0 0
  %50 = vmatprep.subr.bf16.mxu0 0
  %51 = vmatpush1.bf16.msra.mxu0 0
  %52 = vmatprep.subr.bf16.mxu0 0
  %53 = vmatpush1.bf16.msra.mxu0 0
  %54 = vmatprep.subr.bf16.mxu0 0
  %55 = vmatpush1.bf16.msra.mxu0 0
  %56 = vmatprep.subr.bf16.mxu0 0
  %57 = vmatpush1.bf16.msra.mxu0 0
  %58 = vmatprep.subr.bf16.mxu0 0
  %59 = vmatpush1.bf16.msra.mxu0 0
  %60 = vmatprep.subr.bf16.mxu0 0
  %61 = vmatpush1.bf16.msra.mxu0 0
  %62 = vmatprep.subr.bf16.mxu0 0
  %63 = vmatpush1.bf16.msra.mxu0 0
  %64 = vmatprep.subr.bf16.mxu0 0
  %65 = vmatpush1.bf16.msra.mxu0 0
  %66 = vmatprep.subr.bf16.mxu0 0
  %67 = vmatpush1.bf16.msra.mxu0 0
  %68 = vmatprep.subr.bf16.mxu0 0
  %69 = vmatpush1.bf16.msra.mxu0 0
  %70 = vmatprep.subr.bf16.mxu0 0
  %71 = vmatpush1.bf16.msra.mxu0 0
  %72 = vmatprep.subr.bf16.mxu0 0
  %73 = vmatpush1.bf16.msra.mxu0 0
  %74 = vmatprep.subr.bf16.mxu0 0
  %75 = vmatpush1.bf16.msra.mxu0 0
  %76 = vmatprep.mubr.bf16.mxu0 0
  %77 = vmatmul.mubr.bf16.gmra.mrb[0].mxu0 %v39
  %v78 = vpop.f32.mrb[0].mxu0
  %v79 = vadd.f32 0.0, %v78
  %v80 = vpop.f32.mrb[0].mxu0
  %v81 = vpop.f32.mrb[0].mxu0
  %v82 = vadd.f32 0.0, %v81
  %v83 = vpop.f32.mrb[0].mxu0
  %84 = vmatprep.mubr.bf16.mxu0 0
  %85 = vmatmul.mubr.bf16.gmra.mrb[0].mxu0 %v42
  %v86 = vpop.f32.mrb[0].mxu0
  %v87 = vadd.f32 0.0, %v86
  %v88 = vpop.f32.mrb[0].mxu0
  %v89 = vpop.f32.mrb[0].mxu0
  %v90 = vpop.f32.mrb[0].mxu0
  %91 = vdwg.mxu0
  %v92 = vadd.f32 %v23, %v79
  %v93 = vadd.f32 %v24, %v82
  %v94 = vadd.f32 %v25, %v87
  %vm95 = vcmask 523264
  %96 = vst.msk [vmem:[#allocation2] sm:$0xff] %vm95, %v92
  %97 = vst.msk [vmem:[#allocation2 + $0x8] sm:$0xff] %vm95, %v93
  %98 = vst.msk [vmem:[#allocation2 + $0x10] sm:$0xff] %vm95, %v94
  // Predicated region
  $region18: #{decoder_forward.29} parent=0 // pred_check
    %p99 = pneg %p15
  $region19: #{decoder_forward.29} parent=0 // pred_check_branch
    %101 = sbr.rel (%p99) target = $region21
  $region20: #{decoder_forward.29} parent=0 // pred_region
    %v102 = vld [vmem:[#allocation2] sm:$0xff]
    %v103 = vld [vmem:[#allocation2 + $0x8] sm:$0xff]
    %v104 = vld [vmem:[#allocation2 + $0x10] sm:$0xff]
    %v105 = vld [vmem:[%s2] sm:$0x1]
    %v107 = vlaneseq
    %v108 = vshrl.u32 %v107, 7
    %v109 = vsub.s32 0, %v108
    %v110 = vrot.slane %v105, %v109
    %v112 = vadd.f32 %v102, %v110
    %v113 = vadd.f32 %v103, %v110
    %v114 = vadd.f32 %v104, %v110
    %115 = vst.msk [vmem:[%s3] sm:$0xff] %vm95, %v112
    %116 = vst.msk [vmem:[%s3 + $0x8] sm:$0xff] %vm95, %v113
    %117 = vst.msk [vmem:[%s3 + $0x10] sm:$0xff] %vm95, %v114
  $region21: #{decoder_forward.29} parent=0 // pred_fallthru
    _
  // Predicated region
  $region22: #{decoder_forward.29} parent=0 // pred_check
    _
  $region23: #{decoder_forward.29} parent=0 // pred_check_branch
    %119 = sbr.rel (0) target = $region25
  $region24: #{decoder_forward.29} parent=0 // pred_region
    _
  $region25: #{decoder_forward.29} parent=0 // pred_fallthru
    _
  // Predicated region
  $region26: #{decoder_forward.29} parent=0 // pred_check
    _
  $region27: #{decoder_forward.29} parent=0 // pred_check_branch
    %121 = sbr.rel (0) target = $region29
  $region28: #{decoder_forward.29} parent=0 // pred_region
    _
  $region29: #{decoder_forward.29} parent=0 // pred_fallthru
    _

// kernel: decoder_forward.33
$region0: #{decoder_forward.33}
  #allocation0 [shape = 'u32[]', space=smem, size = 0x4, offset = 0x4, fixed_abs, tag = 'smem constant byte address 0x4 - core index']
  #allocation1 [shape = 'u32[144,128]{1,0:T(1,128)}', space=vmem, size = 0x12000, scoped, tag = 'internal scratch']
  #allocation2 [shape = 'f32[16,64]{1,0:T(8,128)}', space=vmem, size = 0x2000, scoped, tag = 'scratch operand']
  %s0 = inlined_call_operand.vmem [shape: f32[16,32], index: 0, kind: input, shape index: {}]
  %s1 = inlined_call_operand.vmem [shape: f32[32,64], index: 1, kind: input, shape index: {}]
  %s2 = inlined_call_operand.vmem [shape: f32[1,64], index: 2, kind: input, shape index: {}]
  %s3 = inlined_call_operand.vmem [shape: f32[16,64], index: 3, kind: output, shape index: {}]
  %s4 = sld [smem:[#allocation0]]
  $region30: #{decoder_forward.33} parent=0
    _
  %s6 = ssub.s32 1, %s4
  %s7 = scalar_select 0, %s6, %s4
  // Predicated region
  $region2: #{decoder_forward.33} parent=0 // pred_check
    _
  $region3: #{decoder_forward.33} parent=0 // pred_check_branch
    %9 = sbr.rel (0) target = $region5
  $region4: #{decoder_forward.33} parent=0 // pred_region
    _
  $region5: #{decoder_forward.33} parent=0 // pred_fallthru
    _
  // Predicated region
  $region6: #{decoder_forward.33} parent=0 // pred_check
    _
  $region7: #{decoder_forward.33} parent=0 // pred_check_branch
    %11 = sbr.rel (0) target = $region9
  $region8: #{decoder_forward.33} parent=0 // pred_region
    _
  $region9: #{decoder_forward.33} parent=0 // pred_fallthru
    _
  // Predicated region
  $region10: #{decoder_forward.33} parent=0 // pred_check
    _
  $region11: #{decoder_forward.33} parent=0 // pred_check_branch
    %13 = sbr.rel (0) target = $region13
  $region12: #{decoder_forward.33} parent=0 // pred_region
    _
  $region13: #{decoder_forward.33} parent=0 // pred_fallthru
    _
  %p15 = scmp.eq.s32.totalorder 0, 0
  // Predicated region
  $region14: #{decoder_forward.33} parent=0 // pred_check
    %p16 = pneg %p15
  $region15: #{decoder_forward.33} parent=0 // pred_check_branch
    %18 = sbr.rel (%p16) target = $region17
  $region16: #{decoder_forward.33} parent=0 // pred_region
    %vm19 = vcmask 523264
    %20 = vst.msk [vmem:[#allocation2] sm:$0xff] %vm19, 0.0
    %21 = vst.msk [vmem:[#allocation2 + $0x8] sm:$0xff] %vm19, 0.0
  $region17: #{decoder_forward.33} parent=0 // pred_fallthru
    _
  %v22 = vld [vmem:[#allocation2] sm:$0xff]
  %v23 = vld [vmem:[#allocation2 + $0x8] sm:$0xff]
  %v24 = vld [vmem:[%s0] sm:$0xff]
  %v25 = vld [vmem:[%s0 + $0x8] sm:$0xff]
  %v26 = vpack.c.bf16 %v25, %v24
  %v27 = vld [vmem:[%s1] sm:$0xff]
  %v28 = vld [vmem:[%s1 + $0x8] sm:$0xff]
  %v29 = vld [vmem:[%s1 + $0x10] sm:$0xff]
  %v30 = vld [vmem:[%s1 + $0x18] sm:$0xff]
  %v31 = vpack.c.bf16 %v28, %v27
  %v32 = vpack.c.bf16 %v30, %v29
  %vm33 = vcmask 261120
  %v35 = vsel %vm33, %v26, 0
  %37 = vmatprep.subr.bf16.mxu0 0
  %38 = vmatpush1.bf16.msra.mxu0 %v31
  %39 = vmatprep.subr.bf16.mxu0 0
  %40 = vmatpush1.bf16.msra.mxu0 %v32
  %41 = vmatprep.subr.bf16.mxu0 0
  %42 = vmatpush1.bf16.msra.mxu0 0
  %43 = vmatprep.subr.bf16.mxu0 0
  %44 = vmatpush1.bf16.msra.mxu0 0
  %45 = vmatprep.subr.bf16.mxu0 0
  %46 = vmatpush1.bf16.msra.mxu0 0
  %47 = vmatprep.subr.bf16.mxu0 0
  %48 = vmatpush1.bf16.msra.mxu0 0
  %49 = vmatprep.subr.bf16.mxu0 0
  %50 = vmatpush1.bf16.msra.mxu0 0
  %51 = vmatprep.subr.bf16.mxu0 0
  %52 = vmatpush1.bf16.msra.mxu0 0
  %53 = vmatprep.subr.bf16.mxu0 0
  %54 = vmatpush1.bf16.msra.mxu0 0
  %55 = vmatprep.subr.bf16.mxu0 0
  %56 = vmatpush1.bf16.msra.mxu0 0
  %57 = vmatprep.subr.bf16.mxu0 0
  %58 = vmatpush1.bf16.msra.mxu0 0
  %59 = vmatprep.subr.bf16.mxu0 0
  %60 = vmatpush1.bf16.msra.mxu0 0
  %61 = vmatprep.subr.bf16.mxu0 0
  %62 = vmatpush1.bf16.msra.mxu0 0
  %63 = vmatprep.subr.bf16.mxu0 0
  %64 = vmatpush1.bf16.msra.mxu0 0
  %65 = vmatprep.subr.bf16.mxu0 0
  %66 = vmatpush1.bf16.msra.mxu0 0
  %67 = vmatprep.subr.bf16.mxu0 0
  %68 = vmatpush1.bf16.msra.mxu0 0
  %69 = vmatprep.mubr.bf16.mxu0 0
  %70 = vmatmul.mubr.bf16.gmra.mrb[0].mxu0 %v35
  %v71 = vpop.f32.mrb[0].mxu0
  %v72 = vadd.f32 0.0, %v71
  %v73 = vpop.f32.mrb[0].mxu0
  %v74 = vpop.f32.mrb[0].mxu0
  %v75 = vadd.f32 0.0, %v74
  %v76 = vpop.f32.mrb[0].mxu0
  %77 = vdwg.mxu0
  %v78 = vadd.f32 %v22, %v72
  %v79 = vadd.f32 %v23, %v75
  %vm80 = vcmask 523264
  %81 = vst.msk [vmem:[#allocation2] sm:$0xff] %vm80, %v78
  %82 = vst.msk [vmem:[#allocation2 + $0x8] sm:$0xff] %vm80, %v79
  // Predicated region
  $region18: #{decoder_forward.33} parent=0 // pred_check
    %p83 = pneg %p15
  $region19: #{decoder_forward.33} parent=0 // pred_check_branch
    %85 = sbr.rel (%p83) target = $region21
  $region20: #{decoder_forward.33} parent=0 // pred_region
    %v86 = vld [vmem:[#allocation2] sm:$0xff]
    %v87 = vld [vmem:[#allocation2 + $0x8] sm:$0xff]
    %v88 = vld [vmem:[%s2] sm:$0x1]
    %v90 = vlaneseq
    %v91 = vshrl.u32 %v90, 7
    %v92 = vsub.s32 0, %v91
    %v93 = vrot.slane %v88, %v92
    %v95 = vadd.f32 %v86, %v93
    %v96 = vadd.f32 %v87, %v93
    %v97 = vmax.f32 %v95, 0.0
    %v98 = vmax.f32 %v96, 0.0
    %99 = vst.msk [vmem:[%s3] sm:$0xff] %vm80, %v97
    %100 = vst.msk [vmem:[%s3 + $0x8] sm:$0xff] %vm80, %v98
  $region21: #{decoder_forward.33} parent=0 // pred_fallthru
    _
  // Predicated region
  $region22: #{decoder_forward.33} parent=0 // pred_check
    _
  $region23: #{decoder_forward.33} parent=0 // pred_check_branch
    %102 = sbr.rel (0) target = $region25
  $region24: #{decoder_forward.33} parent=0 // pred_region
    _
  $region25: #{decoder_forward.33} parent=0 // pred_fallthru
    _
  // Predicated region
  $region26: #{decoder_forward.33} parent=0 // pred_check
    _
  $region27: #{decoder_forward.33} parent=0 // pred_check_branch
    %104 = sbr.rel (0) target = $region29
  $region28: #{decoder_forward.33} parent=0 // pred_region
    _
  $region29: #{decoder_forward.33} parent=0 // pred_fallthru
    _

// kernel: decoder_forward.30
$region0: #{decoder_forward.30}
  #allocation0 [shape = 'u32[]', space=smem, size = 0x4, offset = 0x4, fixed_abs, tag = 'smem constant byte address 0x4 - core index']
  #allocation1 [shape = 'u32[144,128]{1,0:T(1,128)}', space=vmem, size = 0x12000, scoped, tag = 'internal scratch']
  %s0 = inlined_call_operand.vmem [shape: f32[2,8,32], index: 0, kind: input, shape index: {}]
  %s1 = inlined_call_operand.vmem [shape: f32[2,12,32], index: 1, kind: input, shape index: {}]
  %s2 = inlined_call_operand.vmem [shape: f32[2,12,32], index: 2, kind: input, shape index: {}]
  %s3 = inlined_call_operand.vmem [shape: f32[2,8,32], index: 3, kind: output, shape index: {}]
  %s4 = sld [smem:[#allocation0]]
  $region45: #{decoder_forward.30} parent=0
    _
  %s6 = ssub.s32 1, %s4
  %s7 = scalar_select 0, %s6, %s4
  loop: start=0, step=1, limit=4
  $region2: #{decoder_forward.30} parent=0 // loop_pre_header
    _
  $region3: #{decoder_forward.30} parent=0 // loop_header
    %s9 = sphi 0, %s13
    %p10 = scmp.ge.s32.totalorder %s9, 4
    %s19 = sphi 0, %s21
    %s22 = sphi 0, %s19
    %s23 = sphi 0, %s22
    %s39 = sphi 0, %s23
    %s45 = sphi 0, %s47
    %s48 = sphi 0, %s45
    %s49 = sphi 0, %s48
    %s65 = sphi 0, %s49
    %s71 = sphi 0, %s73
    %s74 = sphi 0, %s71
    %s75 = sphi 0, %s74
    %s91 = sphi 0, %s75
    %s97 = sphi 0, %s99
    %s100 = sphi 0, %s97
    %s101 = sphi 0, %s100
    %s117 = sphi 0, %s101
  $region4: #{decoder_forward.30} parent=0 // loop_header_branch
    %12 = sbr.rel (%p10) target = $region8
  $region5: #{decoder_forward.30} parent=0 // loop_body
    %s14 = ssub.s32 %s9, 1
    %s15 = ssub.s32 %s9, 2
    %s16 = sadd.s32 %s9, 1
    %s17 = ssub.s32 %s9, %s16
    %p18 = scmp.eq.s32.totalorder %s17, 0
    %s20 = sadd.s32 %s19, 1
    %s21 = scalar_select %p18, %s19, %s20
    %p24 = pneg %p18
    %p25 = scmp.eq.s32.totalorder %s9, 1
    %p26 = por %p24, %p25
    %p27 = scmp.ne.s32.totalorder %s19, %s22
    %p28 = scmp.eq.s32.totalorder %s9, 0
    %p29 = por %p27, %p28
    %p30 = scmp.ne.s32.totalorder %s19, %s22
    %p31 = scmp.eq.s32.totalorder %s14, 1
    %p32 = por %p30, %p31
    %p33 = scmp.ne.s32.totalorder %s22, %s23
    %p34 = scmp.eq.s32.totalorder %s14, 0
    %p35 = por %p33, %p34
    %p36 = scmp.ne.s32.totalorder %s22, %s23
    %p37 = scmp.eq.s32.totalorder %s15, 1
    %p38 = por %p36, %p37
    %p40 = scmp.ne.s32.totalorder %s23, %s39
    %p41 = scmp.eq.s32.totalorder %s15, 0
    %p42 = por %p40, %p41
    %s43 = ssub.s32 %s9, %s16
    %p44 = scmp.eq.s32.totalorder %s43, 0
    %s46 = sadd.s32 %s45, 1
    %s47 = scalar_select %p44, %s45, %s46
    %p50 = pneg %p44
    %p51 = scmp.eq.s32.totalorder %s9, 1
    %p52 = por %p50, %p51
    %p53 = scmp.ne.s32.totalorder %s45, %s48
    %p54 = scmp.eq.s32.totalorder %s9, 0
    %p55 = por %p53, %p54
    %p56 = scmp.ne.s32.totalorder %s45, %s48
    %p57 = scmp.eq.s32.totalorder %s14, 1
    %p58 = por %p56, %p57
    %p59 = scmp.ne.s32.totalorder %s48, %s49
    %p60 = scmp.eq.s32.totalorder %s14, 0
    %p61 = por %p59, %p60
    %p62 = scmp.ne.s32.totalorder %s48, %s49
    %p63 = scmp.eq.s32.totalorder %s15, 1
    %p64 = por %p62, %p63
    %p66 = scmp.ne.s32.totalorder %s49, %s65
    %p67 = scmp.eq.s32.totalorder %s15, 0
    %p68 = por %p66, %p67
    %s69 = ssub.s32 %s9, %s16
    %p70 = scmp.eq.s32.totalorder %s69, 0
    %s72 = sadd.s32 %s71, 1
    %s73 = scalar_select %p70, %s71, %s72
    %p76 = pneg %p70
    %p77 = scmp.eq.s32.totalorder %s9, 1
    %p78 = por %p76, %p77
    %p79 = scmp.ne.s32.totalorder %s71, %s74
    %p80 = scmp.eq.s32.totalorder %s9, 0
    %p81 = por %p79, %p80
    %p82 = scmp.ne.s32.totalorder %s71, %s74
    %p83 = scmp.eq.s32.totalorder %s14, 1
    %p84 = por %p82, %p83
    %p85 = scmp.ne.s32.totalorder %s74, %s75
    %p86 = scmp.eq.s32.totalorder %s14, 0
    %p87 = por %p85, %p86
    %p88 = scmp.ne.s32.totalorder %s74, %s75
    %p89 = scmp.eq.s32.totalorder %s15, 1
    %p90 = por %p88, %p89
    %p92 = scmp.ne.s32.totalorder %s75, %s91
    %p93 = scmp.eq.s32.totalorder %s15, 0
    %p94 = por %p92, %p93
    %s95 = ssub.s32 %s9, %s16
    %p96 = scmp.eq.s32.totalorder %s95, 0
    %s98 = sadd.s32 %s97, 1
    %s99 = scalar_select %p96, %s97, %s98
    %p102 = pneg %p96
    %p103 = scmp.eq.s32.totalorder %s9, 1
    %p104 = por %p102, %p103
    %p105 = scmp.ne.s32.totalorder %s97, %s100
    %p106 = scmp.eq.s32.totalorder %s9, 0
    %p107 = por %p105, %p106
    %p108 = scmp.ne.s32.totalorder %s97, %s100
    %p109 = scmp.eq.s32.totalorder %s14, 1
    %p110 = por %p108, %p109
    %p111 = scmp.ne.s32.totalorder %s100, %s101
    %p112 = scmp.eq.s32.totalorder %s14, 0
    %p113 = por %p111, %p112
    %p114 = scmp.ne.s32.totalorder %s100, %s101
    %p115 = scmp.eq.s32.totalorder %s15, 1
    %p116 = por %p114, %p115
    %p118 = scmp.ne.s32.totalorder %s101, %s117
    %p119 = scmp.eq.s32.totalorder %s15, 0
    %p120 = por %p118, %p119
    %p121 = scmp.le.s32.totalorder 1, %s9
    %p122 = scmp.lt.s32.totalorder %s9, 3
    %p123 = pnand %p121, %p122
    %p124 = pneg %p123
    // Predicated region
    $region9: #{decoder_forward.30} parent=5 // pred_check
      _
    $region10: #{decoder_forward.30} parent=5 // pred_check_branch
      %126 = sbr.rel (%p123) target = $region12
    $region11: #{decoder_forward.30} parent=5 // pred_region
      %s127 = ssub.s32 %s9, 1
    $region12: #{decoder_forward.30} parent=5 // pred_fallthru
      _
    %p128 = scmp.lt.s32.totalorder %s9, 2
    // Predicated region
    $region13: #{decoder_forward.30} parent=5 // pred_check
      %p129 = pneg %p128
    $region14: #{decoder_forward.30} parent=5 // pred_check_branch
      %131 = sbr.rel (%p129) target = $region16
    $region15: #{decoder_forward.30} parent=5 // pred_region
      // Predicated region
      $region17: #{decoder_forward.30} parent=15 // pred_check
        %p132 = pneg %p29
      $region18: #{decoder_forward.30} parent=15 // pred_check_branch
        %134 = sbr.rel (%p132) target = $region20
      $region19: #{decoder_forward.30} parent=15 // pred_region
        %p135 = scmp.lt.s32.totalorder %s9, 1
        %s136 = scalar_select %p135, %s9, 1
        %s137 = smul.addr %s136, 8
        %s138 = scalar_lea.vmem %s0, %s137
      $region20: #{decoder_forward.30} parent=15 // pred_fallthru
        _
      // Predicated region
      $region21: #{decoder_forward.30} parent=15 // pred_check
        %p139 = pneg %p55
      $region22: #{decoder_forward.30} parent=15 // pred_check_branch
        %141 = sbr.rel (%p139) target = $region24
      $region23: #{decoder_forward.30} parent=15 // pred_region
        %p142 = scmp.lt.s32.totalorder %s9, 1
        %s143 = scalar_select %p142, %s9, 1
        %s144 = smul.addr %s143, 2
        %s145 = smul.addr %s144, 8
        %s146 = scalar_lea.vmem %s1, %s145
      $region24: #{decoder_forward.30} parent=15 // pred_fallthru
        _
      // Predicated region
      $region25: #{decoder_forward.30} parent=15 // pred_check
        %p147 = pneg %p81
      $region26: #{decoder_forward.30} parent=15 // pred_check_branch
        %149 = sbr.rel (%p147) target = $region28
      $region27: #{decoder_forward.30} parent=15 // pred_region
        %p150 = scmp.lt.s32.totalorder %s9, 1
        %s151 = scalar_select %p150, %s9, 1
        %s152 = smul.addr %s151, 2
        %s153 = smul.addr %s152, 8
        %s154 = scalar_lea.vmem %s2, %s153
      $region28: #{decoder_forward.30} parent=15 // pred_fallthru
        _
    $region16: #{decoder_forward.30} parent=5 // pred_fallthru
      _
    %p155 = scmp.le.s32.totalorder 1, %s9
    %p156 = scmp.lt.s32.totalorder %s9, 3
    %p157 = pnand %p155, %p156
    %p158 = pneg %p157
    // Predicated region
    $region29: #{decoder_forward.30} parent=5 // pred_check
      _
    $region30: #{decoder_forward.30} parent=5 // pred_check_branch
      %160 = sbr.rel (%p157) target = $region32
    $region31: #{decoder_forward.30} parent=5 // pred_region
      %s161 = ssub.s32 %s9, 1
      %p162 = scmp.lt.s32.totalorder %s14, 1
      %s163 = scalar_select %p162, %s14, 1
      %s164 = smul.addr %s163, 8
      %s165 = scalar_lea.vmem %s0, %s164
      %p166 = pneg %p35
      %p167 = pneg %p32
      %p168 = scmp.lt.s32.totalorder %s14, 1
      %s169 = scalar_select %p168, %s14, 1
      %s170 = smul.addr %s169, 2
      %s171 = smul.addr %s170, 8
      %s172 = scalar_lea.vmem %s1, %s171
      %p173 = pneg %p61
      %p174 = pneg %p58
      %p175 = scmp.lt.s32.totalorder %s14, 1
      %s176 = scalar_select %p175, %s14, 1
      %s177 = smul.addr %s176, 2
      %s178 = smul.addr %s177, 8
      %s179 = scalar_lea.vmem %s2, %s178
      %p180 = pneg %p87
      %p181 = pneg %p84
      %p182 = pneg %p113
      %p183 = pneg %p110
      %p184 = scmp.lt.s32.totalorder %s14, 1
      %s185 = scalar_select %p184, %s14, 1
      %s186 = smul.addr %s185, 8
      %s187 = scalar_lea.vmem %s3, %s186
      %p188 = scmp.lt.s32.totalorder %s14, 1
      %s189 = scalar_select %p188, %s14, 1
      %s190 = smul.addr %s189, 8
      %s191 = scalar_lea.vmem %s0, %s190
      %p192 = scmp.lt.s32.totalorder %s14, 1
      %s193 = scalar_select %p192, %s14, 1
      %s194 = smul.addr %s193, 2
      %s195 = smul.addr %s194, 8
      %s196 = scalar_lea.vmem %s1, %s195
      %p197 = scmp.lt.s32.totalorder %s14, 1
      %s198 = scalar_select %p197, %s14, 1
      %s199 = smul.addr %s198, 2
      %s200 = smul.addr %s199, 8
      %s201 = scalar_lea.vmem %s2, %s200
      %p202 = scmp.lt.s32.totalorder %s14, 1
      %s203 = scalar_select %p202, %s14, 1
      %s204 = smul.addr %s203, 8
      %s205 = scalar_lea.vmem %s3, %s204
      %v206 = vld [vmem:[%s191] sm:$0xff]
      %v207 = vld [vmem:[%s196] sm:$0xff]
      %v208 = vld [vmem:[%s196 + $0x8] sm:$0xf]
      %v209 = vld [vmem:[%s201] sm:$0xff]
      %v210 = vld [vmem:[%s201 + $0x8] sm:$0xf]
      %vm211 = vcmask 64512
      %v213 = vsel %vm211, %v206, 0
      %v216 = vsel %vm211, %v207, 0
      %v219 = vsel %vm211, %v208, 0
      %221 = vmatprep.subr.mxu0 0.0
      %222 = vmatpush1.xpose.msra.mxu0 %v216
      %223 = vmatprep.subr.mxu0 0.0
      %224 = vmatpush1.xpose.msra.mxu0 %v219
      %225 = vmatprep.subr.mxu0 0.0
      %226 = vmatpush1.xpose.msra.mxu0 0.0
      %227 = vmatprep.subr.mxu0 0.0
      %228 = vmatpush1.xpose.msra.mxu0 0.0
      %229 = vmatprep.subr.mxu0 0.0
      %230 = vmatpush1.xpose.msra.mxu0 0.0
      %231 = vmatprep.subr.mxu0 0.0
      %232 = vmatpush1.xpose.msra.mxu0 0.0
      %233 = vmatprep.subr.mxu0 0.0
      %234 = vmatpush1.xpose.msra.mxu0 0.0
      %235 = vmatprep.subr.mxu0 0.0
      %236 = vmatpush1.xpose.msra.mxu0 0.0
      %237 = vmatprep.subr.mxu0 0.0
      %238 = vmatpush1.xpose.msra.mxu0 0.0
      %239 = vmatprep.subr.mxu0 0.0
      %240 = vmatpush1.xpose.msra.mxu0 0.0
      %241 = vmatprep.subr.mxu0 0.0
      %242 = vmatpush1.xpose.msra.mxu0 0.0
      %243 = vmatprep.subr.mxu0 0.0
      %244 = vmatpush1.xpose.msra.mxu0 0.0
      %245 = vmatprep.subr.mxu0 0.0
      %246 = vmatpush1.xpose.msra.mxu0 0.0
      %247 = vmatprep.subr.mxu0 0.0
      %248 = vmatpush1.xpose.msra.mxu0 0.0
      %249 = vmatprep.subr.mxu0 0.0
      %250 = vmatpush1.xpose.msra.mxu0 0.0
      %251 = vmatprep.subr.mxu0 0.0
      %252 = vmatpush1.xpose.msra.mxu0 0.0
      %253 = vmatprep.subr.mxu0 0.0
      %254 = vmatpush1.xpose.msra.mxu0 0.0
      %255 = vmatprep.subr.mxu0 0.0
      %256 = vmatpush1.xpose.msra.mxu0 0.0
      %257 = vmatprep.subr.mxu0 0.0
      %258 = vmatpush1.xpose.msra.mxu0 0.0
      %259 = vmatprep.subr.mxu0 0.0
      %260 = vmatpush1.xpose.msra.mxu0 0.0
      %261 = vmatprep.subr.mxu0 0.0
      %262 = vmatpush1.xpose.msra.mxu0 0.0
      %263 = vmatprep.subr.mxu0 0.0
      %264 = vmatpush1.xpose.msra.mxu0 0.0
      %265 = vmatprep.subr.mxu0 0.0
      %266 = vmatpush1.xpose.msra.mxu0 0.0
      %267 = vmatprep.subr.mxu0 0.0
      %268 = vmatpush1.xpose.msra.mxu0 0.0
      %269 = vmatprep.subr.mxu0 0.0
      %270 = vmatpush1.xpose.msra.mxu0 0.0
      %271 = vmatprep.subr.mxu0 0.0
      %272 = vmatpush1.xpose.msra.mxu0 0.0
      %273 = vmatprep.subr.mxu0 0.0
      %274 = vmatpush1.xpose.msra.mxu0 0.0
      %275 = vmatprep.subr.mxu0 0.0
      %276 = vmatpush1.xpose.msra.mxu0 0.0
      %277 = vmatprep.subr.mxu0 0.0
      %278 = vmatpush1.xpose.msra.mxu0 0.0
      %279 = vmatprep.subr.mxu0 0.0
      %280 = vmatpush1.xpose.msra.mxu0 0.0
      %281 = vmatprep.subr.mxu0 0.0
      %282 = vmatpush1.xpose.msra.mxu0 0.0
      %283 = vmatprep.subr.mxu0 0.0
      %284 = vmatpush1.xpose.msra.mxu0 0.0
      %285 = vmatprep.mubr.f32.mxu0 0.0
      %286 = vmatmul.mubr.f32.gmra.mrb[0].mxu0 %v213
      %v287 = vpop.f32.mrb[0].mxu0
      %v288 = vadd.f32 0.0, %v287
      %v289 = vpop.f32.mrb[0].mxu0
      %290 = vdwg.mxu0
      %v291 = vmul.f32 %v288, 0.35355338
      %vm292 = vcmask 97280
      %v293 = vsel %vm292, %v291, -inf
      %294 = vmax.xlane.f32.xlu0 %v293
      %v295 = vpop.xlane.xlu0 %294
      %v296 = vsub.f32 %v291, %v295
      %v297 = vmul.f32 %v296, 1.442695
      %v298 = vpow.pop %v297
      %v299 = vsel %vm292, %v298, 0.0
      %300 = vadd.xlane.f32.xlu0 %v299
      %v301 = vpop.xlane.xlu0 %300
      %v302 = vrcp.pop %v301
      %v303 = vmul.f32 %v298, %v302
      %v305 = vsel %vm292, %v303, 0
      %vm307 = vcmask 1043456
      %v309 = vsel %vm307, %v210, 0
      %311 = vmatprep.subr.mxu0 0.0
      %312 = vmatpush1.msra.mxu0 %v209
      %313 = vmatprep.subr.mxu0 0.0
      %314 = vmatpush1.msra.mxu0 %v309
      %315 = vmatprep.subr.mxu0 0.0
      %316 = vmatpush1.msra.mxu0 0.0
      %317 = vmatprep.subr.mxu0 0.0
      %318 = vmatpush1.msra.mxu0 0.0
      %319 = vmatprep.subr.mxu0 0.0
      %320 = vmatpush1.msra.mxu0 0.0
      %321 = vmatprep.subr.mxu0 0.0
      %322 = vmatpush1.msra.mxu0 0.0
      %323 = vmatprep.subr.mxu0 0.0
      %324 = vmatpush1.msra.mxu0 0.0
      %325 = vmatprep.subr.mxu0 0.0
      %326 = vmatpush1.msra.mxu0 0.0
      %327 = vmatprep.subr.mxu0 0.0
      %328 = vmatpush1.msra.mxu0 0.0
      %329 = vmatprep.subr.mxu0 0.0
      %330 = vmatpush1.msra.mxu0 0.0
      %331 = vmatprep.subr.mxu0 0.0
      %332 = vmatpush1.msra.mxu0 0.0
      %333 = vmatprep.subr.mxu0 0.0
      %334 = vmatpush1.msra.mxu0 0.0
      %335 = vmatprep.subr.mxu0 0.0
      %336 = vmatpush1.msra.mxu0 0.0
      %337 = vmatprep.subr.mxu0 0.0
      %338 = vmatpush1.msra.mxu0 0.0
      %339 = vmatprep.subr.mxu0 0.0
      %340 = vmatpush1.msra.mxu0 0.0
      %341 = vmatprep.subr.mxu0 0.0
      %342 = vmatpush1.msra.mxu0 0.0
      %343 = vmatprep.subr.mxu0 0.0
      %344 = vmatpush1.msra.mxu0 0.0
      %345 = vmatprep.subr.mxu0 0.0
      %346 = vmatpush1.msra.mxu0 0.0
      %347 = vmatprep.subr.mxu0 0.0
      %348 = vmatpush1.msra.mxu0 0.0
      %349 = vmatprep.subr.mxu0 0.0
      %350 = vmatpush1.msra.mxu0 0.0
      %351 = vmatprep.subr.mxu0 0.0
      %352 = vmatpush1.msra.mxu0 0.0
      %353 = vmatprep.subr.mxu0 0.0
      %354 = vmatpush1.msra.mxu0 0.0
      %355 = vmatprep.subr.mxu0 0.0
      %356 = vmatpush1.msra.mxu0 0.0
      %357 = vmatprep.subr.mxu0 0.0
      %358 = vmatpush1.msra.mxu0 0.0
      %359 = vmatprep.subr.mxu0 0.0
      %360 = vmatpush1.msra.mxu0 0.0
      %361 = vmatprep.subr.mxu0 0.0
      %362 = vmatpush1.msra.mxu0 0.0
      %363 = vmatprep.subr.mxu0 0.0
      %364 = vmatpush1.msra.mxu0 0.0
      %365 = vmatprep.subr.mxu0 0.0
      %366 = vmatpush1.msra.mxu0 0.0
      %367 = vmatprep.subr.mxu0 0.0
      %368 = vmatpush1.msra.mxu0 0.0
      %369 = vmatprep.subr.mxu0 0.0
      %370 = vmatpush1.msra.mxu0 0.0
      %371 = vmatprep.subr.mxu0 0.0
      %372 = vmatpush1.msra.mxu0 0.0
      %373 = vmatprep.subr.mxu0 0.0
      %374 = vmatpush1.msra.mxu0 0.0
      %375 = vmatprep.mubr.f32.mxu0 0.0
      %376 = vmatmul.mubr.f32.gmra.mrb[0].mxu0 %v305
      %v377 = vpop.f32.mrb[0].mxu0
      %v378 = vadd.f32 0.0, %v377
      %v379 = vpop.f32.mrb[0].mxu0
      %380 = vdwg.mxu0
      %381 = vrot.lane.b32.xlu0 %v206, 120
      %v382 = vpop.permute.xlu0 %381
      %383 = vrot.lane.b32.xlu0 %v207, 120
      %v384 = vpop.permute.xlu0 %383
      %385 = vrot.lane.b32.xlu0 %v208, 120
      %v386 = vpop.permute.xlu0 %385
      %v387 = vsel %vm211, %v382, 0
      %v389 = vsel %vm211, %v384, 0
      %v391 = vsel %vm211, %v386, 0
      %393 = vmatprep.subr.mxu0 0.0
      %394 = vmatpush1.xpose.msra.mxu0 %v389
      %395 = vmatprep.subr.mxu0 0.0
      %396 = vmatpush1.xpose.msra.mxu0 %v391
      %397 = vmatprep.subr.mxu0 0.0
      %398 = vmatpush1.xpose.msra.mxu0 0.0
      %399 = vmatprep.subr.mxu0 0.0
      %400 = vmatpush1.xpose.msra.mxu0 0.0
      %401 = vmatprep.subr.mxu0 0.0
      %402 = vmatpush1.xpose.msra.mxu0 0.0
      %403 = vmatprep.subr.mxu0 0.0
      %404 = vmatpush1.xpose.msra.mxu0 0.0
      %405 = vmatprep.subr.mxu0 0.0
      %406 = vmatpush1.xpose.msra.mxu0 0.0
      %407 = vmatprep.subr.mxu0 0.0
      %408 = vmatpush1.xpose.msra.mxu0 0.0
      %409 = vmatprep.subr.mxu0 0.0
      %410 = vmatpush1.xpose.msra.mxu0 0.0
      %411 = vmatprep.subr.mxu0 0.0
      %412 = vmatpush1.xpose.msra.mxu0 0.0
      %413 = vmatprep.subr.mxu0 0.0
      %414 = vmatpush1.xpose.msra.mxu0 0.0
      %415 = vmatprep.subr.mxu0 0.0
      %416 = vmatpush1.xpose.msra.mxu0 0.0
      %417 = vmatprep.subr.mxu0 0.0
      %418 = vmatpush1.xpose.msra.mxu0 0.0
      %419 = vmatprep.subr.mxu0 0.0
      %420 = vmatpush1.xpose.msra.mxu0 0.0
      %421 = vmatprep.subr.mxu0 0.0
      %422 = vmatpush1.xpose.msra.mxu0 0.0
      %423 = vmatprep.subr.mxu0 0.0
      %424 = vmatpush1.xpose.msra.mxu0 0.0
      %425 = vmatprep.subr.mxu0 0.0
      %426 = vmatpush1.xpose.msra.mxu0 0.0
      %427 = vmatprep.subr.mxu0 0.0
      %428 = vmatpush1.xpose.msra.mxu0 0.0
      %429 = vmatprep.subr.mxu0 0.0
      %430 = vmatpush1.xpose.msra.mxu0 0.0
      %431 = vmatprep.subr.mxu0 0.0
      %432 = vmatpush1.xpose.msra.mxu0 0.0
      %433 = vmatprep.subr.mxu0 0.0
      %434 = vmatpush1.xpose.msra.mxu0 0.0
      %435 = vmatprep.subr.mxu0 0.0
      %436 = vmatpush1.xpose.msra.mxu0 0.0
      %437 = vmatprep.subr.mxu0 0.0
      %438 = vmatpush1.xpose.msra.mxu0 0.0
      %439 = vmatprep.subr.mxu0 0.0
      %440 = vmatpush1.xpose.msra.mxu0 0.0
      %441 = vmatprep.subr.mxu0 0.0
      %442 = vmatpush1.xpose.msra.mxu0 0.0
      %443 = vmatprep.subr.mxu0 0.0
      %444 = vmatpush1.xpose.msra.mxu0 0.0
      %445 = vmatprep.subr.mxu0 0.0
      %446 = vmatpush1.xpose.msra.mxu0 0.0
      %447 = vmatprep.subr.mxu0 0.0
      %448 = vmatpush1.xpose.msra.mxu0 0.0
      %449 = vmatprep.subr.mxu0 0.0
      %450 = vmatpush1.xpose.msra.mxu0 0.0
      %451 = vmatprep.subr.mxu0 0.0
      %452 = vmatpush1.xpose.msra.mxu0 0.0
      %453 = vmatprep.subr.mxu0 0.0
      %454 = vmatpush1.xpose.msra.mxu0 0.0
      %455 = vmatprep.subr.mxu0 0.0
      %456 = vmatpush1.xpose.msra.mxu0 0.0
      %457 = vmatprep.mubr.f32.mxu0 0.0
      %458 = vmatmul.mubr.f32.gmra.mrb[0].mxu0 %v387
      %v459 = vpop.f32.mrb[0].mxu0
      %v460 = vadd.f32 0.0, %v459
      %v461 = vpop.f32.mrb[0].mxu0
      %462 = vdwg.mxu0
      %v463 = vmul.f32 %v460, 0.35355338
      %v464 = vsel %vm292, %v463, -inf
      %465 = vmax.xlane.f32.xlu0 %v464
      %v466 = vpop.xlane.xlu0 %465
      %v467 = vsub.f32 %v463, %v466
      %v468 = vmul.f32 %v467, 1.442695
      %v469 = vpow.pop %v468
      %v470 = vsel %vm292, %v469, 0.0
      %471 = vadd.xlane.f32.xlu0 %v470
      %v472 = vpop.xlane.xlu0 %471
      %v473 = vrcp.pop %v472
      %v474 = vmul.f32 %v469, %v473
      %476 = vrot.lane.b32.xlu0 %v209, 120
      %v477 = vpop.permute.xlu0 %476
      %478 = vrot.lane.b32.xlu0 %v210, 120
      %v479 = vpop.permute.xlu0 %478
      %v482 = vsel %vm292, %v474, 0
      %v484 = vsel %vm307, %v479, 0
      %486 = vmatprep.subr.mxu0 0.0
      %487 = vmatpush1.msra.mxu0 %v477
      %488 = vmatprep.subr.mxu0 0.0
      %489 = vmatpush1.msra.mxu0 %v484
      %490 = vmatprep.subr.mxu0 0.0
      %491 = vmatpush1.msra.mxu0 0.0
      %492 = vmatprep.subr.mxu0 0.0
      %493 = vmatpush1.msra.mxu0 0.0
      %494 = vmatprep.subr.mxu0 0.0
      %495 = vmatpush1.msra.mxu0 0.0
      %496 = vmatprep.subr.mxu0 0.0
      %497 = vmatpush1.msra.mxu0 0.0
      %498 = vmatprep.subr.mxu0 0.0
      %499 = vmatpush1.msra.mxu0 0.0
      %500 = vmatprep.subr.mxu0 0.0
      %501 = vmatpush1.msra.mxu0 0.0
      %502 = vmatprep.subr.mxu0 0.0
      %503 = vmatpush1.msra.mxu0 0.0
      %504 = vmatprep.subr.mxu0 0.0
      %505 = vmatpush1.msra.mxu0 0.0
      %506 = vmatprep.subr.mxu0 0.0
      %507 = vmatpush1.msra.mxu0 0.0
      %508 = vmatprep.subr.mxu0 0.0
      %509 = vmatpush1.msra.mxu0 0.0
      %510 = vmatprep.subr.mxu0 0.0
      %511 = vmatpush1.msra.mxu0 0.0
      %512 = vmatprep.subr.mxu0 0.0
      %513 = vmatpush1.msra.mxu0 0.0
      %514 = vmatprep.subr.mxu0 0.0
      %515 = vmatpush1.msra.mxu0 0.0
      %516 = vmatprep.subr.mxu0 0.0
      %517 = vmatpush1.msra.mxu0 0.0
      %518 = vmatprep.subr.mxu0 0.0
      %519 = vmatpush1.msra.mxu0 0.0
      %520 = vmatprep.subr.mxu0 0.0
      %521 = vmatpush1.msra.mxu0 0.0
      %522 = vmatprep.subr.mxu0 0.0
      %523 = vmatpush1.msra.mxu0 0.0
      %524 = vmatprep.subr.mxu0 0.0
      %525 = vmatpush1.msra.mxu0 0.0
      %526 = vmatprep.subr.mxu0 0.0
      %527 = vmatpush1.msra.mxu0 0.0
      %528 = vmatprep.subr.mxu0 0.0
      %529 = vmatpush1.msra.mxu0 0.0
      %530 = vmatprep.subr.mxu0 0.0
      %531 = vmatpush1.msra.mxu0 0.0
      %532 = vmatprep.subr.mxu0 0.0
      %533 = vmatpush1.msra.mxu0 0.0
      %534 = vmatprep.subr.mxu0 0.0
      %535 = vmatpush1.msra.mxu0 0.0
      %536 = vmatprep.subr.mxu0 0.0
      %537 = vmatpush1.msra.mxu0 0.0
      %538 = vmatprep.subr.mxu0 0.0
      %539 = vmatpush1.msra.mxu0 0.0
      %540 = vmatprep.subr.mxu0 0.0
      %541 = vmatpush1.msra.mxu0 0.0
      %542 = vmatprep.subr.mxu0 0.0
      %543 = vmatpush1.msra.mxu0 0.0
      %544 = vmatprep.subr.mxu0 0.0
      %545 = vmatpush1.msra.mxu0 0.0
      %546 = vmatprep.subr.mxu0 0.0
      %547 = vmatpush1.msra.mxu0 0.0
      %548 = vmatprep.subr.mxu0 0.0
      %549 = vmatpush1.msra.mxu0 0.0
      %550 = vmatprep.mubr.f32.mxu0 0.0
      %551 = vmatmul.mubr.f32.gmra.mrb[0].mxu0 %v482
      %v552 = vpop.f32.mrb[0].mxu0
      %v553 = vadd.f32 0.0, %v552
      %v554 = vpop.f32.mrb[0].mxu0
      %555 = vdwg.mxu0
      %556 = vrot.lane.b32.xlu0 %v206, 112
      %v557 = vpop.permute.xlu0 %556
      %558 = vrot.lane.b32.xlu0 %v207, 112
      %v559 = vpop.permute.xlu0 %558
      %560 = vrot.lane.b32.xlu0 %v208, 112
      %v561 = vpop.permute.xlu0 %560
      %v562 = vsel %vm211, %v557, 0
      %v564 = vsel %vm211, %v559, 0
      %v566 = vsel %vm211, %v561, 0
      %568 = vmatprep.subr.mxu0 0.0
      %569 = vmatpush1.xpose.msra.mxu0 %v564
      %570 = vmatprep.subr.mxu0 0.0
      %571 = vmatpush1.xpose.msra.mxu0 %v566
      %572 = vmatprep.subr.mxu0 0.0
      %573 = vmatpush1.xpose.msra.mxu0 0.0
      %574 = vmatprep.subr.mxu0 0.0
      %575 = vmatpush1.xpose.msra.mxu0 0.0
      %576 = vmatprep.subr.mxu0 0.0
      %577 = vmatpush1.xpose.msra.mxu0 0.0
      %578 = vmatprep.subr.mxu0 0.0
      %579 = vmatpush1.xpose.msra.mxu0 0.0
      %580 = vmatprep.subr.mxu0 0.0
      %581 = vmatpush1.xpose.msra.mxu0 0.0
      %582 = vmatprep.subr.mxu0 0.0
      %583 = vmatpush1.xpose.msra.mxu0 0.0
      %584 = vmatprep.subr.mxu0 0.0
      %585 = vmatpush1.xpose.msra.mxu0 0.0
      %586 = vmatprep.subr.mxu0 0.0
      %587 = vmatpush1.xpose.msra.mxu0 0.0
      %588 = vmatprep.subr.mxu0 0.0
      %589 = vmatpush1.xpose.msra.mxu0 0.0
      %590 = vmatprep.subr.mxu0 0.0
      %591 = vmatpush1.xpose.msra.mxu0 0.0
      %592 = vmatprep.subr.mxu0 0.0
      %593 = vmatpush1.xpose.msra.mxu0 0.0
      %594 = vmatprep.subr.mxu0 0.0
      %595 = vmatpush1.xpose.msra.mxu0 0.0
      %596 = vmatprep.subr.mxu0 0.0
      %597 = vmatpush1.xpose.msra.mxu0 0.0
      %598 = vmatprep.subr.mxu0 0.0
      %599 = vmatpush1.xpose.msra.mxu0 0.0
      %600 = vmatprep.subr.mxu0 0.0
      %601 = vmatpush1.xpose.msra.mxu0 0.0
      %602 = vmatprep.subr.mxu0 0.0
      %603 = vmatpush1.xpose.msra.mxu0 0.0
      %604 = vmatprep.subr.mxu0 0.0
      %605 = vmatpush1.xpose.msra.mxu0 0.0
      %606 = vmatprep.subr.mxu0 0.0
      %607 = vmatpush1.xpose.msra.mxu0 0.0
      %608 = vmatprep.subr.mxu0 0.0
      %609 = vmatpush1.xpose.msra.mxu0 0.0
      %610 = vmatprep.subr.mxu0 0.0
      %611 = vmatpush1.xpose.msra.mxu0 0.0
      %612 = vmatprep.subr.mxu0 0.0
      %613 = vmatpush1.xpose.msra.mxu0 0.0
      %614 = vmatprep.subr.mxu0 0.0
      %615 = vmatpush1.xpose.msra.mxu0 0.0
      %616 = vmatprep.subr.mxu0 0.0
      %617 = vmatpush1.xpose.msra.mxu0 0.0
      %618 = vmatprep.subr.mxu0 0.0
      %619 = vmatpush1.xpose.msra.mxu0 0.0
      %620 = vmatprep.subr.mxu0 0.0
      %621 = vmatpush1.xpose.msra.mxu0 0.0
      %622 = vmatprep.subr.mxu0 0.0
      %623 = vmatpush1.xpose.msra.mxu0 0.0
      %624 = vmatprep.subr.mxu0 0.0
      %625 = vmatpush1.xpose.msra.mxu0 0.0
      %626 = vmatprep.subr.mxu0 0.0
      %627 = vmatpush1.xpose.msra.mxu0 0.0
      %628 = vmatprep.subr.mxu0 0.0
      %629 = vmatpush1.xpose.msra.mxu0 0.0
      %630 = vmatprep.subr.mxu0 0.0
      %631 = vmatpush1.xpose.msra.mxu0 0.0
      %632 = vmatprep.mubr.f32.mxu0 0.0
      %633 = vmatmul.mubr.f32.gmra.mrb[0].mxu0 %v562
      %v634 = vpop.f32.mrb[0].mxu0
      %v635 = vadd.f32 0.0, %v634
      %v636 = vpop.f32.mrb[0].mxu0
      %637 = vdwg.mxu0
      %v638 = vmul.f32 %v635, 0.35355338
      %v639 = vsel %vm292, %v638, -inf
      %640 = vmax.xlane.f32.xlu0 %v639
      %v641 = vpop.xlane.xlu0 %640
      %v642 = vsub.f32 %v638, %v641
      %v643 = vmul.f32 %v642, 1.442695
      %v644 = vpow.pop %v643
      %v645 = vsel %vm292, %v644, 0.0
      %646 = vadd.xlane.f32.xlu0 %v645
      %v647 = vpop.xlane.xlu0 %646
      %v648 = vrcp.pop %v647
      %v649 = vmul.f32 %v644, %v648
      %650 = vrot.lane.b32.xlu0 %v209, 112
      %v651 = vpop.permute.xlu0 %650
      %652 = vrot.lane.b32.xlu0 %v210, 112
      %v653 = vpop.permute.xlu0 %652
      %v656 = vsel %vm292, %v649, 0
      %v658 = vsel %vm307, %v653, 0
      %660 = vmatprep.subr.mxu0 0.0
      %661 = vmatpush1.msra.mxu0 %v651
      %662 = vmatprep.subr.mxu0 0.0
      %663 = vmatpush1.msra.mxu0 %v658
      %664 = vmatprep.subr.mxu0 0.0
      %665 = vmatpush1.msra.mxu0 0.0
      %666 = vmatprep.subr.mxu0 0.0
      %667 = vmatpush1.msra.mxu0 0.0
      %668 = vmatprep.subr.mxu0 0.0
      %669 = vmatpush1.msra.mxu0 0.0
      %670 = vmatprep.subr.mxu0 0.0
      %671 = vmatpush1.msra.mxu0 0.0
      %672 = vmatprep.subr.mxu0 0.0
      %673 = vmatpush1.msra.mxu0 0.0
      %674 = vmatprep.subr.mxu0 0.0
      %675 = vmatpush1.msra.mxu0 0.0
      %676 = vmatprep.subr.mxu0 0.0
      %677 = vmatpush1.msra.mxu0 0.0
      %678 = vmatprep.subr.mxu0 0.0
      %679 = vmatpush1.msra.mxu0 0.0
      %680 = vmatprep.subr.mxu0 0.0
      %681 = vmatpush1.msra.mxu0 0.0
      %682 = vmatprep.subr.mxu0 0.0
      %683 = vmatpush1.msra.mxu0 0.0
      %684 = vmatprep.subr.mxu0 0.0
      %685 = vmatpush1.msra.mxu0 0.0
      %686 = vmatprep.subr.mxu0 0.0
      %687 = vmatpush1.msra.mxu0 0.0
      %688 = vmatprep.subr.mxu0 0.0
      %689 = vmatpush1.msra.mxu0 0.0
      %690 = vmatprep.subr.mxu0 0.0
      %691 = vmatpush1.msra.mxu0 0.0
      %692 = vmatprep.subr.mxu0 0.0
      %693 = vmatpush1.msra.mxu0 0.0
      %694 = vmatprep.subr.mxu0 0.0
      %695 = vmatpush1.msra.mxu0 0.0
      %696 = vmatprep.subr.mxu0 0.0
      %697 = vmatpush1.msra.mxu0 0.0
      %698 = vmatprep.subr.mxu0 0.0
      %699 = vmatpush1.msra.mxu0 0.0
      %700 = vmatprep.subr.mxu0 0.0
      %701 = vmatpush1.msra.mxu0 0.0
      %702 = vmatprep.subr.mxu0 0.0
      %703 = vmatpush1.msra.mxu0 0.0
      %704 = vmatprep.subr.mxu0 0.0
      %705 = vmatpush1.msra.mxu0 0.0
      %706 = vmatprep.subr.mxu0 0.0
      %707 = vmatpush1.msra.mxu0 0.0
      %708 = vmatprep.subr.mxu0 0.0
      %709 = vmatpush1.msra.mxu0 0.0
      %710 = vmatprep.subr.mxu0 0.0
      %711 = vmatpush1.msra.mxu0 0.0
      %712 = vmatprep.subr.mxu0 0.0
      %713 = vmatpush1.msra.mxu0 0.0
      %714 = vmatprep.subr.mxu0 0.0
      %715 = vmatpush1.msra.mxu0 0.0
      %716 = vmatprep.subr.mxu0 0.0
      %717 = vmatpush1.msra.mxu0 0.0
      %718 = vmatprep.subr.mxu0 0.0
      %719 = vmatpush1.msra.mxu0 0.0
      %720 = vmatprep.subr.mxu0 0.0
      %721 = vmatpush1.msra.mxu0 0.0
      %722 = vmatprep.subr.mxu0 0.0
      %723 = vmatpush1.msra.mxu0 0.0
      %724 = vmatprep.mubr.f32.mxu0 0.0
      %725 = vmatmul.mubr.f32.gmra.mrb[0].mxu0 %v656
      %v726 = vpop.f32.mrb[0].mxu0
      %v727 = vadd.f32 0.0, %v726
      %v728 = vpop.f32.mrb[0].mxu0
      %729 = vdwg.mxu0
      %730 = vrot.lane.b32.xlu0 %v206, 104
      %v731 = vpop.permute.xlu0 %730
      %732 = vrot.lane.b32.xlu0 %v207, 104
      %v733 = vpop.permute.xlu0 %732
      %734 = vrot.lane.b32.xlu0 %v208, 104
      %v735 = vpop.permute.xlu0 %734
      %v736 = vsel %vm211, %v731, 0
      %v738 = vsel %vm211, %v733, 0
      %v740 = vsel %vm211, %v735, 0
      %742 = vmatprep.subr.mxu0 0.0
      %743 = vmatpush1.xpose.msra.mxu0 %v738
      %744 = vmatprep.subr.mxu0 0.0
      %745 = vmatpush1.xpose.msra.mxu0 %v740
      %746 = vmatprep.subr.mxu0 0.0
      %747 = vmatpush1.xpose.msra.mxu0 0.0
      %748 = vmatprep.subr.mxu0 0.0
      %749 = vmatpush1.xpose.msra.mxu0 0.0
      %750 = vmatprep.subr.mxu0 0.0
      %751 = vmatpush1.xpose.msra.mxu0 0.0
      %752 = vmatprep.subr.mxu0 0.0
      %753 = vmatpush1.xpose.msra.mxu0 0.0
      %754 = vmatprep.subr.mxu0 0.0
      %755 = vmatpush1.xpose.msra.mxu0 0.0
      %756 = vmatprep.subr.mxu0 0.0
      %757 = vmatpush1.xpose.msra.mxu0 0.0
      %758 = vmatprep.subr.mxu0 0.0
      %759 = vmatpush1.xpose.msra.mxu0 0.0
      %760 = vmatprep.subr.mxu0 0.0
      %761 = vmatpush1.xpose.msra.mxu0 0.0
      %762 = vmatprep.subr.mxu0 0.0
      %763 = vmatpush1.xpose.msra.mxu0 0.0
      %764 = vmatprep.subr.mxu0 0.0
      %765 = vmatpush1.xpose.msra.mxu0 0.0
      %766 = vmatprep.subr.mxu0 0.0
      %767 = vmatpush1.xpose.msra.mxu0 0.0
      %768 = vmatprep.subr.mxu0 0.0
      %769 = vmatpush1.xpose.msra.mxu0 0.0
      %770 = vmatprep.subr.mxu0 0.0
      %771 = vmatpush1.xpose.msra.mxu0 0.0
      %772 = vmatprep.subr.mxu0 0.0
      %773 = vmatpush1.xpose.msra.mxu0 0.0
      %774 = vmatprep.subr.mxu0 0.0
      %775 = vmatpush1.xpose.msra.mxu0 0.0
      %776 = vmatprep.subr.mxu0 0.0
      %777 = vmatpush1.xpose.msra.mxu0 0.0
      %778 = vmatprep.subr.mxu0 0.0
      %779 = vmatpush1.xpose.msra.mxu0 0.0
      %780 = vmatprep.subr.mxu0 0.0
      %781 = vmatpush1.xpose.msra.mxu0 0.0
      %782 = vmatprep.subr.mxu0 0.0
      %783 = vmatpush1.xpose.msra.mxu0 0.0
      %784 = vmatprep.subr.mxu0 0.0
      %785 = vmatpush1.xpose.msra.mxu0 0.0
      %786 = vmatprep.subr.mxu0 0.0
      %787 = vmatpush1.xpose.msra.mxu0 0.0
      %788 = vmatprep.subr.mxu0 0.0
      %789 = vmatpush1.xpose.msra.mxu0 0.0
      %790 = vmatprep.subr.mxu0 0.0
      %791 = vmatpush1.xpose.msra.mxu0 0.0
      %792 = vmatprep.subr.mxu0 0.0
      %793 = vmatpush1.xpose.msra.mxu0 0.0
      %794 = vmatprep.subr.mxu0 0.0
      %795 = vmatpush1.xpose.msra.mxu0 0.0
      %796 = vmatprep.subr.mxu0 0.0
      %797 = vmatpush1.xpose.msra.mxu0 0.0
      %798 = vmatprep.subr.mxu0 0.0
      %799 = vmatpush1.xpose.msra.mxu0 0.0
      %800 = vmatprep.subr.mxu0 0.0
      %801 = vmatpush1.xpose.msra.mxu0 0.0
      %802 = vmatprep.subr.mxu0 0.0
      %803 = vmatpush1.xpose.msra.mxu0 0.0
      %804 = vmatprep.subr.mxu0 0.0
      %805 = vmatpush1.xpose.msra.mxu0 0.0
      %806 = vmatprep.mubr.f32.mxu0 0.0
      %807 = vmatmul.mubr.f32.gmra.mrb[0].mxu0 %v736
      %v808 = vpop.f32.mrb[0].mxu0
      %v809 = vadd.f32 0.0, %v808
      %v810 = vpop.f32.mrb[0].mxu0
      %811 = vdwg.mxu0
      %v812 = vmul.f32 %v809, 0.35355338
      %v813 = vsel %vm292, %v812, -inf
      %814 = vmax.xlane.f32.xlu0 %v813
      %v815 = vpop.xlane.xlu0 %814
      %v816 = vsub.f32 %v812, %v815
      %v817 = vmul.f32 %v816, 1.442695
      %v818 = vpow.pop %v817
      %v819 = vsel %vm292, %v818, 0.0
      %820 = vadd.xlane.f32.xlu0 %v819
      %v821 = vpop.xlane.xlu0 %820
      %v822 = vrcp.pop %v821
      %v823 = vmul.f32 %v818, %v822
      %824 = vrot.lane.b32.xlu0 %v209, 104
      %v825 = vpop.permute.xlu0 %824
      %826 = vrot.lane.b32.xlu0 %v210, 104
      %v827 = vpop.permute.xlu0 %826
      %v830 = vsel %vm292, %v823, 0
      %v832 = vsel %vm307, %v827, 0
      %834 = vmatprep.subr.mxu0 0.0
      %835 = vmatpush1.msra.mxu0 %v825
      %836 = vmatprep.subr.mxu0 0.0
      %837 = vmatpush1.msra.mxu0 %v832
      %838 = vmatprep.subr.mxu0 0.0
      %839 = vmatpush1.msra.mxu0 0.0
      %840 = vmatprep.subr.mxu0 0.0
      %841 = vmatpush1.msra.mxu0 0.0
      %842 = vmatprep.subr.mxu0 0.0
      %843 = vmatpush1.msra.mxu0 0.0
      %844 = vmatprep.subr.mxu0 0.0
      %845 = vmatpush1.msra.mxu0 0.0
      %846 = vmatprep.subr.mxu0 0.0
      %847 = vmatpush1.msra.mxu0 0.0
      %848 = vmatprep.subr.mxu0 0.0
      %849 = vmatpush1.msra.mxu0 0.0
      %850 = vmatprep.subr.mxu0 0.0
      %851 = vmatpush1.msra.mxu0 0.0
      %852 = vmatprep.subr.mxu0 0.0
      %853 = vmatpush1.msra.mxu0 0.0
      %854 = vmatprep.subr.mxu0 0.0
      %855 = vmatpush1.msra.mxu0 0.0
      %856 = vmatprep.subr.mxu0 0.0
      %857 = vmatpush1.msra.mxu0 0.0
      %858 = vmatprep.subr.mxu0 0.0
      %859 = vmatpush1.msra.mxu0 0.0
      %860 = vmatprep.subr.mxu0 0.0
      %861 = vmatpush1.msra.mxu0 0.0
      %862 = vmatprep.subr.mxu0 0.0
      %863 = vmatpush1.msra.mxu0 0.0
      %864 = vmatprep.subr.mxu0 0.0
      %865 = vmatpush1.msra.mxu0 0.0
      %866 = vmatprep.subr.mxu0 0.0
      %867 = vmatpush1.msra.mxu0 0.0
      %868 = vmatprep.subr.mxu0 0.0
      %869 = vmatpush1.msra.mxu0 0.0
      %870 = vmatprep.subr.mxu0 0.0
      %871 = vmatpush1.msra.mxu0 0.0
      %872 = vmatprep.subr.mxu0 0.0
      %873 = vmatpush1.msra.mxu0 0.0
      %874 = vmatprep.subr.mxu0 0.0
      %875 = vmatpush1.msra.mxu0 0.0
      %876 = vmatprep.subr.mxu0 0.0
      %877 = vmatpush1.msra.mxu0 0.0
      %878 = vmatprep.subr.mxu0 0.0
      %879 = vmatpush1.msra.mxu0 0.0
      %880 = vmatprep.subr.mxu0 0.0
      %881 = vmatpush1.msra.mxu0 0.0
      %882 = vmatprep.subr.mxu0 0.0
      %883 = vmatpush1.msra.mxu0 0.0
      %884 = vmatprep.subr.mxu0 0.0
      %885 = vmatpush1.msra.mxu0 0.0
      %886 = vmatprep.subr.mxu0 0.0
      %887 = vmatpush1.msra.mxu0 0.0
      %888 = vmatprep.subr.mxu0 0.0
      %889 = vmatpush1.msra.mxu0 0.0
      %890 = vmatprep.subr.mxu0 0.0
      %891 = vmatpush1.msra.mxu0 0.0
      %892 = vmatprep.subr.mxu0 0.0
      %893 = vmatpush1.msra.mxu0 0.0
      %894 = vmatprep.subr.mxu0 0.0
      %895 = vmatpush1.msra.mxu0 0.0
      %896 = vmatprep.subr.mxu0 0.0
      %897 = vmatpush1.msra.mxu0 0.0
      %898 = vmatprep.mubr.f32.mxu0 0.0
      %899 = vmatmul.mubr.f32.gmra.mrb[0].mxu0 %v830
      %v900 = vpop.f32.mrb[0].mxu0
      %v901 = vadd.f32 0.0, %v900
      %v902 = vpop.f32.mrb[0].mxu0
      %903 = vdwg.mxu0
      %905 = vrot.lane.b32.xlu0 %v553, 8
      %v906 = vpop.permute.xlu0 %905
      %909 = vrot.lane.b32.xlu0 %v727, 16
      %v910 = vpop.permute.xlu0 %909
      %913 = vrot.lane.b32.xlu0 %v901, 24
      %v914 = vpop.permute.xlu0 %913
      %v916 = vsel %vm211, %v378, %v906
      %vm917 = vcmask 130048
      %v918 = vsel %vm917, %v916, %v910
      %vm919 = vcmask 195584
      %v920 = vsel %vm919, %v918, %v914
      %vm921 = vcmask 261120
      %922 = vst.msk [vmem:[%s205] sm:$0xff] %vm921, %v920
      %p923 = scmp.lt.s32.totalorder %s14, 1
      %s924 = scalar_select %p923, %s14, 1
      %s925 = smul.addr %s924, 8
      %s926 = scalar_lea.vmem %s3, %s925
      // Predicated region
      $region33: #{decoder_forward.30} parent=31 // pred_check
        %p927 = pneg %p110
      $region34: #{decoder_forward.30} parent=31 // pred_check_branch
        %929 = sbr.rel (%p927) target = $region36
      $region35: #{decoder_forward.30} parent=31 // pred_region
        _
      $region36: #{decoder_forward.30} parent=31 // pred_fallthru
        _
    $region32: #{decoder_forward.30} parent=5 // pred_fallthru
      _
    %p930 = scmp.le.s32.totalorder 2, %s9
    // Predicated region
    $region37: #{decoder_forward.30} parent=5 // pred_check
      %p931 = pneg %p930
    $region38: #{decoder_forward.30} parent=5 // pred_check_branch
      %933 = sbr.rel (%p931) target = $region40
    $region39: #{decoder_forward.30} parent=5 // pred_region
      %s934 = ssub.s32 %s9, 2
      // Predicated region
      $region41: #{decoder_forward.30} parent=39 // pred_check
        %p935 = pneg %p116
      $region42: #{decoder_forward.30} parent=39 // pred_check_branch
        %937 = sbr.rel (%p935) target = $region44
      $region43: #{decoder_forward.30} parent=39 // pred_region
        %p938 = scmp.lt.s32.totalorder %s15, 1
        %s939 = scalar_select %p938, %s15, 1
        %s940 = smul.addr %s939, 8
        %s941 = scalar_lea.vmem %s3, %s940
      $region44: #{decoder_forward.30} parent=39 // pred_fallthru
        _
    $region40: #{decoder_forward.30} parent=5 // pred_fallthru
      _
  $region6: #{decoder_forward.30} parent=0 // loop_footer
    %s13 = sadd.s32 1, %s9
  $region7: #{decoder_forward.30} parent=0 // loop_footer_branch
    %8 = sbr.rel target = $region3
  $region8: #{decoder_forward.30} parent=0 // loop_exit
    _

// kernel: decoder_forward.34
$region0: #{decoder_forward.34}
  #allocation0 [shape = 'u32[]', space=smem, size = 0x4, offset = 0x4, fixed_abs, tag = 'smem constant byte address 0x4 - core index']
  #allocation1 [shape = 'u32[144,128]{1,0:T(1,128)}', space=vmem, size = 0x12000, scoped, tag = 'internal scratch']
  #allocation2 [shape = 'f32[16,32]{1,0:T(8,128)}', space=vmem, size = 0x2000, scoped, tag = 'scratch operand']
  %s0 = inlined_call_operand.vmem [shape: f32[16,64], index: 0, kind: input, shape index: {}]
  %s1 = inlined_call_operand.vmem [shape: f32[64,32], index: 1, kind: input, shape index: {}]
  %s2 = inlined_call_operand.vmem [shape: f32[1,32], index: 2, kind: input, shape index: {}]
  %s3 = inlined_call_operand.vmem [shape: f32[16,32], index: 3, kind: output, shape index: {}]
  %s4 = sld [smem:[#allocation0]]
  $region30: #{decoder_forward.34} parent=0
    _
  %s6 = ssub.s32 1, %s4
  %s7 = scalar_select 0, %s6, %s4
  // Predicated region
  $region2: #{decoder_forward.34} parent=0 // pred_check
    _
  $region3: #{decoder_forward.34} parent=0 // pred_check_branch
    %9 = sbr.rel (0) target = $region5
  $region4: #{decoder_forward.34} parent=0 // pred_region
    _
  $region5: #{decoder_forward.34} parent=0 // pred_fallthru
    _
  // Predicated region
  $region6: #{decoder_forward.34} parent=0 // pred_check
    _
  $region7: #{decoder_forward.34} parent=0 // pred_check_branch
    %11 = sbr.rel (0) target = $region9
  $region8: #{decoder_forward.34} parent=0 // pred_region
    _
  $region9: #{decoder_forward.34} parent=0 // pred_fallthru
    _
  // Predicated region
  $region10: #{decoder_forward.34} parent=0 // pred_check
    _
  $region11: #{decoder_forward.34} parent=0 // pred_check_branch
    %13 = sbr.rel (0) target = $region13
  $region12: #{decoder_forward.34} parent=0 // pred_region
    _
  $region13: #{decoder_forward.34} parent=0 // pred_fallthru
    _
  %p15 = scmp.eq.s32.totalorder 0, 0
  // Predicated region
  $region14: #{decoder_forward.34} parent=0 // pred_check
    %p16 = pneg %p15
  $region15: #{decoder_forward.34} parent=0 // pred_check_branch
    %18 = sbr.rel (%p16) target = $region17
  $region16: #{decoder_forward.34} parent=0 // pred_region
    %vm19 = vcmask 261120
    %20 = vst.msk [vmem:[#allocation2] sm:$0xff] %vm19, 0.0
    %21 = vst.msk [vmem:[#allocation2 + $0x8] sm:$0xff] %vm19, 0.0
  $region17: #{decoder_forward.34} parent=0 // pred_fallthru
    _
  %v22 = vld [vmem:[#allocation2] sm:$0xff]
  %v23 = vld [vmem:[#allocation2 + $0x8] sm:$0xff]
  %v24 = vld [vmem:[%s0] sm:$0xff]
  %v25 = vld [vmem:[%s0 + $0x8] sm:$0xff]
  %v26 = vpack.c.bf16 %v25, %v24
  %v27 = vld [vmem:[%s1] sm:$0xff]
  %v28 = vld [vmem:[%s1 + $0x8] sm:$0xff]
  %v29 = vld [vmem:[%s1 + $0x10] sm:$0xff]
  %v30 = vld [vmem:[%s1 + $0x18] sm:$0xff]
  %v31 = vld [vmem:[%s1 + $0x20] sm:$0xff]
  %v32 = vld [vmem:[%s1 + $0x28] sm:$0xff]
  %v33 = vld [vmem:[%s1 + $0x30] sm:$0xff]
  %v34 = vld [vmem:[%s1 + $0x38] sm:$0xff]
  %v35 = vpack.c.bf16 %v28, %v27
  %v36 = vpack.c.bf16 %v30, %v29
  %v37 = vpack.c.bf16 %v32, %v31
  %v38 = vpack.c.bf16 %v34, %v33
  %vm39 = vcmask 523264
  %v41 = vsel %vm39, %v26, 0
  %43 = vmatprep.subr.bf16.mxu0 0
  %44 = vmatpush1.bf16.msra.mxu0 %v35
  %45 = vmatprep.subr.bf16.mxu0 0
  %46 = vmatpush1.bf16.msra.mxu0 %v36
  %47 = vmatprep.subr.bf16.mxu0 0
  %48 = vmatpush1.bf16.msra.mxu0 %v37
  %49 = vmatprep.subr.bf16.mxu0 0
  %50 = vmatpush1.bf16.msra.mxu0 %v38
  %51 = vmatprep.subr.bf16.mxu0 0
  %52 = vmatpush1.bf16.msra.mxu0 0
  %53 = vmatprep.subr.bf16.mxu0 0
  %54 = vmatpush1.bf16.msra.mxu0 0
  %55 = vmatprep.subr.bf16.mxu0 0
  %56 = vmatpush1.bf16.msra.mxu0 0
  %57 = vmatprep.subr.bf16.mxu0 0
  %58 = vmatpush1.bf16.msra.mxu0 0
  %59 = vmatprep.subr.bf16.mxu0 0
  %60 = vmatpush1.bf16.msra.mxu0 0
  %61 = vmatprep.subr.bf16.mxu0 0
  %62 = vmatpush1.bf16.msra.mxu0 0
  %63 = vmatprep.subr.bf16.mxu0 0
  %64 = vmatpush1.bf16.msra.mxu0 0
  %65 = vmatprep.subr.bf16.mxu0 0
  %66 = vmatpush1.bf16.msra.mxu0 0
  %67 = vmatprep.subr.bf16.mxu0 0
  %68 = vmatpush1.bf16.msra.mxu0 0
  %69 = vmatprep.subr.bf16.mxu0 0
  %70 = vmatpush1.bf16.msra.mxu0 0
  %71 = vmatprep.subr.bf16.mxu0 0
  %72 = vmatpush1.bf16.msra.mxu0 0
  %73 = vmatprep.subr.bf16.mxu0 0
  %74 = vmatpush1.bf16.msra.mxu0 0
  %75 = vmatprep.mubr.bf16.mxu0 0
  %76 = vmatmul.mubr.bf16.gmra.mrb[0].mxu0 %v41
  %v77 = vpop.f32.mrb[0].mxu0
  %v78 = vadd.f32 0.0, %v77
  %v79 = vpop.f32.mrb[0].mxu0
  %v80 = vpop.f32.mrb[0].mxu0
  %v81 = vadd.f32 0.0, %v80
  %v82 = vpop.f32.mrb[0].mxu0
  %83 = vdwg.mxu0
  %v84 = vadd.f32 %v22, %v78
  %v85 = vadd.f32 %v23, %v81
  %vm86 = vcmask 261120
  %87 = vst.msk [vmem:[#allocation2] sm:$0xff] %vm86, %v84
  %88 = vst.msk [vmem:[#allocation2 + $0x8] sm:$0xff] %vm86, %v85
  // Predicated region
  $region18: #{decoder_forward.34} parent=0 // pred_check
    %p89 = pneg %p15
  $region19: #{decoder_forward.34} parent=0 // pred_check_branch
    %91 = sbr.rel (%p89) target = $region21
  $region20: #{decoder_forward.34} parent=0 // pred_region
    %v92 = vld [vmem:[#allocation2] sm:$0xff]
    %v93 = vld [vmem:[#allocation2 + $0x8] sm:$0xff]
    %v94 = vld [vmem:[%s2] sm:$0x1]
    %v96 = vlaneseq
    %v97 = vshrl.u32 %v96, 7
    %v98 = vsub.s32 0, %v97
    %v99 = vrot.slane %v94, %v98
    %v101 = vadd.f32 %v92, %v99
    %v102 = vadd.f32 %v93, %v99
    %103 = vst.msk [vmem:[%s3] sm:$0xff] %vm86, %v101
    %104 = vst.msk [vmem:[%s3 + $0x8] sm:$0xff] %vm86, %v102
  $region21: #{decoder_forward.34} parent=0 // pred_fallthru
    _
  // Predicated region
  $region22: #{decoder_forward.34} parent=0 // pred_check
    _
  $region23: #{decoder_forward.34} parent=0 // pred_check_branch
    %106 = sbr.rel (0) target = $region25
  $region24: #{decoder_forward.34} parent=0 // pred_region
    _
  $region25: #{decoder_forward.34} parent=0 // pred_fallthru
    _
  // Predicated region
  $region26: #{decoder_forward.34} parent=0 // pred_check
    _
  $region27: #{decoder_forward.34} parent=0 // pred_check_branch
    %108 = sbr.rel (0) target = $region29
  $region28: #{decoder_forward.34} parent=0 // pred_region
    _
  $region29: #{decoder_forward.34} parent=0 // pred_fallthru
    _

// kernel: decoder_forward.47
$region0: #{decoder_forward.47}
  #allocation0 [shape = 'u32[]', space=smem, size = 0x4, offset = 0x4, fixed_abs, tag = 'smem constant byte address 0x4 - core index']
  #allocation1 [shape = 'u32[144,128]{1,0:T(1,128)}', space=vmem, size = 0x12000, scoped, tag = 'internal scratch']
  %s0 = inlined_call_operand.vmem [shape: f32[16,32], index: 0, kind: input, shape index: {}]
  %s1 = inlined_call_operand.vmem [shape: f32[16,32], index: 1, kind: input, shape index: {}]
  %s2 = inlined_call_operand.vmem [shape: f32[1,32], index: 2, kind: input, shape index: {}]
  %s3 = inlined_call_operand.vmem [shape: f32[1,32], index: 3, kind: input, shape index: {}]
  %s4 = inlined_call_operand.hbm [shape: f32[16,32], index: 4, kind: output, shape index: {}]
  %s5 = sld [smem:[#allocation0]]
  $region26: #{decoder_forward.47} parent=0
    _
  %s7 = ssub.s32 1, %s5
  %s8 = scalar_select 0, %s7, %s5
  $region1: #{decoder_forward.47} parent=0
    #allocation2 [shape = 'u8[8192]{0}', space=vmem, size = 0x2000, scoped, tag = 'output window, operand 0, single buffered']
    #allocation3 [shape = 's32[1]{0}', space=sflag, size = 0x4, scoped, tag = 'scoped memory for decoder_forward.47']
    %9 = vsyncpa [#allocation3], 0
    // Predicated region
    $region2: #{decoder_forward.47} parent=1 // pred_check
      _
    $region3: #{decoder_forward.47} parent=1 // pred_check_branch
      %11 = sbr.rel (0) target = $region5
    $region4: #{decoder_forward.47} parent=1 // pred_region
      _
    $region5: #{decoder_forward.47} parent=1 // pred_fallthru
      _
    // Predicated region
    $region6: #{decoder_forward.47} parent=1 // pred_check
      _
    $region7: #{decoder_forward.47} parent=1 // pred_check_branch
      %13 = sbr.rel (0) target = $region9
    $region8: #{decoder_forward.47} parent=1 // pred_region
      _
    $region9: #{decoder_forward.47} parent=1 // pred_fallthru
      _
    // Predicated region
    $region10: #{decoder_forward.47} parent=1 // pred_check
      _
    $region11: #{decoder_forward.47} parent=1 // pred_check_branch
      %15 = sbr.rel (0) target = $region13
    $region12: #{decoder_forward.47} parent=1 // pred_region
      _
    $region13: #{decoder_forward.47} parent=1 // pred_fallthru
      _
    // Predicated region
    $region14: #{decoder_forward.47} parent=1 // pred_check
      _
    $region15: #{decoder_forward.47} parent=1 // pred_check_branch
      %17 = sbr.rel (0) target = $region17
    $region16: #{decoder_forward.47} parent=1 // pred_region
      _
    $region17: #{decoder_forward.47} parent=1 // pred_fallthru
      _
    %v18 = vld [vmem:[%s0] sm:$0xff]
    %v19 = vld [vmem:[%s0 + $0x8] sm:$0xff]
    %v20 = vld [vmem:[%s1] sm:$0xff]
    %v21 = vld [vmem:[%s1 + $0x8] sm:$0xff]
    %v22 = vadd.f32 %v18, %v20
    %v23 = vadd.f32 %v19, %v21
    %vm24 = vcmask 261120
    %v25 = vsel %vm24, %v22, 0.0
    %26 = vadd.xlane.f32.xlu0 %v25
    %v27 = vpop.xlane.xlu0 %26
    %v28 = vsel %vm24, %v23, 0.0
    %29 = vadd.xlane.f32.xlu0 %v28
    %v30 = vpop.xlane.xlu0 %29
    %v31 = vrcp.pop 32.0
    %v32 = vmul.f32 %v27, %v31
    %v33 = vmul.f32 %v30, %v31
    %v34 = vsub.f32 %v22, %v32
    %v35 = vsub.f32 %v23, %v33
    %v36 = vmul.f32 %v34, %v34
    %v37 = vmul.f32 %v35, %v35
    %v38 = vsel %vm24, %v36, 0.0
    %39 = vadd.xlane.f32.xlu0 %v38
    %v40 = vpop.xlane.xlu0 %39
    %v41 = vsel %vm24, %v37, 0.0
    %42 = vadd.xlane.f32.xlu0 %v41
    %v43 = vpop.xlane.xlu0 %42
    %v44 = vmul.f32 %v40, %v31
    %v45 = vmul.f32 %v43, %v31
    %v46 = vadd.f32 %v44, 1e-05
    %v47 = vadd.f32 %v45, 1e-05
    %v48 = vrsqrt.pop %v46
    %v49 = vrsqrt.pop %v47
    %v50 = vmul.f32 %v34, %v48
    %v51 = vmul.f32 %v35, %v49
    %v52 = vld [vmem:[%s2] sm:$0x1]
    %v54 = vlaneseq
    %v55 = vshrl.u32 %v54, 7
    %v56 = vsub.s32 0, %v55
    %v57 = vrot.slane %v52, %v56
    %v59 = vmul.f32 %v50, %v57
    %v60 = vmul.f32 %v51, %v57
    %v61 = vld [vmem:[%s3] sm:$0x1]
    %v63 = vlaneseq
    %v64 = vshrl.u32 %v63, 7
    %v65 = vsub.s32 0, %v64
    %v66 = vrot.slane %v61, %v65
    %v68 = vadd.f32 %v59, %v66
    %v69 = vadd.f32 %v60, %v66
    %70 = vst.msk [vmem:[#allocation2] sm:$0xff] %vm24, %v68
    %71 = vst.msk [vmem:[#allocation2 + $0x8] sm:$0xff] %vm24, %v69
    // Predicated region
    $region18: #{decoder_forward.47} parent=1 // pred_check
      _
    $region19: #{decoder_forward.47} parent=1 // pred_check_branch
      %73 = sbr.rel (0) target = $region21
    $region20: #{decoder_forward.47} parent=1 // pred_region
      %s75 = ssub.s32 256, 256
      %76 = vsyncadd [#allocation3], %s75
      %s77 = sshll.u32 [#allocation2], 4
      %s78 = int_to_ptr.vmem [resolvable:$true] %s77
      %83 = dma.vmem_to_hbm [thread:$0]  %s78, 256, %s4, [#allocation3], 128, 128, 8
    $region21: #{decoder_forward.47} parent=1 // pred_fallthru
      _
    // Predicated region
    $region22: #{decoder_forward.47} parent=1 // pred_check
      _
    $region23: #{decoder_forward.47} parent=1 // pred_check_branch
      %85 = sbr.rel (0) target = $region25
    $region24: #{decoder_forward.47} parent=1 // pred_region
      %86 = dma.done [#allocation3], 256
    $region25: #{decoder_forward.47} parent=1 // pred_fallthru
      _
    %87 = vsyncpa [#allocation3], 1

</llo_original>
